<compile_context>
chip_gen: v6e
topology: v6e:2x2x1
jax: 0.10.0
libtpu: 0.0.40
codegen_flags: <defaults>
</compile_context>

<pallas_src>
import functools

import jax
import jax.numpy as jnp
from jax.experimental import pallas as pl
from jax.experimental.pallas import tpu as pltpu


BN_EPS = 1e-3   # matches BatchNorm2d(..., eps=0.001)
M_ALIGN = 16    # bf16 sublane packing: pad pixel-row count to a multiple of 16


def conv_bn_kernel(x_ref, w_ref, gamma_ref, beta_ref, o_ref, *, m_valid):
    # x_ref:     (M_pad, Cin)    bf16   (rows >= m_valid are zero padding)
    # w_ref:     (Cin, TC)       bf16   (TC = Cout tile)
    # gamma_ref: (1, TC)         f32
    # beta_ref:  (1, TC)         f32
    # o_ref:     (m_valid, TC)   f32
    y = jnp.dot(x_ref[...], w_ref[...], preferred_element_type=jnp.float32)  # (M_pad, TC)

    # Training-mode batch statistics over the m_valid real rows; zero-padded
    # rows contribute 0 to both sums, so stats stay exact with inv_m = 1/m_valid.
    inv_m = jnp.float32(1.0 / m_valid)
    s1 = jnp.sum(y, axis=0, keepdims=True)        # (1, TC)
    s2 = jnp.sum(y * y, axis=0, keepdims=True)    # (1, TC)
    mean = s1 * inv_m
    var = jnp.maximum(s2 * inv_m - mean * mean, 0.0)  # clamp cancellation to >= 0

    # Per-channel scale/shift -> epilogue is a single broadcast FMA.
    scale = gamma_ref[...] * jax.lax.rsqrt(var + jnp.float32(BN_EPS))  # (1, TC)
    shift = beta_ref[...] - mean * scale                               # (1, TC)

    # Only the valid rows are stored (padded rows never touch HBM).
    o_ref[...] = (y[:m_valid] * scale + shift).astype(o_ref.dtype)


def prepare_conv_bn_params(weight_oihw, gamma, beta):
    """One-time (init-time) parameter conversion: (Cout,Cin,1,1) f32 ->
    (Cin,Cout) bf16 weight, plus (1,Cout) f32 gamma/beta.  Keeping this out of
    the forward call removes the dominant wrapper-side HBM traffic."""
    cout, cin = weight_oihw.shape[0], weight_oihw.shape[1]
    w_cin_cout = jnp.transpose(
        jnp.asarray(weight_oihw).reshape(cout, cin), (1, 0)
    ).astype(jnp.bfloat16)
    gamma2d = jnp.asarray(gamma).reshape(1, cout).astype(jnp.float32)
    beta2d = jnp.asarray(beta).reshape(1, cout).astype(jnp.float32)
    return w_cin_cout, gamma2d, beta2d


def conv2d_1x1_batchnorm(x_nchw, w_cin_cout, gamma2d, beta2d, *,
                         cout_tile=1536, out_layout="NCHW"):
    """x_nchw: (N, Cin, H, W) f32; w_cin_cout: (Cin, Cout) bf16 (pre-prepared);
    gamma2d/beta2d: (1, Cout) f32."""
    n, cin, h, w = x_nchw.shape
    cin_w, cout = w_cin_cout.shape
    assert cin == cin_w
    assert cout % cout_tile == 0

    m_valid = n * h * w
    m_pad = ((m_valid + M_ALIGN - 1) // M_ALIGN) * M_ALIGN

    # NCHW -> NHWC -> (M, Cin) bf16, zero-padded to a sublane-aligned row count.
    x2d = jnp.transpose(x_nchw, (0, 2, 3, 1)).reshape(m_valid, cin).astype(jnp.bfloat16)
    if m_pad != m_valid:
        x2d = jnp.pad(x2d, ((0, m_pad - m_valid), (0, 0)))

    grid = (cout // cout_tile,)
    kernel = functools.partial(conv_bn_kernel, m_valid=m_valid)

    bytes_accessed = (m_pad * cin * 2          # x (bf16)
                      + cin * cout * 2         # weight (bf16)
                      + 2 * cout * 4           # gamma + beta (f32)
                      + m_valid * cout * 4)    # output (f32)

    out2d = pl.pallas_call(
        kernel,
        out_shape=jax.ShapeDtypeStruct((m_valid, cout), jnp.float32),
        grid_spec=pltpu.PrefetchScalarGridSpec(
            num_scalar_prefetch=0,
            grid=grid,
            in_specs=[
                pl.BlockSpec((m_pad, cin), lambda j: (0, 0)),       # x: same block each step
                pl.BlockSpec((cin, cout_tile), lambda j: (0, j)),   # weight: Cout tile j
                pl.BlockSpec((1, cout_tile), lambda j: (0, j)),     # gamma tile j
                pl.BlockSpec((1, cout_tile), lambda j: (0, j)),     # beta tile j
            ],
            out_specs=pl.BlockSpec((m_valid, cout_tile), lambda j: (0, j)),
        ),
        compiler_params=pltpu.CompilerParams(
            dimension_semantics=("parallel",),  # v7x: two TCs each take one Cout tile
        ),
        cost_estimate=pl.CostEstimate(
            flops=2 * m_valid * cin * cout,
            transcendentals=cout,               # one rsqrt per output channel
            bytes_accessed=bytes_accessed,
        ),
    )(x2d, w_cin_cout, gamma2d, beta2d)

    out_nhwc = out2d.reshape(n, h, w, cout)
    if out_layout == "NHWC":
        return out_nhwc  # free reshape; preferred when the consumer is channels-last
    # Match the PyTorch module's NCHW output layout.
    return jnp.transpose(out_nhwc, (0, 3, 1, 2))


def reference(x_nchw, weight_oihw, gamma, beta):
    """Same math (bf16 matmul operands, f32 accumulation, f32 BN) in plain JAX."""
    n, cin, h, w = x_nchw.shape
    cout = weight_oihw.shape[0]
    x2d = jnp.transpose(x_nchw, (0, 2, 3, 1)).reshape(-1, cin).astype(jnp.bfloat16)
    w2d = jnp.transpose(weight_oihw.reshape(cout, cin), (1, 0)).astype(jnp.bfloat16)
    y = jnp.dot(x2d, w2d, preferred_element_type=jnp.float32)
    mean = jnp.mean(y, axis=0, keepdims=True)
    var = jnp.mean((y - mean) ** 2, axis=0, keepdims=True)
    z = (y - mean) / jnp.sqrt(var + BN_EPS) * gamma[None, :] + beta[None, :]
    return jnp.transpose(z.reshape(n, h, w, cout), (0, 3, 1, 2))


if __name__ == "__main__":
    key = jax.random.PRNGKey(0)
    k_x, k_w = jax.random.split(key)

    # Shapes from the module: input [1, 512, 7, 7], Conv2d(512 -> 3072, 1x1, no bias)
    N, CIN, H, W = 1, 512, 7, 7
    COUT = 3072

    x = jax.random.normal(k_x, (N, CIN, H, W), dtype=jnp.float32)
    weight = jax.random.normal(k_w, (COUT, CIN, 1, 1), dtype=jnp.float32) * (1.0 / jnp.sqrt(CIN))
    gamma = jnp.ones((COUT,), dtype=jnp.float32)
    beta = jnp.zeros((COUT,), dtype=jnp.float32)

    # One-time parameter prep (init time), kept out of the per-call forward path.
    w2d, gamma2d, beta2d = prepare_conv_bn_params(weight, gamma, beta)

    fwd = jax.jit(conv2d_1x1_batchnorm)
    out = jax.block_until_ready(fwd(x, w2d, gamma2d, beta2d))

    ref = reference(x, weight, gamma, beta)
    assert out.shape == (N, COUT, H, W), out.shape
    max_err = float(jnp.max(jnp.abs(out - ref)))
    assert jnp.allclose(out, ref, atol=1e-2, rtol=1e-2), max_err

    print("KERNEL_OK")
</pallas_src>

<mosaic_0001>
module attributes {stable_mosaic.version = 11 : i64} {
  func.func @conv_bn_kernel(%arg0: i32, %arg1: memref<64x512xbf16, #tpu.memory_space<vmem>>, %arg2: memref<512x1536xbf16, #tpu.memory_space<vmem>>, %arg3: memref<1x1536xf32, #tpu.memory_space<vmem>>, %arg4: memref<1x1536xf32, #tpu.memory_space<vmem>>, %arg5: memref<49x1536xf32, #tpu.memory_space<vmem>>) attributes {dimension_semantics = [#tpu.dimension_semantics<parallel>], iteration_bounds = array<i64: 2>, scalar_prefetch = 0 : i64, scratch_operands = 0 : i64, tpu.core_type = #tpu.core_type<tc>, window_params = [{pipeline_mode = #tpu.pipeline_mode<synchronous>, transform_indices = @transform_0, window_bounds = array<i64: 64, 512>}, {transform_indices = @transform_1, window_bounds = array<i64: 512, 1536>}, {transform_indices = @transform_2, window_bounds = array<i64: 1, 1536>}, {transform_indices = @transform_3, window_bounds = array<i64: 1, 1536>}, {transform_indices = @transform_4, window_bounds = array<i64: 49, 1536>}]} {
    %c0 = arith.constant 0 : index
    %c0_0 = arith.constant 0 : index
    %0 = vector.load %arg1[%c0, %c0_0] : memref<64x512xbf16, #tpu.memory_space<vmem>>, vector<64x512xbf16>
    %c0_1 = arith.constant 0 : index
    %c0_2 = arith.constant 0 : index
    %1 = vector.load %arg2[%c0_1, %c0_2] : memref<512x1536xbf16, #tpu.memory_space<vmem>>, vector<512x1536xbf16>
    %cst = arith.constant dense<0.000000e+00> : vector<64x1536xf32>
    %2 = tpu.matmul %0, %1, %cst {dimension_numbers = #tpu.dot_dimension_numbers<[1], [0], [0], [1], [0, 0, 1, 1], [], []>} : vector<64x512xbf16>, vector<512x1536xbf16>, vector<64x1536xf32> -> vector<64x1536xf32>
    %cst_3 = arith.constant dense<0.000000e+00> : vector<1536xf32>
    %3 = vector.multi_reduction <add>, %2, %cst_3 [0] : vector<64x1536xf32> to vector<1536xf32>
    %4 = vector.shape_cast %3 : vector<1536xf32> to vector<1x1536xf32>
    %5 = arith.mulf %2, %2 : vector<64x1536xf32>
    %cst_4 = arith.constant dense<0.000000e+00> : vector<1536xf32>
    %6 = vector.multi_reduction <add>, %5, %cst_4 [0] : vector<64x1536xf32> to vector<1536xf32>
    %7 = vector.shape_cast %6 : vector<1536xf32> to vector<1x1536xf32>
    %cst_5 = arith.constant 0.0204081628 : f32
    %8 = vector.broadcast %cst_5 : f32 to vector<1x1536xf32>
    %9 = arith.mulf %4, %8 : vector<1x1536xf32>
    %cst_6 = arith.constant 0.0204081628 : f32
    %10 = vector.broadcast %cst_6 : f32 to vector<1x1536xf32>
    %11 = arith.mulf %7, %10 : vector<1x1536xf32>
    %12 = arith.mulf %9, %9 : vector<1x1536xf32>
    %13 = arith.subf %11, %12 : vector<1x1536xf32>
    %cst_7 = arith.constant 0.000000e+00 : f32
    %14 = vector.broadcast %cst_7 : f32 to vector<1x1536xf32>
    %15 = arith.maximumf %13, %14 : vector<1x1536xf32>
    %c0_8 = arith.constant 0 : index
    %c0_9 = arith.constant 0 : index
    %16 = vector.load %arg3[%c0_8, %c0_9] : memref<1x1536xf32, #tpu.memory_space<vmem>>, vector<1x1536xf32>
    %cst_10 = arith.constant 1.000000e-03 : f32
    %17 = vector.broadcast %cst_10 : f32 to vector<1x1536xf32>
    %18 = arith.addf %15, %17 : vector<1x1536xf32>
    %19 = math.rsqrt %18 : vector<1x1536xf32>
    %20 = arith.mulf %16, %19 : vector<1x1536xf32>
    %c0_11 = arith.constant 0 : index
    %c0_12 = arith.constant 0 : index
    %21 = vector.load %arg4[%c0_11, %c0_12] : memref<1x1536xf32, #tpu.memory_space<vmem>>, vector<1x1536xf32>
    %22 = arith.mulf %9, %20 : vector<1x1536xf32>
    %23 = arith.subf %21, %22 : vector<1x1536xf32>
    %24 = vector.extract_strided_slice %2 {offsets = [0, 0], sizes = [49, 1536], strides = [1, 1]} : vector<64x1536xf32> to vector<49x1536xf32>
    %25 = vector.broadcast %20 : vector<1x1536xf32> to vector<49x1536xf32>
    %26 = arith.mulf %24, %25 : vector<49x1536xf32>
    %27 = vector.broadcast %23 : vector<1x1536xf32> to vector<49x1536xf32>
    %28 = arith.addf %26, %27 : vector<49x1536xf32>
    %c0_13 = arith.constant 0 : index
    %c0_14 = arith.constant 0 : index
    %29 = vector.load %arg5[%c0_13, %c0_14] : memref<49x1536xf32, #tpu.memory_space<vmem>>, vector<49x1536xf32>
    tpu.vector_store %arg5[%c0_13, %c0_14], %28 {strides = array<i32>} : memref<49x1536xf32, #tpu.memory_space<vmem>>, vector<49x1536xf32>,
    return
  }
  func.func @transform_0(%arg0: i32) -> (i32, i32) {
    %c0_i32 = arith.constant 0 : i32
    %c0_i32_0 = arith.constant 0 : i32
    %c0_i32_1 = arith.constant 0 : i32
    return %c0_i32, %c0_i32_0 : i32, i32
  }
  func.func @transform_1(%arg0: i32) -> (i32, i32) {
    %c0_i32 = arith.constant 0 : i32
    %c0_i32_0 = arith.constant 0 : i32
    return %c0_i32, %arg0 : i32, i32
  }
  func.func @transform_2(%arg0: i32) -> (i32, i32) {
    %c0_i32 = arith.constant 0 : i32
    %c0_i32_0 = arith.constant 0 : i32
    return %c0_i32, %arg0 : i32, i32
  }
  func.func @transform_3(%arg0: i32) -> (i32, i32) {
    %c0_i32 = arith.constant 0 : i32
    %c0_i32_0 = arith.constant 0 : i32
    return %c0_i32, %arg0 : i32, i32
  }
  func.func @transform_4(%arg0: i32) -> (i32, i32) {
    %c0_i32 = arith.constant 0 : i32
    %c0_i32_0 = arith.constant 0 : i32
    return %c0_i32, %arg0 : i32, i32
  }
}

</mosaic_0001>

<llo_original>
// kernel: conv2d_1x1_batchnorm.1
$region0: #{conv2d_1x1_batchnorm.1}
  #allocation0 [shape = 'u32[]', space=smem, size = 0x4, offset = 0x4, fixed_abs, tag = 'smem constant byte address 0x4 - core index']
  #allocation1 [shape = 'u32[144,128]{1,0:T(1,128)}', space=vmem, size = 0x12000, scoped, tag = 'internal scratch']
  %s0 = inlined_call_operand.vmem [shape: bf16[64,512], index: 0, kind: input, shape index: {}]
  %s1 = inlined_call_operand.hbm [shape: bf16[512,3072], index: 1, kind: input, shape index: {}]
  %s2 = inlined_call_operand.hbm [shape: f32[1,3072], index: 2, kind: input, shape index: {}]
  %s3 = inlined_call_operand.hbm [shape: f32[1,3072], index: 3, kind: input, shape index: {}]
  %s4 = inlined_call_operand.vmem [shape: f32[49,3072], index: 4, kind: output, shape index: {}]
  %s5 = sld [smem:[#allocation0]]
  $region80: #{conv2d_1x1_batchnorm.1} parent=0
    _
  %s7 = ssub.s32 1, %s5
  %s8 = scalar_select 0, %s7, %s5
  $region1: #{conv2d_1x1_batchnorm.1} parent=0
    #allocation2 [shape = 'u8[3145728]{0}', space=vmem, size = 0x300000, scoped, tag = 'input window, operand 1']
    #allocation3 [shape = 's32[2]{0}', space=sflag, size = 0x8, scoped, tag = 'scoped memory for conv2d_1x1_batchnorm.1']
    #allocation4 [shape = 'u8[12288]{0}', space=vmem, size = 0x3000, scoped, tag = 'input window, operand 2']
    #allocation5 [shape = 's32[2]{0}', space=sflag, size = 0x8, scoped, tag = 'scoped memory for conv2d_1x1_batchnorm.1']
    #allocation6 [shape = 'u8[12288]{0}', space=vmem, size = 0x3000, scoped, tag = 'input window, operand 3']
    #allocation7 [shape = 'u8[688128]{0}', space=vmem, size = 0xa8000, scoped, tag = 'output window, operand 0']
    %9 = vsyncpa [#allocation3], 0
    %s10 = scalar_lea.sflag [#allocation3], 1
    %11 = vsyncpa %s10, 0
    %12 = vsyncpa [#allocation5], 0
    %s13 = scalar_lea.sflag [#allocation5], 1
    %14 = vsyncpa %s13, 0
    loop: start=0, step=1, limit=4
    $region2: #{conv2d_1x1_batchnorm.1} parent=1 // loop_pre_header
      _
    $region3: #{conv2d_1x1_batchnorm.1} parent=1 // loop_header
      %s16 = sphi 0, %s20
      %p17 = scmp.ge.s32.totalorder %s16, 4
      %s24 = sphi 0, %s24
      %s26 = sphi 0, %s24
      %s27 = sphi 0, %s26
      %s41 = sphi 0, %s27
      %s47 = sphi 0, %s49
      %s50 = sphi 0, %s47
      %s51 = sphi 0, %s50
      %s67 = sphi 0, %s51
      %s73 = sphi 0, %s75
      %s76 = sphi 0, %s73
      %s77 = sphi 0, %s76
      %s93 = sphi 0, %s77
      %s99 = sphi 0, %s101
      %s102 = sphi 0, %s99
      %s103 = sphi 0, %s102
      %s119 = sphi 0, %s103
      %s125 = sphi 0, %s127
      %s128 = sphi 0, %s125
      %s129 = sphi 0, %s128
      %s145 = sphi 0, %s129
    $region4: #{conv2d_1x1_batchnorm.1} parent=1 // loop_header_branch
      %19 = sbr.rel (%p17) target = $region8
    $region5: #{conv2d_1x1_batchnorm.1} parent=1 // loop_body
      %s21 = ssub.s32 %s16, 1
      %s22 = ssub.s32 %s16, 2
      %s23 = sadd.s32 %s16, 1
      %s25 = sadd.s32 %s24, 1
      %p28 = scmp.eq.s32.totalorder %s16, 1
      %p29 = scmp.ne.s32.totalorder %s24, %s26
      %p30 = scmp.eq.s32.totalorder %s16, 0
      %p31 = por %p29, %p30
      %p32 = scmp.ne.s32.totalorder %s24, %s26
      %p33 = scmp.eq.s32.totalorder %s21, 1
      %p34 = por %p32, %p33
      %p35 = scmp.ne.s32.totalorder %s26, %s27
      %p36 = scmp.eq.s32.totalorder %s21, 0
      %p37 = por %p35, %p36
      %p38 = scmp.ne.s32.totalorder %s26, %s27
      %p39 = scmp.eq.s32.totalorder %s22, 1
      %p40 = por %p38, %p39
      %p42 = scmp.ne.s32.totalorder %s27, %s41
      %p43 = scmp.eq.s32.totalorder %s22, 0
      %p44 = por %p42, %p43
      %s45 = ssub.s32 %s16, %s23
      %p46 = scmp.eq.s32.totalorder %s45, 0
      %s48 = sadd.s32 %s47, 1
      %s49 = scalar_select %p46, %s47, %s48
      %p52 = pneg %p46
      %p53 = scmp.eq.s32.totalorder %s16, 1
      %p54 = por %p52, %p53
      %p55 = scmp.ne.s32.totalorder %s47, %s50
      %p56 = scmp.eq.s32.totalorder %s16, 0
      %p57 = por %p55, %p56
      %p58 = scmp.ne.s32.totalorder %s47, %s50
      %p59 = scmp.eq.s32.totalorder %s21, 1
      %p60 = por %p58, %p59
      %p61 = scmp.ne.s32.totalorder %s50, %s51
      %p62 = scmp.eq.s32.totalorder %s21, 0
      %p63 = por %p61, %p62
      %p64 = scmp.ne.s32.totalorder %s50, %s51
      %p65 = scmp.eq.s32.totalorder %s22, 1
      %p66 = por %p64, %p65
      %p68 = scmp.ne.s32.totalorder %s51, %s67
      %p69 = scmp.eq.s32.totalorder %s22, 0
      %p70 = por %p68, %p69
      %s71 = ssub.s32 %s16, %s23
      %p72 = scmp.eq.s32.totalorder %s71, 0
      %s74 = sadd.s32 %s73, 1
      %s75 = scalar_select %p72, %s73, %s74
      %p78 = pneg %p72
      %p79 = scmp.eq.s32.totalorder %s16, 1
      %p80 = por %p78, %p79
      %p81 = scmp.ne.s32.totalorder %s73, %s76
      %p82 = scmp.eq.s32.totalorder %s16, 0
      %p83 = por %p81, %p82
      %p84 = scmp.ne.s32.totalorder %s73, %s76
      %p85 = scmp.eq.s32.totalorder %s21, 1
      %p86 = por %p84, %p85
      %p87 = scmp.ne.s32.totalorder %s76, %s77
      %p88 = scmp.eq.s32.totalorder %s21, 0
      %p89 = por %p87, %p88
      %p90 = scmp.ne.s32.totalorder %s76, %s77
      %p91 = scmp.eq.s32.totalorder %s22, 1
      %p92 = por %p90, %p91
      %p94 = scmp.ne.s32.totalorder %s77, %s93
      %p95 = scmp.eq.s32.totalorder %s22, 0
      %p96 = por %p94, %p95
      %s97 = ssub.s32 %s16, %s23
      %p98 = scmp.eq.s32.totalorder %s97, 0
      %s100 = sadd.s32 %s99, 1
      %s101 = scalar_select %p98, %s99, %s100
      %p104 = pneg %p98
      %p105 = scmp.eq.s32.totalorder %s16, 1
      %p106 = por %p104, %p105
      %p107 = scmp.ne.s32.totalorder %s99, %s102
      %p108 = scmp.eq.s32.totalorder %s16, 0
      %p109 = por %p107, %p108
      %p110 = scmp.ne.s32.totalorder %s99, %s102
      %p111 = scmp.eq.s32.totalorder %s21, 1
      %p112 = por %p110, %p111
      %p113 = scmp.ne.s32.totalorder %s102, %s103
      %p114 = scmp.eq.s32.totalorder %s21, 0
      %p115 = por %p113, %p114
      %p116 = scmp.ne.s32.totalorder %s102, %s103
      %p117 = scmp.eq.s32.totalorder %s22, 1
      %p118 = por %p116, %p117
      %p120 = scmp.ne.s32.totalorder %s103, %s119
      %p121 = scmp.eq.s32.totalorder %s22, 0
      %p122 = por %p120, %p121
      %s123 = ssub.s32 %s16, %s23
      %p124 = scmp.eq.s32.totalorder %s123, 0
      %s126 = sadd.s32 %s125, 1
      %s127 = scalar_select %p124, %s125, %s126
      %p130 = pneg %p124
      %p131 = scmp.eq.s32.totalorder %s16, 1
      %p132 = por %p130, %p131
      %p133 = scmp.ne.s32.totalorder %s125, %s128
      %p134 = scmp.eq.s32.totalorder %s16, 0
      %p135 = por %p133, %p134
      %p136 = scmp.ne.s32.totalorder %s125, %s128
      %p137 = scmp.eq.s32.totalorder %s21, 1
      %p138 = por %p136, %p137
      %p139 = scmp.ne.s32.totalorder %s128, %s129
      %p140 = scmp.eq.s32.totalorder %s21, 0
      %p141 = por %p139, %p140
      %p142 = scmp.ne.s32.totalorder %s128, %s129
      %p143 = scmp.eq.s32.totalorder %s22, 1
      %p144 = por %p142, %p143
      %p146 = scmp.ne.s32.totalorder %s129, %s145
      %p147 = scmp.eq.s32.totalorder %s22, 0
      %p148 = por %p146, %p147
      %p149 = scmp.le.s32.totalorder 1, %s16
      %p150 = scmp.lt.s32.totalorder %s16, 3
      %p151 = pnand %p149, %p150
      %p152 = pneg %p151
      // Predicated region
      $region9: #{conv2d_1x1_batchnorm.1} parent=5 // pred_check
        _
      $region10: #{conv2d_1x1_batchnorm.1} parent=5 // pred_check_branch
        %154 = sbr.rel (%p151) target = $region12
      $region11: #{conv2d_1x1_batchnorm.1} parent=5 // pred_region
        %s155 = ssub.s32 %s16, 1
        // Predicated region
        $region13: #{conv2d_1x1_batchnorm.1} parent=11 // pred_check
          %p156 = pneg %p37
        $region14: #{conv2d_1x1_batchnorm.1} parent=11 // pred_check_branch
          %158 = sbr.rel (%p156) target = $region16
        $region15: #{conv2d_1x1_batchnorm.1} parent=11 // pred_region
          _
        $region16: #{conv2d_1x1_batchnorm.1} parent=11 // pred_fallthru
          _
      $region12: #{conv2d_1x1_batchnorm.1} parent=5 // pred_fallthru
        _
      %p159 = scmp.lt.s32.totalorder %s16, 2
      // Predicated region
      $region17: #{conv2d_1x1_batchnorm.1} parent=5 // pred_check
        %p160 = pneg %p159
      $region18: #{conv2d_1x1_batchnorm.1} parent=5 // pred_check_branch
        %162 = sbr.rel (%p160) target = $region20
      $region19: #{conv2d_1x1_batchnorm.1} parent=5 // pred_region
        // Predicated region
        $region21: #{conv2d_1x1_batchnorm.1} parent=19 // pred_check
          %p163 = pneg %p57
        $region22: #{conv2d_1x1_batchnorm.1} parent=19 // pred_check_branch
          %165 = sbr.rel (%p163) target = $region24
        $region23: #{conv2d_1x1_batchnorm.1} parent=19 // pred_region
          %s166 = sand.u32 %s47, 1
          %s167 = scalar_lea.sflag [#allocation3], %s166
          %s168 = sand.u32 %s47, 1
          %s169 = smul.addr %s168, 3072
          %s170 = scalar_lea.vmem [#allocation2], %s169
          %s171 = smul.u32 12, %s16
          %s173 = ssub.s32 49152, 49152
          %174 = vsyncadd %s167, %s173
          %s175 = smul.addr %s171, 64
          %s176 = scalar_lea.hbm %s1, %s175
          %s177 = sshll.u32 %s170, 4
          %s178 = int_to_ptr.vmem [resolvable:$true] %s177
          %183 = dma.hbm_to_vmem [thread:$0]  %s176, 49152, %s178, %s167, 1536, 768, 48
        $region24: #{conv2d_1x1_batchnorm.1} parent=19 // pred_fallthru
          _
        // Predicated region
        $region25: #{conv2d_1x1_batchnorm.1} parent=19 // pred_check
          %p184 = pneg %p83
        $region26: #{conv2d_1x1_batchnorm.1} parent=19 // pred_check_branch
          %186 = sbr.rel (%p184) target = $region28
        $region27: #{conv2d_1x1_batchnorm.1} parent=19 // pred_region
          %s187 = sand.u32 %s16, 1
          %s188 = scalar_lea.sflag [#allocation5], %s187
          %s189 = sand.u32 %s73, 1
          %s190 = smul.addr %s189, 12
          %s191 = scalar_lea.vmem [#allocation4], %s190
          %s192 = smul.u32 12, %s16
          %s194 = ssub.s32 192, 192
          %195 = vsyncadd %s188, %s194
          %s196 = smul.addr %s192, 16
          %s197 = scalar_lea.hbm %s2, %s196
          %s199 = sshll.u32 %s191, 4
          %s200 = int_to_ptr.vmem [resolvable:$true] %s199
          %202 = dma.hbm_to_vmem [thread:$0]  %s197, 192, %s200, %s188
        $region28: #{conv2d_1x1_batchnorm.1} parent=19 // pred_fallthru
          _
        // Predicated region
        $region29: #{conv2d_1x1_batchnorm.1} parent=19 // pred_check
          %p203 = pneg %p109
        $region30: #{conv2d_1x1_batchnorm.1} parent=19 // pred_check_branch
          %205 = sbr.rel (%p203) target = $region32
        $region31: #{conv2d_1x1_batchnorm.1} parent=19 // pred_region
          %s206 = sand.u32 %s16, 1
          %s207 = scalar_lea.sflag [#allocation5], %s206
          %s208 = sand.u32 %s99, 1
          %s209 = smul.addr %s208, 12
          %s210 = scalar_lea.vmem [#allocation6], %s209
          %s211 = smul.u32 12, %s16
          %s213 = ssub.s32 192, 192
          %214 = vsyncadd %s207, %s213
          %s215 = smul.addr %s211, 16
          %s216 = scalar_lea.hbm %s3, %s215
          %s218 = sshll.u32 %s210, 4
          %s219 = int_to_ptr.vmem [resolvable:$true] %s218
          %221 = dma.hbm_to_vmem [thread:$0]  %s216, 192, %s219, %s207
        $region32: #{conv2d_1x1_batchnorm.1} parent=19 // pred_fallthru
          _
      $region20: #{conv2d_1x1_batchnorm.1} parent=5 // pred_fallthru
        _
      %p222 = scmp.le.s32.totalorder 1, %s16
      %p223 = scmp.lt.s32.totalorder %s16, 3
      %p224 = pnand %p222, %p223
      %p225 = pneg %p224
      // Predicated region
      $region33: #{conv2d_1x1_batchnorm.1} parent=5 // pred_check
        _
      $region34: #{conv2d_1x1_batchnorm.1} parent=5 // pred_check_branch
        %227 = sbr.rel (%p224) target = $region36
      $region35: #{conv2d_1x1_batchnorm.1} parent=5 // pred_region
        %s228 = ssub.s32 %s16, 1
        %s229 = sand.u32 %s50, 1
        %s230 = scalar_lea.sflag [#allocation3], %s229
        %s231 = sand.u32 %s50, 1
        %s232 = smul.addr %s231, 3072
        %s233 = scalar_lea.vmem [#allocation2], %s232
        // Predicated region
        $region37: #{conv2d_1x1_batchnorm.1} parent=35 // pred_check
          %p234 = pneg %p63
        $region38: #{conv2d_1x1_batchnorm.1} parent=35 // pred_check_branch
          %236 = sbr.rel (%p234) target = $region40
        $region39: #{conv2d_1x1_batchnorm.1} parent=35 // pred_region
          %237 = dma.done %s230, 49152
        $region40: #{conv2d_1x1_batchnorm.1} parent=35 // pred_fallthru
          _
        %s238 = sand.u32 %s21, 1
        %s239 = scalar_lea.sflag [#allocation5], %s238
        %s240 = sand.u32 %s76, 1
        %s241 = smul.addr %s240, 12
        %s242 = scalar_lea.vmem [#allocation4], %s241
        // Predicated region
        $region41: #{conv2d_1x1_batchnorm.1} parent=35 // pred_check
          %p243 = pneg %p89
        $region42: #{conv2d_1x1_batchnorm.1} parent=35 // pred_check_branch
          %245 = sbr.rel (%p243) target = $region44
        $region43: #{conv2d_1x1_batchnorm.1} parent=35 // pred_region
          %246 = dma.done %s239, 192
        $region44: #{conv2d_1x1_batchnorm.1} parent=35 // pred_fallthru
          _
        %s247 = sand.u32 %s21, 1
        %s248 = scalar_lea.sflag [#allocation5], %s247
        %s249 = sand.u32 %s102, 1
        %s250 = smul.addr %s249, 12
        %s251 = scalar_lea.vmem [#allocation6], %s250
        // Predicated region
        $region45: #{conv2d_1x1_batchnorm.1} parent=35 // pred_check
          %p252 = pneg %p115
        $region46: #{conv2d_1x1_batchnorm.1} parent=35 // pred_check_branch
          %254 = sbr.rel (%p252) target = $region48
        $region47: #{conv2d_1x1_batchnorm.1} parent=35 // pred_region
          %255 = dma.done %s248, 192
        $region48: #{conv2d_1x1_batchnorm.1} parent=35 // pred_fallthru
          _
        %p256 = pneg %p37
        %p257 = pneg %p34
        %s258 = sand.u32 %s50, 1
        %s259 = scalar_lea.sflag [#allocation3], %s258
        %s260 = sand.u32 %s50, 1
        %s261 = smul.addr %s260, 3072
        %s262 = scalar_lea.vmem [#allocation2], %s261
        %p263 = pneg %p63
        %p264 = pneg %p60
        %s265 = sand.u32 %s21, 1
        %s266 = scalar_lea.sflag [#allocation5], %s265
        %s267 = sand.u32 %s76, 1
        %s268 = smul.addr %s267, 12
        %s269 = scalar_lea.vmem [#allocation4], %s268
        %p270 = pneg %p89
        %p271 = pneg %p86
        %s272 = sand.u32 %s21, 1
        %s273 = scalar_lea.sflag [#allocation5], %s272
        %s274 = sand.u32 %s102, 1
        %s275 = smul.addr %s274, 12
        %s276 = scalar_lea.vmem [#allocation6], %s275
        %p277 = pneg %p115
        %p278 = pneg %p112
        %p279 = pneg %p141
        %p280 = pneg %p138
        %s281 = sand.u32 %s128, 1
        %s282 = sand.u32 %s128, 1
        %s283 = smul.addr %s282, 672
        %s284 = scalar_lea.vmem [#allocation7], %s283
        %s285 = smul.u32 12, %s21
        %s286 = smul.u32 12, %s21
        %s287 = smul.u32 12, %s21
        %s288 = smul.u32 12, %s21
        %v289 = vld [vmem:[%s0] sm:$0xff]
        %v290 = vld [vmem:[%s0 + $0x8] sm:$0xff]
        %v291 = vld [vmem:[%s0 + $0x10] sm:$0xff]
        %v292 = vld [vmem:[%s0 + $0x18] sm:$0xff]
        %v293 = vld [vmem:[%s0 + $0x20] sm:$0xff]
        %v294 = vld [vmem:[%s0 + $0x28] sm:$0xff]
        %v295 = vld [vmem:[%s0 + $0x30] sm:$0xff]
        %v296 = vld [vmem:[%s0 + $0x38] sm:$0xff]
        %v297 = vld [vmem:[%s0 + $0x40] sm:$0xff]
        %v298 = vld [vmem:[%s0 + $0x48] sm:$0xff]
        %v299 = vld [vmem:[%s0 + $0x50] sm:$0xff]
        %v300 = vld [vmem:[%s0 + $0x58] sm:$0xff]
        %v301 = vld [vmem:[%s0 + $0x60] sm:$0xff]
        %v302 = vld [vmem:[%s0 + $0x68] sm:$0xff]
        %v303 = vld [vmem:[%s0 + $0x70] sm:$0xff]
        %v304 = vld [vmem:[%s0 + $0x78] sm:$0xff]
        %v305 = vld [vmem:[%s233] sm:$0xff]
        %v306 = vld [vmem:[%s233 + $0x8] sm:$0xff]
        %v307 = vld [vmem:[%s233 + $0x10] sm:$0xff]
        %v308 = vld [vmem:[%s233 + $0x18] sm:$0xff]
        %v309 = vld [vmem:[%s233 + $0x20] sm:$0xff]
        %v310 = vld [vmem:[%s233 + $0x28] sm:$0xff]
        %v311 = vld [vmem:[%s233 + $0x30] sm:$0xff]
        %v312 = vld [vmem:[%s233 + $0x38] sm:$0xff]
        %v313 = vld [vmem:[%s233 + $0x40] sm:$0xff]
        %v314 = vld [vmem:[%s233 + $0x48] sm:$0xff]
        %v315 = vld [vmem:[%s233 + $0x50] sm:$0xff]
        %v316 = vld [vmem:[%s233 + $0x58] sm:$0xff]
        %v317 = vld [vmem:[%s233 + $0x60] sm:$0xff]
        %v318 = vld [vmem:[%s233 + $0x68] sm:$0xff]
        %v319 = vld [vmem:[%s233 + $0x70] sm:$0xff]
        %v320 = vld [vmem:[%s233 + $0x78] sm:$0xff]
        %v321 = vld [vmem:[%s233 + $0x80] sm:$0xff]
        %v322 = vld [vmem:[%s233 + $0x88] sm:$0xff]
        %v323 = vld [vmem:[%s233 + $0x90] sm:$0xff]
        %v324 = vld [vmem:[%s233 + $0x98] sm:$0xff]
        %v325 = vld [vmem:[%s233 + $0xa0] sm:$0xff]
        %v326 = vld [vmem:[%s233 + $0xa8] sm:$0xff]
        %v327 = vld [vmem:[%s233 + $0xb0] sm:$0xff]
        %v328 = vld [vmem:[%s233 + $0xb8] sm:$0xff]
        %v329 = vld [vmem:[%s233 + $0xc0] sm:$0xff]
        %v330 = vld [vmem:[%s233 + $0xc8] sm:$0xff]
        %v331 = vld [vmem:[%s233 + $0xd0] sm:$0xff]
        %v332 = vld [vmem:[%s233 + $0xd8] sm:$0xff]
        %v333 = vld [vmem:[%s233 + $0xe0] sm:$0xff]
        %v334 = vld [vmem:[%s233 + $0xe8] sm:$0xff]
        %v335 = vld [vmem:[%s233 + $0xf0] sm:$0xff]
        %v336 = vld [vmem:[%s233 + $0xf8] sm:$0xff]
        %v337 = vld [vmem:[%s233 + $0x100] sm:$0xff]
        %v338 = vld [vmem:[%s233 + $0x108] sm:$0xff]
        %v339 = vld [vmem:[%s233 + $0x110] sm:$0xff]
        %v340 = vld [vmem:[%s233 + $0x118] sm:$0xff]
        %v341 = vld [vmem:[%s233 + $0x120] sm:$0xff]
        %v342 = vld [vmem:[%s233 + $0x128] sm:$0xff]
        %v343 = vld [vmem:[%s233 + $0x130] sm:$0xff]
        %v344 = vld [vmem:[%s233 + $0x138] sm:$0xff]
        %v345 = vld [vmem:[%s233 + $0x140] sm:$0xff]
        %v346 = vld [vmem:[%s233 + $0x148] sm:$0xff]
        %v347 = vld [vmem:[%s233 + $0x150] sm:$0xff]
        %v348 = vld [vmem:[%s233 + $0x158] sm:$0xff]
        %v349 = vld [vmem:[%s233 + $0x160] sm:$0xff]
        %v350 = vld [vmem:[%s233 + $0x168] sm:$0xff]
        %v351 = vld [vmem:[%s233 + $0x170] sm:$0xff]
        %v352 = vld [vmem:[%s233 + $0x178] sm:$0xff]
        %v353 = vld [vmem:[%s233 + $0x180] sm:$0xff]
        %v354 = vld [vmem:[%s233 + $0x188] sm:$0xff]
        %v355 = vld [vmem:[%s233 + $0x190] sm:$0xff]
        %v356 = vld [vmem:[%s233 + $0x198] sm:$0xff]
        %v357 = vld [vmem:[%s233 + $0x1a0] sm:$0xff]
        %v358 = vld [vmem:[%s233 + $0x1a8] sm:$0xff]
        %v359 = vld [vmem:[%s233 + $0x1b0] sm:$0xff]
        %v360 = vld [vmem:[%s233 + $0x1b8] sm:$0xff]
        %v361 = vld [vmem:[%s233 + $0x1c0] sm:$0xff]
        %v362 = vld [vmem:[%s233 + $0x1c8] sm:$0xff]
        %v363 = vld [vmem:[%s233 + $0x1d0] sm:$0xff]
        %v364 = vld [vmem:[%s233 + $0x1d8] sm:$0xff]
        %v365 = vld [vmem:[%s233 + $0x1e0] sm:$0xff]
        %v366 = vld [vmem:[%s233 + $0x1e8] sm:$0xff]
        %v367 = vld [vmem:[%s233 + $0x1f0] sm:$0xff]
        %v368 = vld [vmem:[%s233 + $0x1f8] sm:$0xff]
        %v369 = vld [vmem:[%s233 + $0x200] sm:$0xff]
        %v370 = vld [vmem:[%s233 + $0x208] sm:$0xff]
        %v371 = vld [vmem:[%s233 + $0x210] sm:$0xff]
        %v372 = vld [vmem:[%s233 + $0x218] sm:$0xff]
        %v373 = vld [vmem:[%s233 + $0x220] sm:$0xff]
        %v374 = vld [vmem:[%s233 + $0x228] sm:$0xff]
        %v375 = vld [vmem:[%s233 + $0x230] sm:$0xff]
        %v376 = vld [vmem:[%s233 + $0x238] sm:$0xff]
        %v377 = vld [vmem:[%s233 + $0x240] sm:$0xff]
        %v378 = vld [vmem:[%s233 + $0x248] sm:$0xff]
        %v379 = vld [vmem:[%s233 + $0x250] sm:$0xff]
        %v380 = vld [vmem:[%s233 + $0x258] sm:$0xff]
        %v381 = vld [vmem:[%s233 + $0x260] sm:$0xff]
        %v382 = vld [vmem:[%s233 + $0x268] sm:$0xff]
        %v383 = vld [vmem:[%s233 + $0x270] sm:$0xff]
        %v384 = vld [vmem:[%s233 + $0x278] sm:$0xff]
        %v385 = vld [vmem:[%s233 + $0x280] sm:$0xff]
        %v386 = vld [vmem:[%s233 + $0x288] sm:$0xff]
        %v387 = vld [vmem:[%s233 + $0x290] sm:$0xff]
        %v388 = vld [vmem:[%s233 + $0x298] sm:$0xff]
        %v389 = vld [vmem:[%s233 + $0x2a0] sm:$0xff]
        %v390 = vld [vmem:[%s233 + $0x2a8] sm:$0xff]
        %v391 = vld [vmem:[%s233 + $0x2b0] sm:$0xff]
        %v392 = vld [vmem:[%s233 + $0x2b8] sm:$0xff]
        %v393 = vld [vmem:[%s233 + $0x2c0] sm:$0xff]
        %v394 = vld [vmem:[%s233 + $0x2c8] sm:$0xff]
        %v395 = vld [vmem:[%s233 + $0x2d0] sm:$0xff]
        %v396 = vld [vmem:[%s233 + $0x2d8] sm:$0xff]
        %v397 = vld [vmem:[%s233 + $0x2e0] sm:$0xff]
        %v398 = vld [vmem:[%s233 + $0x2e8] sm:$0xff]
        %v399 = vld [vmem:[%s233 + $0x2f0] sm:$0xff]
        %v400 = vld [vmem:[%s233 + $0x2f8] sm:$0xff]
        %v401 = vld [vmem:[%s233 + $0x300] sm:$0xff]
        %v402 = vld [vmem:[%s233 + $0x308] sm:$0xff]
        %v403 = vld [vmem:[%s233 + $0x310] sm:$0xff]
        %v404 = vld [vmem:[%s233 + $0x318] sm:$0xff]
        %v405 = vld [vmem:[%s233 + $0x320] sm:$0xff]
        %v406 = vld [vmem:[%s233 + $0x328] sm:$0xff]
        %v407 = vld [vmem:[%s233 + $0x330] sm:$0xff]
        %v408 = vld [vmem:[%s233 + $0x338] sm:$0xff]
        %v409 = vld [vmem:[%s233 + $0x340] sm:$0xff]
        %v410 = vld [vmem:[%s233 + $0x348] sm:$0xff]
        %v411 = vld [vmem:[%s233 + $0x350] sm:$0xff]
        %v412 = vld [vmem:[%s233 + $0x358] sm:$0xff]
        %v413 = vld [vmem:[%s233 + $0x360] sm:$0xff]
        %v414 = vld [vmem:[%s233 + $0x368] sm:$0xff]
        %v415 = vld [vmem:[%s233 + $0x370] sm:$0xff]
        %v416 = vld [vmem:[%s233 + $0x378] sm:$0xff]
        %v417 = vld [vmem:[%s233 + $0x380] sm:$0xff]
        %v418 = vld [vmem:[%s233 + $0x388] sm:$0xff]
        %v419 = vld [vmem:[%s233 + $0x390] sm:$0xff]
        %v420 = vld [vmem:[%s233 + $0x398] sm:$0xff]
        %v421 = vld [vmem:[%s233 + $0x3a0] sm:$0xff]
        %v422 = vld [vmem:[%s233 + $0x3a8] sm:$0xff]
        %v423 = vld [vmem:[%s233 + $0x3b0] sm:$0xff]
        %v424 = vld [vmem:[%s233 + $0x3b8] sm:$0xff]
        %v425 = vld [vmem:[%s233 + $0x3c0] sm:$0xff]
        %v426 = vld [vmem:[%s233 + $0x3c8] sm:$0xff]
        %v427 = vld [vmem:[%s233 + $0x3d0] sm:$0xff]
        %v428 = vld [vmem:[%s233 + $0x3d8] sm:$0xff]
        %v429 = vld [vmem:[%s233 + $0x3e0] sm:$0xff]
        %v430 = vld [vmem:[%s233 + $0x3e8] sm:$0xff]
        %v431 = vld [vmem:[%s233 + $0x3f0] sm:$0xff]
        %v432 = vld [vmem:[%s233 + $0x3f8] sm:$0xff]
        %v433 = vld [vmem:[%s233 + $0x400] sm:$0xff]
        %v434 = vld [vmem:[%s233 + $0x408] sm:$0xff]
        %v435 = vld [vmem:[%s233 + $0x410] sm:$0xff]
        %v436 = vld [vmem:[%s233 + $0x418] sm:$0xff]
        %v437 = vld [vmem:[%s233 + $0x420] sm:$0xff]
        %v438 = vld [vmem:[%s233 + $0x428] sm:$0xff]
        %v439 = vld [vmem:[%s233 + $0x430] sm:$0xff]
        %v440 = vld [vmem:[%s233 + $0x438] sm:$0xff]
        %v441 = vld [vmem:[%s233 + $0x440] sm:$0xff]
        %v442 = vld [vmem:[%s233 + $0x448] sm:$0xff]
        %v443 = vld [vmem:[%s233 + $0x450] sm:$0xff]
        %v444 = vld [vmem:[%s233 + $0x458] sm:$0xff]
        %v445 = vld [vmem:[%s233 + $0x460] sm:$0xff]
        %v446 = vld [vmem:[%s233 + $0x468] sm:$0xff]
        %v447 = vld [vmem:[%s233 + $0x470] sm:$0xff]
        %v448 = vld [vmem:[%s233 + $0x478] sm:$0xff]
        %v449 = vld [vmem:[%s233 + $0x480] sm:$0xff]
        %v450 = vld [vmem:[%s233 + $0x488] sm:$0xff]
        %v451 = vld [vmem:[%s233 + $0x490] sm:$0xff]
        %v452 = vld [vmem:[%s233 + $0x498] sm:$0xff]
        %v453 = vld [vmem:[%s233 + $0x4a0] sm:$0xff]
        %v454 = vld [vmem:[%s233 + $0x4a8] sm:$0xff]
        %v455 = vld [vmem:[%s233 + $0x4b0] sm:$0xff]
        %v456 = vld [vmem:[%s233 + $0x4b8] sm:$0xff]
        %v457 = vld [vmem:[%s233 + $0x4c0] sm:$0xff]
        %v458 = vld [vmem:[%s233 + $0x4c8] sm:$0xff]
        %v459 = vld [vmem:[%s233 + $0x4d0] sm:$0xff]
        %v460 = vld [vmem:[%s233 + $0x4d8] sm:$0xff]
        %v461 = vld [vmem:[%s233 + $0x4e0] sm:$0xff]
        %v462 = vld [vmem:[%s233 + $0x4e8] sm:$0xff]
        %v463 = vld [vmem:[%s233 + $0x4f0] sm:$0xff]
        %v464 = vld [vmem:[%s233 + $0x4f8] sm:$0xff]
        %v465 = vld [vmem:[%s233 + $0x500] sm:$0xff]
        %v466 = vld [vmem:[%s233 + $0x508] sm:$0xff]
        %v467 = vld [vmem:[%s233 + $0x510] sm:$0xff]
        %v468 = vld [vmem:[%s233 + $0x518] sm:$0xff]
        %v469 = vld [vmem:[%s233 + $0x520] sm:$0xff]
        %v470 = vld [vmem:[%s233 + $0x528] sm:$0xff]
        %v471 = vld [vmem:[%s233 + $0x530] sm:$0xff]
        %v472 = vld [vmem:[%s233 + $0x538] sm:$0xff]
        %v473 = vld [vmem:[%s233 + $0x540] sm:$0xff]
        %v474 = vld [vmem:[%s233 + $0x548] sm:$0xff]
        %v475 = vld [vmem:[%s233 + $0x550] sm:$0xff]
        %v476 = vld [vmem:[%s233 + $0x558] sm:$0xff]
        %v477 = vld [vmem:[%s233 + $0x560] sm:$0xff]
        %v478 = vld [vmem:[%s233 + $0x568] sm:$0xff]
        %v479 = vld [vmem:[%s233 + $0x570] sm:$0xff]
        %v480 = vld [vmem:[%s233 + $0x578] sm:$0xff]
        %v481 = vld [vmem:[%s233 + $0x580] sm:$0xff]
        %v482 = vld [vmem:[%s233 + $0x588] sm:$0xff]
        %v483 = vld [vmem:[%s233 + $0x590] sm:$0xff]
        %v484 = vld [vmem:[%s233 + $0x598] sm:$0xff]
        %v485 = vld [vmem:[%s233 + $0x5a0] sm:$0xff]
        %v486 = vld [vmem:[%s233 + $0x5a8] sm:$0xff]
        %v487 = vld [vmem:[%s233 + $0x5b0] sm:$0xff]
        %v488 = vld [vmem:[%s233 + $0x5b8] sm:$0xff]
        %v489 = vld [vmem:[%s233 + $0x5c0] sm:$0xff]
        %v490 = vld [vmem:[%s233 + $0x5c8] sm:$0xff]
        %v491 = vld [vmem:[%s233 + $0x5d0] sm:$0xff]
        %v492 = vld [vmem:[%s233 + $0x5d8] sm:$0xff]
        %v493 = vld [vmem:[%s233 + $0x5e0] sm:$0xff]
        %v494 = vld [vmem:[%s233 + $0x5e8] sm:$0xff]
        %v495 = vld [vmem:[%s233 + $0x5f0] sm:$0xff]
        %v496 = vld [vmem:[%s233 + $0x5f8] sm:$0xff]
        %v497 = vld [vmem:[%s233 + $0x600] sm:$0xff]
        %v498 = vld [vmem:[%s233 + $0x608] sm:$0xff]
        %v499 = vld [vmem:[%s233 + $0x610] sm:$0xff]
        %v500 = vld [vmem:[%s233 + $0x618] sm:$0xff]
        %v501 = vld [vmem:[%s233 + $0x620] sm:$0xff]
        %v502 = vld [vmem:[%s233 + $0x628] sm:$0xff]
        %v503 = vld [vmem:[%s233 + $0x630] sm:$0xff]
        %v504 = vld [vmem:[%s233 + $0x638] sm:$0xff]
        %v505 = vld [vmem:[%s233 + $0x640] sm:$0xff]
        %v506 = vld [vmem:[%s233 + $0x648] sm:$0xff]
        %v507 = vld [vmem:[%s233 + $0x650] sm:$0xff]
        %v508 = vld [vmem:[%s233 + $0x658] sm:$0xff]
        %v509 = vld [vmem:[%s233 + $0x660] sm:$0xff]
        %v510 = vld [vmem:[%s233 + $0x668] sm:$0xff]
        %v511 = vld [vmem:[%s233 + $0x670] sm:$0xff]
        %v512 = vld [vmem:[%s233 + $0x678] sm:$0xff]
        %v513 = vld [vmem:[%s233 + $0x680] sm:$0xff]
        %v514 = vld [vmem:[%s233 + $0x688] sm:$0xff]
        %v515 = vld [vmem:[%s233 + $0x690] sm:$0xff]
        %v516 = vld [vmem:[%s233 + $0x698] sm:$0xff]
        %v517 = vld [vmem:[%s233 + $0x6a0] sm:$0xff]
        %v518 = vld [vmem:[%s233 + $0x6a8] sm:$0xff]
        %v519 = vld [vmem:[%s233 + $0x6b0] sm:$0xff]
        %v520 = vld [vmem:[%s233 + $0x6b8] sm:$0xff]
        %v521 = vld [vmem:[%s233 + $0x6c0] sm:$0xff]
        %v522 = vld [vmem:[%s233 + $0x6c8] sm:$0xff]
        %v523 = vld [vmem:[%s233 + $0x6d0] sm:$0xff]
        %v524 = vld [vmem:[%s233 + $0x6d8] sm:$0xff]
        %v525 = vld [vmem:[%s233 + $0x6e0] sm:$0xff]
        %v526 = vld [vmem:[%s233 + $0x6e8] sm:$0xff]
        %v527 = vld [vmem:[%s233 + $0x6f0] sm:$0xff]
        %v528 = vld [vmem:[%s233 + $0x6f8] sm:$0xff]
        %v529 = vld [vmem:[%s233 + $0x700] sm:$0xff]
        %v530 = vld [vmem:[%s233 + $0x708] sm:$0xff]
        %v531 = vld [vmem:[%s233 + $0x710] sm:$0xff]
        %v532 = vld [vmem:[%s233 + $0x718] sm:$0xff]
        %v533 = vld [vmem:[%s233 + $0x720] sm:$0xff]
        %v534 = vld [vmem:[%s233 + $0x728] sm:$0xff]
        %v535 = vld [vmem:[%s233 + $0x730] sm:$0xff]
        %v536 = vld [vmem:[%s233 + $0x738] sm:$0xff]
        %v537 = vld [vmem:[%s233 + $0x740] sm:$0xff]
        %v538 = vld [vmem:[%s233 + $0x748] sm:$0xff]
        %v539 = vld [vmem:[%s233 + $0x750] sm:$0xff]
        %v540 = vld [vmem:[%s233 + $0x758] sm:$0xff]
        %v541 = vld [vmem:[%s233 + $0x760] sm:$0xff]
        %v542 = vld [vmem:[%s233 + $0x768] sm:$0xff]
        %v543 = vld [vmem:[%s233 + $0x770] sm:$0xff]
        %v544 = vld [vmem:[%s233 + $0x778] sm:$0xff]
        %v545 = vld [vmem:[%s233 + $0x780] sm:$0xff]
        %v546 = vld [vmem:[%s233 + $0x788] sm:$0xff]
        %v547 = vld [vmem:[%s233 + $0x790] sm:$0xff]
        %v548 = vld [vmem:[%s233 + $0x798] sm:$0xff]
        %v549 = vld [vmem:[%s233 + $0x7a0] sm:$0xff]
        %v550 = vld [vmem:[%s233 + $0x7a8] sm:$0xff]
        %v551 = vld [vmem:[%s233 + $0x7b0] sm:$0xff]
        %v552 = vld [vmem:[%s233 + $0x7b8] sm:$0xff]
        %v553 = vld [vmem:[%s233 + $0x7c0] sm:$0xff]
        %v554 = vld [vmem:[%s233 + $0x7c8] sm:$0xff]
        %v555 = vld [vmem:[%s233 + $0x7d0] sm:$0xff]
        %v556 = vld [vmem:[%s233 + $0x7d8] sm:$0xff]
        %v557 = vld [vmem:[%s233 + $0x7e0] sm:$0xff]
        %v558 = vld [vmem:[%s233 + $0x7e8] sm:$0xff]
        %v559 = vld [vmem:[%s233 + $0x7f0] sm:$0xff]
        %v560 = vld [vmem:[%s233 + $0x7f8] sm:$0xff]
        %v561 = vld [vmem:[%s233 + $0x800] sm:$0xff]
        %v562 = vld [vmem:[%s233 + $0x808] sm:$0xff]
        %v563 = vld [vmem:[%s233 + $0x810] sm:$0xff]
        %v564 = vld [vmem:[%s233 + $0x818] sm:$0xff]
        %v565 = vld [vmem:[%s233 + $0x820] sm:$0xff]
        %v566 = vld [vmem:[%s233 + $0x828] sm:$0xff]
        %v567 = vld [vmem:[%s233 + $0x830] sm:$0xff]
        %v568 = vld [vmem:[%s233 + $0x838] sm:$0xff]
        %v569 = vld [vmem:[%s233 + $0x840] sm:$0xff]
        %v570 = vld [vmem:[%s233 + $0x848] sm:$0xff]
        %v571 = vld [vmem:[%s233 + $0x850] sm:$0xff]
        %v572 = vld [vmem:[%s233 + $0x858] sm:$0xff]
        %v573 = vld [vmem:[%s233 + $0x860] sm:$0xff]
        %v574 = vld [vmem:[%s233 + $0x868] sm:$0xff]
        %v575 = vld [vmem:[%s233 + $0x870] sm:$0xff]
        %v576 = vld [vmem:[%s233 + $0x878] sm:$0xff]
        %v577 = vld [vmem:[%s233 + $0x880] sm:$0xff]
        %v578 = vld [vmem:[%s233 + $0x888] sm:$0xff]
        %v579 = vld [vmem:[%s233 + $0x890] sm:$0xff]
        %v580 = vld [vmem:[%s233 + $0x898] sm:$0xff]
        %v581 = vld [vmem:[%s233 + $0x8a0] sm:$0xff]
        %v582 = vld [vmem:[%s233 + $0x8a8] sm:$0xff]
        %v583 = vld [vmem:[%s233 + $0x8b0] sm:$0xff]
        %v584 = vld [vmem:[%s233 + $0x8b8] sm:$0xff]
        %v585 = vld [vmem:[%s233 + $0x8c0] sm:$0xff]
        %v586 = vld [vmem:[%s233 + $0x8c8] sm:$0xff]
        %v587 = vld [vmem:[%s233 + $0x8d0] sm:$0xff]
        %v588 = vld [vmem:[%s233 + $0x8d8] sm:$0xff]
        %v589 = vld [vmem:[%s233 + $0x8e0] sm:$0xff]
        %v590 = vld [vmem:[%s233 + $0x8e8] sm:$0xff]
        %v591 = vld [vmem:[%s233 + $0x8f0] sm:$0xff]
        %v592 = vld [vmem:[%s233 + $0x8f8] sm:$0xff]
        %v593 = vld [vmem:[%s233 + $0x900] sm:$0xff]
        %v594 = vld [vmem:[%s233 + $0x908] sm:$0xff]
        %v595 = vld [vmem:[%s233 + $0x910] sm:$0xff]
        %v596 = vld [vmem:[%s233 + $0x918] sm:$0xff]
        %v597 = vld [vmem:[%s233 + $0x920] sm:$0xff]
        %v598 = vld [vmem:[%s233 + $0x928] sm:$0xff]
        %v599 = vld [vmem:[%s233 + $0x930] sm:$0xff]
        %v600 = vld [vmem:[%s233 + $0x938] sm:$0xff]
        %v601 = vld [vmem:[%s233 + $0x940] sm:$0xff]
        %v602 = vld [vmem:[%s233 + $0x948] sm:$0xff]
        %v603 = vld [vmem:[%s233 + $0x950] sm:$0xff]
        %v604 = vld [vmem:[%s233 + $0x958] sm:$0xff]
        %v605 = vld [vmem:[%s233 + $0x960] sm:$0xff]
        %v606 = vld [vmem:[%s233 + $0x968] sm:$0xff]
        %v607 = vld [vmem:[%s233 + $0x970] sm:$0xff]
        %v608 = vld [vmem:[%s233 + $0x978] sm:$0xff]
        %v609 = vld [vmem:[%s233 + $0x980] sm:$0xff]
        %v610 = vld [vmem:[%s233 + $0x988] sm:$0xff]
        %v611 = vld [vmem:[%s233 + $0x990] sm:$0xff]
        %v612 = vld [vmem:[%s233 + $0x998] sm:$0xff]
        %v613 = vld [vmem:[%s233 + $0x9a0] sm:$0xff]
        %v614 = vld [vmem:[%s233 + $0x9a8] sm:$0xff]
        %v615 = vld [vmem:[%s233 + $0x9b0] sm:$0xff]
        %v616 = vld [vmem:[%s233 + $0x9b8] sm:$0xff]
        %v617 = vld [vmem:[%s233 + $0x9c0] sm:$0xff]
        %v618 = vld [vmem:[%s233 + $0x9c8] sm:$0xff]
        %v619 = vld [vmem:[%s233 + $0x9d0] sm:$0xff]
        %v620 = vld [vmem:[%s233 + $0x9d8] sm:$0xff]
        %v621 = vld [vmem:[%s233 + $0x9e0] sm:$0xff]
        %v622 = vld [vmem:[%s233 + $0x9e8] sm:$0xff]
        %v623 = vld [vmem:[%s233 + $0x9f0] sm:$0xff]
        %v624 = vld [vmem:[%s233 + $0x9f8] sm:$0xff]
        %v625 = vld [vmem:[%s233 + $0xa00] sm:$0xff]
        %v626 = vld [vmem:[%s233 + $0xa08] sm:$0xff]
        %v627 = vld [vmem:[%s233 + $0xa10] sm:$0xff]
        %v628 = vld [vmem:[%s233 + $0xa18] sm:$0xff]
        %v629 = vld [vmem:[%s233 + $0xa20] sm:$0xff]
        %v630 = vld [vmem:[%s233 + $0xa28] sm:$0xff]
        %v631 = vld [vmem:[%s233 + $0xa30] sm:$0xff]
        %v632 = vld [vmem:[%s233 + $0xa38] sm:$0xff]
        %v633 = vld [vmem:[%s233 + $0xa40] sm:$0xff]
        %v634 = vld [vmem:[%s233 + $0xa48] sm:$0xff]
        %v635 = vld [vmem:[%s233 + $0xa50] sm:$0xff]
        %v636 = vld [vmem:[%s233 + $0xa58] sm:$0xff]
        %v637 = vld [vmem:[%s233 + $0xa60] sm:$0xff]
        %v638 = vld [vmem:[%s233 + $0xa68] sm:$0xff]
        %v639 = vld [vmem:[%s233 + $0xa70] sm:$0xff]
        %v640 = vld [vmem:[%s233 + $0xa78] sm:$0xff]
        %v641 = vld [vmem:[%s233 + $0xa80] sm:$0xff]
        %v642 = vld [vmem:[%s233 + $0xa88] sm:$0xff]
        %v643 = vld [vmem:[%s233 + $0xa90] sm:$0xff]
        %v644 = vld [vmem:[%s233 + $0xa98] sm:$0xff]
        %v645 = vld [vmem:[%s233 + $0xaa0] sm:$0xff]
        %v646 = vld [vmem:[%s233 + $0xaa8] sm:$0xff]
        %v647 = vld [vmem:[%s233 + $0xab0] sm:$0xff]
        %v648 = vld [vmem:[%s233 + $0xab8] sm:$0xff]
        %v649 = vld [vmem:[%s233 + $0xac0] sm:$0xff]
        %v650 = vld [vmem:[%s233 + $0xac8] sm:$0xff]
        %v651 = vld [vmem:[%s233 + $0xad0] sm:$0xff]
        %v652 = vld [vmem:[%s233 + $0xad8] sm:$0xff]
        %v653 = vld [vmem:[%s233 + $0xae0] sm:$0xff]
        %v654 = vld [vmem:[%s233 + $0xae8] sm:$0xff]
        %v655 = vld [vmem:[%s233 + $0xaf0] sm:$0xff]
        %v656 = vld [vmem:[%s233 + $0xaf8] sm:$0xff]
        %v657 = vld [vmem:[%s233 + $0xb00] sm:$0xff]
        %v658 = vld [vmem:[%s233 + $0xb08] sm:$0xff]
        %v659 = vld [vmem:[%s233 + $0xb10] sm:$0xff]
        %v660 = vld [vmem:[%s233 + $0xb18] sm:$0xff]
        %v661 = vld [vmem:[%s233 + $0xb20] sm:$0xff]
        %v662 = vld [vmem:[%s233 + $0xb28] sm:$0xff]
        %v663 = vld [vmem:[%s233 + $0xb30] sm:$0xff]
        %v664 = vld [vmem:[%s233 + $0xb38] sm:$0xff]
        %v665 = vld [vmem:[%s233 + $0xb40] sm:$0xff]
        %v666 = vld [vmem:[%s233 + $0xb48] sm:$0xff]
        %v667 = vld [vmem:[%s233 + $0xb50] sm:$0xff]
        %v668 = vld [vmem:[%s233 + $0xb58] sm:$0xff]
        %v669 = vld [vmem:[%s233 + $0xb60] sm:$0xff]
        %v670 = vld [vmem:[%s233 + $0xb68] sm:$0xff]
        %v671 = vld [vmem:[%s233 + $0xb70] sm:$0xff]
        %v672 = vld [vmem:[%s233 + $0xb78] sm:$0xff]
        %v673 = vld [vmem:[%s233 + $0xb80] sm:$0xff]
        %v674 = vld [vmem:[%s233 + $0xb88] sm:$0xff]
        %v675 = vld [vmem:[%s233 + $0xb90] sm:$0xff]
        %v676 = vld [vmem:[%s233 + $0xb98] sm:$0xff]
        %v677 = vld [vmem:[%s233 + $0xba0] sm:$0xff]
        %v678 = vld [vmem:[%s233 + $0xba8] sm:$0xff]
        %v679 = vld [vmem:[%s233 + $0xbb0] sm:$0xff]
        %v680 = vld [vmem:[%s233 + $0xbb8] sm:$0xff]
        %v681 = vld [vmem:[%s233 + $0xbc0] sm:$0xff]
        %v682 = vld [vmem:[%s233 + $0xbc8] sm:$0xff]
        %v683 = vld [vmem:[%s233 + $0xbd0] sm:$0xff]
        %v684 = vld [vmem:[%s233 + $0xbd8] sm:$0xff]
        %v685 = vld [vmem:[%s233 + $0xbe0] sm:$0xff]
        %v686 = vld [vmem:[%s233 + $0xbe8] sm:$0xff]
        %v687 = vld [vmem:[%s233 + $0xbf0] sm:$0xff]
        %v688 = vld [vmem:[%s233 + $0xbf8] sm:$0xff]
        %v705 = vunpack.c.l.b16 %v289
        %v706 = vunpack.c.h.b16 %v289
        %v707 = vunpack.c.l.b16 %v290
        %v708 = vunpack.c.h.b16 %v290
        %v709 = vunpack.c.l.b16 %v291
        %v710 = vunpack.c.h.b16 %v291
        %v711 = vunpack.c.l.b16 %v292
        %v712 = vunpack.c.h.b16 %v292
        %v713 = vunpack.c.l.b16 %v293
        %v714 = vunpack.c.h.b16 %v293
        %v715 = vunpack.c.l.b16 %v294
        %v716 = vunpack.c.h.b16 %v294
        %v717 = vunpack.c.l.b16 %v295
        %v718 = vunpack.c.h.b16 %v295
        %v719 = vunpack.c.l.b16 %v296
        %v720 = vunpack.c.h.b16 %v296
        %v721 = vunpack.c.l.b16 %v297
        %v722 = vunpack.c.h.b16 %v297
        %v723 = vunpack.c.l.b16 %v298
        %v724 = vunpack.c.h.b16 %v298
        %v725 = vunpack.c.l.b16 %v299
        %v726 = vunpack.c.h.b16 %v299
        %v727 = vunpack.c.l.b16 %v300
        %v728 = vunpack.c.h.b16 %v300
        %v729 = vunpack.c.l.b16 %v301
        %v730 = vunpack.c.h.b16 %v301
        %v731 = vunpack.c.l.b16 %v302
        %v732 = vunpack.c.h.b16 %v302
        %v733 = vunpack.c.l.b16 %v303
        %v734 = vunpack.c.h.b16 %v303
        %v735 = vunpack.c.l.b16 %v304
        %v736 = vunpack.c.h.b16 %v304
        %v737 = vpack.c.b16 %v709, %v705
        %v738 = vpack.c.b16 %v710, %v706
        %v739 = vpack.c.b16 %v711, %v707
        %v740 = vpack.c.b16 %v712, %v708
        %v741 = vpack.c.b16 %v717, %v713
        %v742 = vpack.c.b16 %v718, %v714
        %v743 = vpack.c.b16 %v719, %v715
        %v744 = vpack.c.b16 %v720, %v716
        %v745 = vpack.c.b16 %v725, %v721
        %v746 = vpack.c.b16 %v726, %v722
        %v747 = vpack.c.b16 %v727, %v723
        %v748 = vpack.c.b16 %v728, %v724
        %v749 = vpack.c.b16 %v733, %v729
        %v750 = vpack.c.b16 %v734, %v730
        %v751 = vpack.c.b16 %v735, %v731
        %v752 = vpack.c.b16 %v736, %v732
        %v1153 = vunpack.c.l.b16 %v305
        %v1154 = vunpack.c.h.b16 %v305
        %v1155 = vunpack.c.l.b16 %v306
        %v1156 = vunpack.c.h.b16 %v306
        %v1157 = vunpack.c.l.b16 %v307
        %v1158 = vunpack.c.h.b16 %v307
        %v1159 = vunpack.c.l.b16 %v308
        %v1160 = vunpack.c.h.b16 %v308
        %v1161 = vunpack.c.l.b16 %v309
        %v1162 = vunpack.c.h.b16 %v309
        %v1163 = vunpack.c.l.b16 %v310
        %v1164 = vunpack.c.h.b16 %v310
        %v1165 = vunpack.c.l.b16 %v311
        %v1166 = vunpack.c.h.b16 %v311
        %v1167 = vunpack.c.l.b16 %v312
        %v1168 = vunpack.c.h.b16 %v312
        %v1169 = vunpack.c.l.b16 %v313
        %v1170 = vunpack.c.h.b16 %v313
        %v1171 = vunpack.c.l.b16 %v314
        %v1172 = vunpack.c.h.b16 %v314
        %v1173 = vunpack.c.l.b16 %v315
        %v1174 = vunpack.c.h.b16 %v315
        %v1175 = vunpack.c.l.b16 %v316
        %v1176 = vunpack.c.h.b16 %v316
        %v1177 = vunpack.c.l.b16 %v317
        %v1178 = vunpack.c.h.b16 %v317
        %v1179 = vunpack.c.l.b16 %v318
        %v1180 = vunpack.c.h.b16 %v318
        %v1181 = vunpack.c.l.b16 %v319
        %v1182 = vunpack.c.h.b16 %v319
        %v1183 = vunpack.c.l.b16 %v320
        %v1184 = vunpack.c.h.b16 %v320
        %v1185 = vunpack.c.l.b16 %v321
        %v1186 = vunpack.c.h.b16 %v321
        %v1187 = vunpack.c.l.b16 %v322
        %v1188 = vunpack.c.h.b16 %v322
        %v1189 = vunpack.c.l.b16 %v323
        %v1190 = vunpack.c.h.b16 %v323
        %v1191 = vunpack.c.l.b16 %v324
        %v1192 = vunpack.c.h.b16 %v324
        %v1193 = vunpack.c.l.b16 %v325
        %v1194 = vunpack.c.h.b16 %v325
        %v1195 = vunpack.c.l.b16 %v326
        %v1196 = vunpack.c.h.b16 %v326
        %v1197 = vunpack.c.l.b16 %v327
        %v1198 = vunpack.c.h.b16 %v327
        %v1199 = vunpack.c.l.b16 %v328
        %v1200 = vunpack.c.h.b16 %v328
        %v1201 = vunpack.c.l.b16 %v329
        %v1202 = vunpack.c.h.b16 %v329
        %v1203 = vunpack.c.l.b16 %v330
        %v1204 = vunpack.c.h.b16 %v330
        %v1205 = vunpack.c.l.b16 %v331
        %v1206 = vunpack.c.h.b16 %v331
        %v1207 = vunpack.c.l.b16 %v332
        %v1208 = vunpack.c.h.b16 %v332
        %v1209 = vunpack.c.l.b16 %v333
        %v1210 = vunpack.c.h.b16 %v333
        %v1211 = vunpack.c.l.b16 %v334
        %v1212 = vunpack.c.h.b16 %v334
        %v1213 = vunpack.c.l.b16 %v335
        %v1214 = vunpack.c.h.b16 %v335
        %v1215 = vunpack.c.l.b16 %v336
        %v1216 = vunpack.c.h.b16 %v336
        %v1217 = vunpack.c.l.b16 %v337
        %v1218 = vunpack.c.h.b16 %v337
        %v1219 = vunpack.c.l.b16 %v338
        %v1220 = vunpack.c.h.b16 %v338
        %v1221 = vunpack.c.l.b16 %v339
        %v1222 = vunpack.c.h.b16 %v339
        %v1223 = vunpack.c.l.b16 %v340
        %v1224 = vunpack.c.h.b16 %v340
        %v1225 = vunpack.c.l.b16 %v341
        %v1226 = vunpack.c.h.b16 %v341
        %v1227 = vunpack.c.l.b16 %v342
        %v1228 = vunpack.c.h.b16 %v342
        %v1229 = vunpack.c.l.b16 %v343
        %v1230 = vunpack.c.h.b16 %v343
        %v1231 = vunpack.c.l.b16 %v344
        %v1232 = vunpack.c.h.b16 %v344
        %v1233 = vunpack.c.l.b16 %v345
        %v1234 = vunpack.c.h.b16 %v345
        %v1235 = vunpack.c.l.b16 %v346
        %v1236 = vunpack.c.h.b16 %v346
        %v1237 = vunpack.c.l.b16 %v347
        %v1238 = vunpack.c.h.b16 %v347
        %v1239 = vunpack.c.l.b16 %v348
        %v1240 = vunpack.c.h.b16 %v348
        %v1241 = vunpack.c.l.b16 %v349
        %v1242 = vunpack.c.h.b16 %v349
        %v1243 = vunpack.c.l.b16 %v350
        %v1244 = vunpack.c.h.b16 %v350
        %v1245 = vunpack.c.l.b16 %v351
        %v1246 = vunpack.c.h.b16 %v351
        %v1247 = vunpack.c.l.b16 %v352
        %v1248 = vunpack.c.h.b16 %v352
        %v1249 = vunpack.c.l.b16 %v353
        %v1250 = vunpack.c.h.b16 %v353
        %v1251 = vunpack.c.l.b16 %v354
        %v1252 = vunpack.c.h.b16 %v354
        %v1253 = vunpack.c.l.b16 %v355
        %v1254 = vunpack.c.h.b16 %v355
        %v1255 = vunpack.c.l.b16 %v356
        %v1256 = vunpack.c.h.b16 %v356
        %v1257 = vunpack.c.l.b16 %v357
        %v1258 = vunpack.c.h.b16 %v357
        %v1259 = vunpack.c.l.b16 %v358
        %v1260 = vunpack.c.h.b16 %v358
        %v1261 = vunpack.c.l.b16 %v359
        %v1262 = vunpack.c.h.b16 %v359
        %v1263 = vunpack.c.l.b16 %v360
        %v1264 = vunpack.c.h.b16 %v360
        %v1265 = vunpack.c.l.b16 %v361
        %v1266 = vunpack.c.h.b16 %v361
        %v1267 = vunpack.c.l.b16 %v362
        %v1268 = vunpack.c.h.b16 %v362
        %v1269 = vunpack.c.l.b16 %v363
        %v1270 = vunpack.c.h.b16 %v363
        %v1271 = vunpack.c.l.b16 %v364
        %v1272 = vunpack.c.h.b16 %v364
        %v1273 = vunpack.c.l.b16 %v365
        %v1274 = vunpack.c.h.b16 %v365
        %v1275 = vunpack.c.l.b16 %v366
        %v1276 = vunpack.c.h.b16 %v366
        %v1277 = vunpack.c.l.b16 %v367
        %v1278 = vunpack.c.h.b16 %v367
        %v1279 = vunpack.c.l.b16 %v368
        %v1280 = vunpack.c.h.b16 %v368
        %v1281 = vunpack.c.l.b16 %v369
        %v1282 = vunpack.c.h.b16 %v369
        %v1283 = vunpack.c.l.b16 %v370
        %v1284 = vunpack.c.h.b16 %v370
        %v1285 = vunpack.c.l.b16 %v371
        %v1286 = vunpack.c.h.b16 %v371
        %v1287 = vunpack.c.l.b16 %v372
        %v1288 = vunpack.c.h.b16 %v372
        %v1289 = vunpack.c.l.b16 %v373
        %v1290 = vunpack.c.h.b16 %v373
        %v1291 = vunpack.c.l.b16 %v374
        %v1292 = vunpack.c.h.b16 %v374
        %v1293 = vunpack.c.l.b16 %v375
        %v1294 = vunpack.c.h.b16 %v375
        %v1295 = vunpack.c.l.b16 %v376
        %v1296 = vunpack.c.h.b16 %v376
        %v1297 = vunpack.c.l.b16 %v377
        %v1298 = vunpack.c.h.b16 %v377
        %v1299 = vunpack.c.l.b16 %v378
        %v1300 = vunpack.c.h.b16 %v378
        %v1301 = vunpack.c.l.b16 %v379
        %v1302 = vunpack.c.h.b16 %v379
        %v1303 = vunpack.c.l.b16 %v380
        %v1304 = vunpack.c.h.b16 %v380
        %v1305 = vunpack.c.l.b16 %v381
        %v1306 = vunpack.c.h.b16 %v381
        %v1307 = vunpack.c.l.b16 %v382
        %v1308 = vunpack.c.h.b16 %v382
        %v1309 = vunpack.c.l.b16 %v383
        %v1310 = vunpack.c.h.b16 %v383
        %v1311 = vunpack.c.l.b16 %v384
        %v1312 = vunpack.c.h.b16 %v384
        %v1313 = vunpack.c.l.b16 %v385
        %v1314 = vunpack.c.h.b16 %v385
        %v1315 = vunpack.c.l.b16 %v386
        %v1316 = vunpack.c.h.b16 %v386
        %v1317 = vunpack.c.l.b16 %v387
        %v1318 = vunpack.c.h.b16 %v387
        %v1319 = vunpack.c.l.b16 %v388
        %v1320 = vunpack.c.h.b16 %v388
        %v1321 = vunpack.c.l.b16 %v389
        %v1322 = vunpack.c.h.b16 %v389
        %v1323 = vunpack.c.l.b16 %v390
        %v1324 = vunpack.c.h.b16 %v390
        %v1325 = vunpack.c.l.b16 %v391
        %v1326 = vunpack.c.h.b16 %v391
        %v1327 = vunpack.c.l.b16 %v392
        %v1328 = vunpack.c.h.b16 %v392
        %v1329 = vunpack.c.l.b16 %v393
        %v1330 = vunpack.c.h.b16 %v393
        %v1331 = vunpack.c.l.b16 %v394
        %v1332 = vunpack.c.h.b16 %v394
        %v1333 = vunpack.c.l.b16 %v395
        %v1334 = vunpack.c.h.b16 %v395
        %v1335 = vunpack.c.l.b16 %v396
        %v1336 = vunpack.c.h.b16 %v396
        %v1337 = vunpack.c.l.b16 %v397
        %v1338 = vunpack.c.h.b16 %v397
        %v1339 = vunpack.c.l.b16 %v398
        %v1340 = vunpack.c.h.b16 %v398
        %v1341 = vunpack.c.l.b16 %v399
        %v1342 = vunpack.c.h.b16 %v399
        %v1343 = vunpack.c.l.b16 %v400
        %v1344 = vunpack.c.h.b16 %v400
        %v1345 = vunpack.c.l.b16 %v401
        %v1346 = vunpack.c.h.b16 %v401
        %v1347 = vunpack.c.l.b16 %v402
        %v1348 = vunpack.c.h.b16 %v402
        %v1349 = vunpack.c.l.b16 %v403
        %v1350 = vunpack.c.h.b16 %v403
        %v1351 = vunpack.c.l.b16 %v404
        %v1352 = vunpack.c.h.b16 %v404
        %v1353 = vunpack.c.l.b16 %v405
        %v1354 = vunpack.c.h.b16 %v405
        %v1355 = vunpack.c.l.b16 %v406
        %v1356 = vunpack.c.h.b16 %v406
        %v1357 = vunpack.c.l.b16 %v407
        %v1358 = vunpack.c.h.b16 %v407
        %v1359 = vunpack.c.l.b16 %v408
        %v1360 = vunpack.c.h.b16 %v408
        %v1361 = vunpack.c.l.b16 %v409
        %v1362 = vunpack.c.h.b16 %v409
        %v1363 = vunpack.c.l.b16 %v410
        %v1364 = vunpack.c.h.b16 %v410
        %v1365 = vunpack.c.l.b16 %v411
        %v1366 = vunpack.c.h.b16 %v411
        %v1367 = vunpack.c.l.b16 %v412
        %v1368 = vunpack.c.h.b16 %v412
        %v1369 = vunpack.c.l.b16 %v413
        %v1370 = vunpack.c.h.b16 %v413
        %v1371 = vunpack.c.l.b16 %v414
        %v1372 = vunpack.c.h.b16 %v414
        %v1373 = vunpack.c.l.b16 %v415
        %v1374 = vunpack.c.h.b16 %v415
        %v1375 = vunpack.c.l.b16 %v416
        %v1376 = vunpack.c.h.b16 %v416
        %v1377 = vunpack.c.l.b16 %v417
        %v1378 = vunpack.c.h.b16 %v417
        %v1379 = vunpack.c.l.b16 %v418
        %v1380 = vunpack.c.h.b16 %v418
        %v1381 = vunpack.c.l.b16 %v419
        %v1382 = vunpack.c.h.b16 %v419
        %v1383 = vunpack.c.l.b16 %v420
        %v1384 = vunpack.c.h.b16 %v420
        %v1385 = vunpack.c.l.b16 %v421
        %v1386 = vunpack.c.h.b16 %v421
        %v1387 = vunpack.c.l.b16 %v422
        %v1388 = vunpack.c.h.b16 %v422
        %v1389 = vunpack.c.l.b16 %v423
        %v1390 = vunpack.c.h.b16 %v423
        %v1391 = vunpack.c.l.b16 %v424
        %v1392 = vunpack.c.h.b16 %v424
        %v1393 = vunpack.c.l.b16 %v425
        %v1394 = vunpack.c.h.b16 %v425
        %v1395 = vunpack.c.l.b16 %v426
        %v1396 = vunpack.c.h.b16 %v426
        %v1397 = vunpack.c.l.b16 %v427
        %v1398 = vunpack.c.h.b16 %v427
        %v1399 = vunpack.c.l.b16 %v428
        %v1400 = vunpack.c.h.b16 %v428
        %v1401 = vunpack.c.l.b16 %v429
        %v1402 = vunpack.c.h.b16 %v429
        %v1403 = vunpack.c.l.b16 %v430
        %v1404 = vunpack.c.h.b16 %v430
        %v1405 = vunpack.c.l.b16 %v431
        %v1406 = vunpack.c.h.b16 %v431
        %v1407 = vunpack.c.l.b16 %v432
        %v1408 = vunpack.c.h.b16 %v432
        %v1409 = vunpack.c.l.b16 %v433
        %v1410 = vunpack.c.h.b16 %v433
        %v1411 = vunpack.c.l.b16 %v434
        %v1412 = vunpack.c.h.b16 %v434
        %v1413 = vunpack.c.l.b16 %v435
        %v1414 = vunpack.c.h.b16 %v435
        %v1415 = vunpack.c.l.b16 %v436
        %v1416 = vunpack.c.h.b16 %v436
        %v1417 = vunpack.c.l.b16 %v437
        %v1418 = vunpack.c.h.b16 %v437
        %v1419 = vunpack.c.l.b16 %v438
        %v1420 = vunpack.c.h.b16 %v438
        %v1421 = vunpack.c.l.b16 %v439
        %v1422 = vunpack.c.h.b16 %v439
        %v1423 = vunpack.c.l.b16 %v440
        %v1424 = vunpack.c.h.b16 %v440
        %v1425 = vunpack.c.l.b16 %v441
        %v1426 = vunpack.c.h.b16 %v441
        %v1427 = vunpack.c.l.b16 %v442
        %v1428 = vunpack.c.h.b16 %v442
        %v1429 = vunpack.c.l.b16 %v443
        %v1430 = vunpack.c.h.b16 %v443
        %v1431 = vunpack.c.l.b16 %v444
        %v1432 = vunpack.c.h.b16 %v444
        %v1433 = vunpack.c.l.b16 %v445
        %v1434 = vunpack.c.h.b16 %v445
        %v1435 = vunpack.c.l.b16 %v446
        %v1436 = vunpack.c.h.b16 %v446
        %v1437 = vunpack.c.l.b16 %v447
        %v1438 = vunpack.c.h.b16 %v447
        %v1439 = vunpack.c.l.b16 %v448
        %v1440 = vunpack.c.h.b16 %v448
        %v1441 = vunpack.c.l.b16 %v449
        %v1442 = vunpack.c.h.b16 %v449
        %v1443 = vunpack.c.l.b16 %v450
        %v1444 = vunpack.c.h.b16 %v450
        %v1445 = vunpack.c.l.b16 %v451
        %v1446 = vunpack.c.h.b16 %v451
        %v1447 = vunpack.c.l.b16 %v452
        %v1448 = vunpack.c.h.b16 %v452
        %v1449 = vunpack.c.l.b16 %v453
        %v1450 = vunpack.c.h.b16 %v453
        %v1451 = vunpack.c.l.b16 %v454
        %v1452 = vunpack.c.h.b16 %v454
        %v1453 = vunpack.c.l.b16 %v455
        %v1454 = vunpack.c.h.b16 %v455
        %v1455 = vunpack.c.l.b16 %v456
        %v1456 = vunpack.c.h.b16 %v456
        %v1457 = vunpack.c.l.b16 %v457
        %v1458 = vunpack.c.h.b16 %v457
        %v1459 = vunpack.c.l.b16 %v458
        %v1460 = vunpack.c.h.b16 %v458
        %v1461 = vunpack.c.l.b16 %v459
        %v1462 = vunpack.c.h.b16 %v459
        %v1463 = vunpack.c.l.b16 %v460
        %v1464 = vunpack.c.h.b16 %v460
        %v1465 = vunpack.c.l.b16 %v461
        %v1466 = vunpack.c.h.b16 %v461
        %v1467 = vunpack.c.l.b16 %v462
        %v1468 = vunpack.c.h.b16 %v462
        %v1469 = vunpack.c.l.b16 %v463
        %v1470 = vunpack.c.h.b16 %v463
        %v1471 = vunpack.c.l.b16 %v464
        %v1472 = vunpack.c.h.b16 %v464
        %v1473 = vunpack.c.l.b16 %v465
        %v1474 = vunpack.c.h.b16 %v465
        %v1475 = vunpack.c.l.b16 %v466
        %v1476 = vunpack.c.h.b16 %v466
        %v1477 = vunpack.c.l.b16 %v467
        %v1478 = vunpack.c.h.b16 %v467
        %v1479 = vunpack.c.l.b16 %v468
        %v1480 = vunpack.c.h.b16 %v468
        %v1481 = vunpack.c.l.b16 %v469
        %v1482 = vunpack.c.h.b16 %v469
        %v1483 = vunpack.c.l.b16 %v470
        %v1484 = vunpack.c.h.b16 %v470
        %v1485 = vunpack.c.l.b16 %v471
        %v1486 = vunpack.c.h.b16 %v471
        %v1487 = vunpack.c.l.b16 %v472
        %v1488 = vunpack.c.h.b16 %v472
        %v1489 = vunpack.c.l.b16 %v473
        %v1490 = vunpack.c.h.b16 %v473
        %v1491 = vunpack.c.l.b16 %v474
        %v1492 = vunpack.c.h.b16 %v474
        %v1493 = vunpack.c.l.b16 %v475
        %v1494 = vunpack.c.h.b16 %v475
        %v1495 = vunpack.c.l.b16 %v476
        %v1496 = vunpack.c.h.b16 %v476
        %v1497 = vunpack.c.l.b16 %v477
        %v1498 = vunpack.c.h.b16 %v477
        %v1499 = vunpack.c.l.b16 %v478
        %v1500 = vunpack.c.h.b16 %v478
        %v1501 = vunpack.c.l.b16 %v479
        %v1502 = vunpack.c.h.b16 %v479
        %v1503 = vunpack.c.l.b16 %v480
        %v1504 = vunpack.c.h.b16 %v480
        %v1505 = vunpack.c.l.b16 %v481
        %v1506 = vunpack.c.h.b16 %v481
        %v1507 = vunpack.c.l.b16 %v482
        %v1508 = vunpack.c.h.b16 %v482
        %v1509 = vunpack.c.l.b16 %v483
        %v1510 = vunpack.c.h.b16 %v483
        %v1511 = vunpack.c.l.b16 %v484
        %v1512 = vunpack.c.h.b16 %v484
        %v1513 = vunpack.c.l.b16 %v485
        %v1514 = vunpack.c.h.b16 %v485
        %v1515 = vunpack.c.l.b16 %v486
        %v1516 = vunpack.c.h.b16 %v486
        %v1517 = vunpack.c.l.b16 %v487
        %v1518 = vunpack.c.h.b16 %v487
        %v1519 = vunpack.c.l.b16 %v488
        %v1520 = vunpack.c.h.b16 %v488
        %v1521 = vunpack.c.l.b16 %v489
        %v1522 = vunpack.c.h.b16 %v489
        %v1523 = vunpack.c.l.b16 %v490
        %v1524 = vunpack.c.h.b16 %v490
        %v1525 = vunpack.c.l.b16 %v491
        %v1526 = vunpack.c.h.b16 %v491
        %v1527 = vunpack.c.l.b16 %v492
        %v1528 = vunpack.c.h.b16 %v492
        %v1529 = vunpack.c.l.b16 %v493
        %v1530 = vunpack.c.h.b16 %v493
        %v1531 = vunpack.c.l.b16 %v494
        %v1532 = vunpack.c.h.b16 %v494
        %v1533 = vunpack.c.l.b16 %v495
        %v1534 = vunpack.c.h.b16 %v495
        %v1535 = vunpack.c.l.b16 %v496
        %v1536 = vunpack.c.h.b16 %v496
        %v1537 = vunpack.c.l.b16 %v497
        %v1538 = vunpack.c.h.b16 %v497
        %v1539 = vunpack.c.l.b16 %v498
        %v1540 = vunpack.c.h.b16 %v498
        %v1541 = vunpack.c.l.b16 %v499
        %v1542 = vunpack.c.h.b16 %v499
        %v1543 = vunpack.c.l.b16 %v500
        %v1544 = vunpack.c.h.b16 %v500
        %v1545 = vunpack.c.l.b16 %v501
        %v1546 = vunpack.c.h.b16 %v501
        %v1547 = vunpack.c.l.b16 %v502
        %v1548 = vunpack.c.h.b16 %v502
        %v1549 = vunpack.c.l.b16 %v503
        %v1550 = vunpack.c.h.b16 %v503
        %v1551 = vunpack.c.l.b16 %v504
        %v1552 = vunpack.c.h.b16 %v504
        %v1553 = vunpack.c.l.b16 %v505
        %v1554 = vunpack.c.h.b16 %v505
        %v1555 = vunpack.c.l.b16 %v506
        %v1556 = vunpack.c.h.b16 %v506
        %v1557 = vunpack.c.l.b16 %v507
        %v1558 = vunpack.c.h.b16 %v507
        %v1559 = vunpack.c.l.b16 %v508
        %v1560 = vunpack.c.h.b16 %v508
        %v1561 = vunpack.c.l.b16 %v509
        %v1562 = vunpack.c.h.b16 %v509
        %v1563 = vunpack.c.l.b16 %v510
        %v1564 = vunpack.c.h.b16 %v510
        %v1565 = vunpack.c.l.b16 %v511
        %v1566 = vunpack.c.h.b16 %v511
        %v1567 = vunpack.c.l.b16 %v512
        %v1568 = vunpack.c.h.b16 %v512
        %v1569 = vunpack.c.l.b16 %v513
        %v1570 = vunpack.c.h.b16 %v513
        %v1571 = vunpack.c.l.b16 %v514
        %v1572 = vunpack.c.h.b16 %v514
        %v1573 = vunpack.c.l.b16 %v515
        %v1574 = vunpack.c.h.b16 %v515
        %v1575 = vunpack.c.l.b16 %v516
        %v1576 = vunpack.c.h.b16 %v516
        %v1577 = vunpack.c.l.b16 %v517
        %v1578 = vunpack.c.h.b16 %v517
        %v1579 = vunpack.c.l.b16 %v518
        %v1580 = vunpack.c.h.b16 %v518
        %v1581 = vunpack.c.l.b16 %v519
        %v1582 = vunpack.c.h.b16 %v519
        %v1583 = vunpack.c.l.b16 %v520
        %v1584 = vunpack.c.h.b16 %v520
        %v1585 = vunpack.c.l.b16 %v521
        %v1586 = vunpack.c.h.b16 %v521
        %v1587 = vunpack.c.l.b16 %v522
        %v1588 = vunpack.c.h.b16 %v522
        %v1589 = vunpack.c.l.b16 %v523
        %v1590 = vunpack.c.h.b16 %v523
        %v1591 = vunpack.c.l.b16 %v524
        %v1592 = vunpack.c.h.b16 %v524
        %v1593 = vunpack.c.l.b16 %v525
        %v1594 = vunpack.c.h.b16 %v525
        %v1595 = vunpack.c.l.b16 %v526
        %v1596 = vunpack.c.h.b16 %v526
        %v1597 = vunpack.c.l.b16 %v527
        %v1598 = vunpack.c.h.b16 %v527
        %v1599 = vunpack.c.l.b16 %v528
        %v1600 = vunpack.c.h.b16 %v528
        %v1601 = vunpack.c.l.b16 %v529
        %v1602 = vunpack.c.h.b16 %v529
        %v1603 = vunpack.c.l.b16 %v530
        %v1604 = vunpack.c.h.b16 %v530
        %v1605 = vunpack.c.l.b16 %v531
        %v1606 = vunpack.c.h.b16 %v531
        %v1607 = vunpack.c.l.b16 %v532
        %v1608 = vunpack.c.h.b16 %v532
        %v1609 = vunpack.c.l.b16 %v533
        %v1610 = vunpack.c.h.b16 %v533
        %v1611 = vunpack.c.l.b16 %v534
        %v1612 = vunpack.c.h.b16 %v534
        %v1613 = vunpack.c.l.b16 %v535
        %v1614 = vunpack.c.h.b16 %v535
        %v1615 = vunpack.c.l.b16 %v536
        %v1616 = vunpack.c.h.b16 %v536
        %v1617 = vunpack.c.l.b16 %v537
        %v1618 = vunpack.c.h.b16 %v537
        %v1619 = vunpack.c.l.b16 %v538
        %v1620 = vunpack.c.h.b16 %v538
        %v1621 = vunpack.c.l.b16 %v539
        %v1622 = vunpack.c.h.b16 %v539
        %v1623 = vunpack.c.l.b16 %v540
        %v1624 = vunpack.c.h.b16 %v540
        %v1625 = vunpack.c.l.b16 %v541
        %v1626 = vunpack.c.h.b16 %v541
        %v1627 = vunpack.c.l.b16 %v542
        %v1628 = vunpack.c.h.b16 %v542
        %v1629 = vunpack.c.l.b16 %v543
        %v1630 = vunpack.c.h.b16 %v543
        %v1631 = vunpack.c.l.b16 %v544
        %v1632 = vunpack.c.h.b16 %v544
        %v1633 = vunpack.c.l.b16 %v545
        %v1634 = vunpack.c.h.b16 %v545
        %v1635 = vunpack.c.l.b16 %v546
        %v1636 = vunpack.c.h.b16 %v546
        %v1637 = vunpack.c.l.b16 %v547
        %v1638 = vunpack.c.h.b16 %v547
        %v1639 = vunpack.c.l.b16 %v548
        %v1640 = vunpack.c.h.b16 %v548
        %v1641 = vunpack.c.l.b16 %v549
        %v1642 = vunpack.c.h.b16 %v549
        %v1643 = vunpack.c.l.b16 %v550
        %v1644 = vunpack.c.h.b16 %v550
        %v1645 = vunpack.c.l.b16 %v551
        %v1646 = vunpack.c.h.b16 %v551
        %v1647 = vunpack.c.l.b16 %v552
        %v1648 = vunpack.c.h.b16 %v552
        %v1649 = vunpack.c.l.b16 %v553
        %v1650 = vunpack.c.h.b16 %v553
        %v1651 = vunpack.c.l.b16 %v554
        %v1652 = vunpack.c.h.b16 %v554
        %v1653 = vunpack.c.l.b16 %v555
        %v1654 = vunpack.c.h.b16 %v555
        %v1655 = vunpack.c.l.b16 %v556
        %v1656 = vunpack.c.h.b16 %v556
        %v1657 = vunpack.c.l.b16 %v557
        %v1658 = vunpack.c.h.b16 %v557
        %v1659 = vunpack.c.l.b16 %v558
        %v1660 = vunpack.c.h.b16 %v558
        %v1661 = vunpack.c.l.b16 %v559
        %v1662 = vunpack.c.h.b16 %v559
        %v1663 = vunpack.c.l.b16 %v560
        %v1664 = vunpack.c.h.b16 %v560
        %v1665 = vunpack.c.l.b16 %v561
        %v1666 = vunpack.c.h.b16 %v561
        %v1667 = vunpack.c.l.b16 %v562
        %v1668 = vunpack.c.h.b16 %v562
        %v1669 = vunpack.c.l.b16 %v563
        %v1670 = vunpack.c.h.b16 %v563
        %v1671 = vunpack.c.l.b16 %v564
        %v1672 = vunpack.c.h.b16 %v564
        %v1673 = vunpack.c.l.b16 %v565
        %v1674 = vunpack.c.h.b16 %v565
        %v1675 = vunpack.c.l.b16 %v566
        %v1676 = vunpack.c.h.b16 %v566
        %v1677 = vunpack.c.l.b16 %v567
        %v1678 = vunpack.c.h.b16 %v567
        %v1679 = vunpack.c.l.b16 %v568
        %v1680 = vunpack.c.h.b16 %v568
        %v1681 = vunpack.c.l.b16 %v569
        %v1682 = vunpack.c.h.b16 %v569
        %v1683 = vunpack.c.l.b16 %v570
        %v1684 = vunpack.c.h.b16 %v570
        %v1685 = vunpack.c.l.b16 %v571
        %v1686 = vunpack.c.h.b16 %v571
        %v1687 = vunpack.c.l.b16 %v572
        %v1688 = vunpack.c.h.b16 %v572
        %v1689 = vunpack.c.l.b16 %v573
        %v1690 = vunpack.c.h.b16 %v573
        %v1691 = vunpack.c.l.b16 %v574
        %v1692 = vunpack.c.h.b16 %v574
        %v1693 = vunpack.c.l.b16 %v575
        %v1694 = vunpack.c.h.b16 %v575
        %v1695 = vunpack.c.l.b16 %v576
        %v1696 = vunpack.c.h.b16 %v576
        %v1697 = vunpack.c.l.b16 %v577
        %v1698 = vunpack.c.h.b16 %v577
        %v1699 = vunpack.c.l.b16 %v578
        %v1700 = vunpack.c.h.b16 %v578
        %v1701 = vunpack.c.l.b16 %v579
        %v1702 = vunpack.c.h.b16 %v579
        %v1703 = vunpack.c.l.b16 %v580
        %v1704 = vunpack.c.h.b16 %v580
        %v1705 = vunpack.c.l.b16 %v581
        %v1706 = vunpack.c.h.b16 %v581
        %v1707 = vunpack.c.l.b16 %v582
        %v1708 = vunpack.c.h.b16 %v582
        %v1709 = vunpack.c.l.b16 %v583
        %v1710 = vunpack.c.h.b16 %v583
        %v1711 = vunpack.c.l.b16 %v584
        %v1712 = vunpack.c.h.b16 %v584
        %v1713 = vunpack.c.l.b16 %v585
        %v1714 = vunpack.c.h.b16 %v585
        %v1715 = vunpack.c.l.b16 %v586
        %v1716 = vunpack.c.h.b16 %v586
        %v1717 = vunpack.c.l.b16 %v587
        %v1718 = vunpack.c.h.b16 %v587
        %v1719 = vunpack.c.l.b16 %v588
        %v1720 = vunpack.c.h.b16 %v588
        %v1721 = vunpack.c.l.b16 %v589
        %v1722 = vunpack.c.h.b16 %v589
        %v1723 = vunpack.c.l.b16 %v590
        %v1724 = vunpack.c.h.b16 %v590
        %v1725 = vunpack.c.l.b16 %v591
        %v1726 = vunpack.c.h.b16 %v591
        %v1727 = vunpack.c.l.b16 %v592
        %v1728 = vunpack.c.h.b16 %v592
        %v1729 = vunpack.c.l.b16 %v593
        %v1730 = vunpack.c.h.b16 %v593
        %v1731 = vunpack.c.l.b16 %v594
        %v1732 = vunpack.c.h.b16 %v594
        %v1733 = vunpack.c.l.b16 %v595
        %v1734 = vunpack.c.h.b16 %v595
        %v1735 = vunpack.c.l.b16 %v596
        %v1736 = vunpack.c.h.b16 %v596
        %v1737 = vunpack.c.l.b16 %v597
        %v1738 = vunpack.c.h.b16 %v597
        %v1739 = vunpack.c.l.b16 %v598
        %v1740 = vunpack.c.h.b16 %v598
        %v1741 = vunpack.c.l.b16 %v599
        %v1742 = vunpack.c.h.b16 %v599
        %v1743 = vunpack.c.l.b16 %v600
        %v1744 = vunpack.c.h.b16 %v600
        %v1745 = vunpack.c.l.b16 %v601
        %v1746 = vunpack.c.h.b16 %v601
        %v1747 = vunpack.c.l.b16 %v602
        %v1748 = vunpack.c.h.b16 %v602
        %v1749 = vunpack.c.l.b16 %v603
        %v1750 = vunpack.c.h.b16 %v603
        %v1751 = vunpack.c.l.b16 %v604
        %v1752 = vunpack.c.h.b16 %v604
        %v1753 = vunpack.c.l.b16 %v605
        %v1754 = vunpack.c.h.b16 %v605
        %v1755 = vunpack.c.l.b16 %v606
        %v1756 = vunpack.c.h.b16 %v606
        %v1757 = vunpack.c.l.b16 %v607
        %v1758 = vunpack.c.h.b16 %v607
        %v1759 = vunpack.c.l.b16 %v608
        %v1760 = vunpack.c.h.b16 %v608
        %v1761 = vunpack.c.l.b16 %v609
        %v1762 = vunpack.c.h.b16 %v609
        %v1763 = vunpack.c.l.b16 %v610
        %v1764 = vunpack.c.h.b16 %v610
        %v1765 = vunpack.c.l.b16 %v611
        %v1766 = vunpack.c.h.b16 %v611
        %v1767 = vunpack.c.l.b16 %v612
        %v1768 = vunpack.c.h.b16 %v612
        %v1769 = vunpack.c.l.b16 %v613
        %v1770 = vunpack.c.h.b16 %v613
        %v1771 = vunpack.c.l.b16 %v614
        %v1772 = vunpack.c.h.b16 %v614
        %v1773 = vunpack.c.l.b16 %v615
        %v1774 = vunpack.c.h.b16 %v615
        %v1775 = vunpack.c.l.b16 %v616
        %v1776 = vunpack.c.h.b16 %v616
        %v1777 = vunpack.c.l.b16 %v617
        %v1778 = vunpack.c.h.b16 %v617
        %v1779 = vunpack.c.l.b16 %v618
        %v1780 = vunpack.c.h.b16 %v618
        %v1781 = vunpack.c.l.b16 %v619
        %v1782 = vunpack.c.h.b16 %v619
        %v1783 = vunpack.c.l.b16 %v620
        %v1784 = vunpack.c.h.b16 %v620
        %v1785 = vunpack.c.l.b16 %v621
        %v1786 = vunpack.c.h.b16 %v621
        %v1787 = vunpack.c.l.b16 %v622
        %v1788 = vunpack.c.h.b16 %v622
        %v1789 = vunpack.c.l.b16 %v623
        %v1790 = vunpack.c.h.b16 %v623
        %v1791 = vunpack.c.l.b16 %v624
        %v1792 = vunpack.c.h.b16 %v624
        %v1793 = vunpack.c.l.b16 %v625
        %v1794 = vunpack.c.h.b16 %v625
        %v1795 = vunpack.c.l.b16 %v626
        %v1796 = vunpack.c.h.b16 %v626
        %v1797 = vunpack.c.l.b16 %v627
        %v1798 = vunpack.c.h.b16 %v627
        %v1799 = vunpack.c.l.b16 %v628
        %v1800 = vunpack.c.h.b16 %v628
        %v1801 = vunpack.c.l.b16 %v629
        %v1802 = vunpack.c.h.b16 %v629
        %v1803 = vunpack.c.l.b16 %v630
        %v1804 = vunpack.c.h.b16 %v630
        %v1805 = vunpack.c.l.b16 %v631
        %v1806 = vunpack.c.h.b16 %v631
        %v1807 = vunpack.c.l.b16 %v632
        %v1808 = vunpack.c.h.b16 %v632
        %v1809 = vunpack.c.l.b16 %v633
        %v1810 = vunpack.c.h.b16 %v633
        %v1811 = vunpack.c.l.b16 %v634
        %v1812 = vunpack.c.h.b16 %v634
        %v1813 = vunpack.c.l.b16 %v635
        %v1814 = vunpack.c.h.b16 %v635
        %v1815 = vunpack.c.l.b16 %v636
        %v1816 = vunpack.c.h.b16 %v636
        %v1817 = vunpack.c.l.b16 %v637
        %v1818 = vunpack.c.h.b16 %v637
        %v1819 = vunpack.c.l.b16 %v638
        %v1820 = vunpack.c.h.b16 %v638
        %v1821 = vunpack.c.l.b16 %v639
        %v1822 = vunpack.c.h.b16 %v639
        %v1823 = vunpack.c.l.b16 %v640
        %v1824 = vunpack.c.h.b16 %v640
        %v1825 = vunpack.c.l.b16 %v641
        %v1826 = vunpack.c.h.b16 %v641
        %v1827 = vunpack.c.l.b16 %v642
        %v1828 = vunpack.c.h.b16 %v642
        %v1829 = vunpack.c.l.b16 %v643
        %v1830 = vunpack.c.h.b16 %v643
        %v1831 = vunpack.c.l.b16 %v644
        %v1832 = vunpack.c.h.b16 %v644
        %v1833 = vunpack.c.l.b16 %v645
        %v1834 = vunpack.c.h.b16 %v645
        %v1835 = vunpack.c.l.b16 %v646
        %v1836 = vunpack.c.h.b16 %v646
        %v1837 = vunpack.c.l.b16 %v647
        %v1838 = vunpack.c.h.b16 %v647
        %v1839 = vunpack.c.l.b16 %v648
        %v1840 = vunpack.c.h.b16 %v648
        %v1841 = vunpack.c.l.b16 %v649
        %v1842 = vunpack.c.h.b16 %v649
        %v1843 = vunpack.c.l.b16 %v650
        %v1844 = vunpack.c.h.b16 %v650
        %v1845 = vunpack.c.l.b16 %v651
        %v1846 = vunpack.c.h.b16 %v651
        %v1847 = vunpack.c.l.b16 %v652
        %v1848 = vunpack.c.h.b16 %v652
        %v1849 = vunpack.c.l.b16 %v653
        %v1850 = vunpack.c.h.b16 %v653
        %v1851 = vunpack.c.l.b16 %v654
        %v1852 = vunpack.c.h.b16 %v654
        %v1853 = vunpack.c.l.b16 %v655
        %v1854 = vunpack.c.h.b16 %v655
        %v1855 = vunpack.c.l.b16 %v656
        %v1856 = vunpack.c.h.b16 %v656
        %v1857 = vunpack.c.l.b16 %v657
        %v1858 = vunpack.c.h.b16 %v657
        %v1859 = vunpack.c.l.b16 %v658
        %v1860 = vunpack.c.h.b16 %v658
        %v1861 = vunpack.c.l.b16 %v659
        %v1862 = vunpack.c.h.b16 %v659
        %v1863 = vunpack.c.l.b16 %v660
        %v1864 = vunpack.c.h.b16 %v660
        %v1865 = vunpack.c.l.b16 %v661
        %v1866 = vunpack.c.h.b16 %v661
        %v1867 = vunpack.c.l.b16 %v662
        %v1868 = vunpack.c.h.b16 %v662
        %v1869 = vunpack.c.l.b16 %v663
        %v1870 = vunpack.c.h.b16 %v663
        %v1871 = vunpack.c.l.b16 %v664
        %v1872 = vunpack.c.h.b16 %v664
        %v1873 = vunpack.c.l.b16 %v665
        %v1874 = vunpack.c.h.b16 %v665
        %v1875 = vunpack.c.l.b16 %v666
        %v1876 = vunpack.c.h.b16 %v666
        %v1877 = vunpack.c.l.b16 %v667
        %v1878 = vunpack.c.h.b16 %v667
        %v1879 = vunpack.c.l.b16 %v668
        %v1880 = vunpack.c.h.b16 %v668
        %v1881 = vunpack.c.l.b16 %v669
        %v1882 = vunpack.c.h.b16 %v669
        %v1883 = vunpack.c.l.b16 %v670
        %v1884 = vunpack.c.h.b16 %v670
        %v1885 = vunpack.c.l.b16 %v671
        %v1886 = vunpack.c.h.b16 %v671
        %v1887 = vunpack.c.l.b16 %v672
        %v1888 = vunpack.c.h.b16 %v672
        %v1889 = vunpack.c.l.b16 %v673
        %v1890 = vunpack.c.h.b16 %v673
        %v1891 = vunpack.c.l.b16 %v674
        %v1892 = vunpack.c.h.b16 %v674
        %v1893 = vunpack.c.l.b16 %v675
        %v1894 = vunpack.c.h.b16 %v675
        %v1895 = vunpack.c.l.b16 %v676
        %v1896 = vunpack.c.h.b16 %v676
        %v1897 = vunpack.c.l.b16 %v677
        %v1898 = vunpack.c.h.b16 %v677
        %v1899 = vunpack.c.l.b16 %v678
        %v1900 = vunpack.c.h.b16 %v678
        %v1901 = vunpack.c.l.b16 %v679
        %v1902 = vunpack.c.h.b16 %v679
        %v1903 = vunpack.c.l.b16 %v680
        %v1904 = vunpack.c.h.b16 %v680
        %v1905 = vunpack.c.l.b16 %v681
        %v1906 = vunpack.c.h.b16 %v681
        %v1907 = vunpack.c.l.b16 %v682
        %v1908 = vunpack.c.h.b16 %v682
        %v1909 = vunpack.c.l.b16 %v683
        %v1910 = vunpack.c.h.b16 %v683
        %v1911 = vunpack.c.l.b16 %v684
        %v1912 = vunpack.c.h.b16 %v684
        %v1913 = vunpack.c.l.b16 %v685
        %v1914 = vunpack.c.h.b16 %v685
        %v1915 = vunpack.c.l.b16 %v686
        %v1916 = vunpack.c.h.b16 %v686
        %v1917 = vunpack.c.l.b16 %v687
        %v1918 = vunpack.c.h.b16 %v687
        %v1919 = vunpack.c.l.b16 %v688
        %v1920 = vunpack.c.h.b16 %v688
        %v1921 = vpack.c.b16 %v1165, %v1153
        %v1922 = vpack.c.b16 %v1166, %v1154
        %v1923 = vpack.c.b16 %v1167, %v1155
        %v1924 = vpack.c.b16 %v1168, %v1156
        %v1925 = vpack.c.b16 %v1169, %v1157
        %v1926 = vpack.c.b16 %v1170, %v1158
        %v1927 = vpack.c.b16 %v1171, %v1159
        %v1928 = vpack.c.b16 %v1172, %v1160
        %v1929 = vpack.c.b16 %v1173, %v1161
        %v1930 = vpack.c.b16 %v1174, %v1162
        %v1931 = vpack.c.b16 %v1175, %v1163
        %v1932 = vpack.c.b16 %v1176, %v1164
        %v1933 = vpack.c.b16 %v1189, %v1177
        %v1934 = vpack.c.b16 %v1190, %v1178
        %v1935 = vpack.c.b16 %v1191, %v1179
        %v1936 = vpack.c.b16 %v1192, %v1180
        %v1937 = vpack.c.b16 %v1193, %v1181
        %v1938 = vpack.c.b16 %v1194, %v1182
        %v1939 = vpack.c.b16 %v1195, %v1183
        %v1940 = vpack.c.b16 %v1196, %v1184
        %v1941 = vpack.c.b16 %v1197, %v1185
        %v1942 = vpack.c.b16 %v1198, %v1186
        %v1943 = vpack.c.b16 %v1199, %v1187
        %v1944 = vpack.c.b16 %v1200, %v1188
        %v1945 = vpack.c.b16 %v1213, %v1201
        %v1946 = vpack.c.b16 %v1214, %v1202
        %v1947 = vpack.c.b16 %v1215, %v1203
        %v1948 = vpack.c.b16 %v1216, %v1204
        %v1949 = vpack.c.b16 %v1217, %v1205
        %v1950 = vpack.c.b16 %v1218, %v1206
        %v1951 = vpack.c.b16 %v1219, %v1207
        %v1952 = vpack.c.b16 %v1220, %v1208
        %v1953 = vpack.c.b16 %v1221, %v1209
        %v1954 = vpack.c.b16 %v1222, %v1210
        %v1955 = vpack.c.b16 %v1223, %v1211
        %v1956 = vpack.c.b16 %v1224, %v1212
        %v1957 = vpack.c.b16 %v1237, %v1225
        %v1958 = vpack.c.b16 %v1238, %v1226
        %v1959 = vpack.c.b16 %v1239, %v1227
        %v1960 = vpack.c.b16 %v1240, %v1228
        %v1961 = vpack.c.b16 %v1241, %v1229
        %v1962 = vpack.c.b16 %v1242, %v1230
        %v1963 = vpack.c.b16 %v1243, %v1231
        %v1964 = vpack.c.b16 %v1244, %v1232
        %v1965 = vpack.c.b16 %v1245, %v1233
        %v1966 = vpack.c.b16 %v1246, %v1234
        %v1967 = vpack.c.b16 %v1247, %v1235
        %v1968 = vpack.c.b16 %v1248, %v1236
        %v1969 = vpack.c.b16 %v1261, %v1249
        %v1970 = vpack.c.b16 %v1262, %v1250
        %v1971 = vpack.c.b16 %v1263, %v1251
        %v1972 = vpack.c.b16 %v1264, %v1252
        %v1973 = vpack.c.b16 %v1265, %v1253
        %v1974 = vpack.c.b16 %v1266, %v1254
        %v1975 = vpack.c.b16 %v1267, %v1255
        %v1976 = vpack.c.b16 %v1268, %v1256
        %v1977 = vpack.c.b16 %v1269, %v1257
        %v1978 = vpack.c.b16 %v1270, %v1258
        %v1979 = vpack.c.b16 %v1271, %v1259
        %v1980 = vpack.c.b16 %v1272, %v1260
        %v1981 = vpack.c.b16 %v1285, %v1273
        %v1982 = vpack.c.b16 %v1286, %v1274
        %v1983 = vpack.c.b16 %v1287, %v1275
        %v1984 = vpack.c.b16 %v1288, %v1276
        %v1985 = vpack.c.b16 %v1289, %v1277
        %v1986 = vpack.c.b16 %v1290, %v1278
        %v1987 = vpack.c.b16 %v1291, %v1279
        %v1988 = vpack.c.b16 %v1292, %v1280
        %v1989 = vpack.c.b16 %v1293, %v1281
        %v1990 = vpack.c.b16 %v1294, %v1282
        %v1991 = vpack.c.b16 %v1295, %v1283
        %v1992 = vpack.c.b16 %v1296, %v1284
        %v1993 = vpack.c.b16 %v1309, %v1297
        %v1994 = vpack.c.b16 %v1310, %v1298
        %v1995 = vpack.c.b16 %v1311, %v1299
        %v1996 = vpack.c.b16 %v1312, %v1300
        %v1997 = vpack.c.b16 %v1313, %v1301
        %v1998 = vpack.c.b16 %v1314, %v1302
        %v1999 = vpack.c.b16 %v1315, %v1303
        %v2000 = vpack.c.b16 %v1316, %v1304
        %v2001 = vpack.c.b16 %v1317, %v1305
        %v2002 = vpack.c.b16 %v1318, %v1306
        %v2003 = vpack.c.b16 %v1319, %v1307
        %v2004 = vpack.c.b16 %v1320, %v1308
        %v2005 = vpack.c.b16 %v1333, %v1321
        %v2006 = vpack.c.b16 %v1334, %v1322
        %v2007 = vpack.c.b16 %v1335, %v1323
        %v2008 = vpack.c.b16 %v1336, %v1324
        %v2009 = vpack.c.b16 %v1337, %v1325
        %v2010 = vpack.c.b16 %v1338, %v1326
        %v2011 = vpack.c.b16 %v1339, %v1327
        %v2012 = vpack.c.b16 %v1340, %v1328
        %v2013 = vpack.c.b16 %v1341, %v1329
        %v2014 = vpack.c.b16 %v1342, %v1330
        %v2015 = vpack.c.b16 %v1343, %v1331
        %v2016 = vpack.c.b16 %v1344, %v1332
        %v2017 = vpack.c.b16 %v1357, %v1345
        %v2018 = vpack.c.b16 %v1358, %v1346
        %v2019 = vpack.c.b16 %v1359, %v1347
        %v2020 = vpack.c.b16 %v1360, %v1348
        %v2021 = vpack.c.b16 %v1361, %v1349
        %v2022 = vpack.c.b16 %v1362, %v1350
        %v2023 = vpack.c.b16 %v1363, %v1351
        %v2024 = vpack.c.b16 %v1364, %v1352
        %v2025 = vpack.c.b16 %v1365, %v1353
        %v2026 = vpack.c.b16 %v1366, %v1354
        %v2027 = vpack.c.b16 %v1367, %v1355
        %v2028 = vpack.c.b16 %v1368, %v1356
        %v2029 = vpack.c.b16 %v1381, %v1369
        %v2030 = vpack.c.b16 %v1382, %v1370
        %v2031 = vpack.c.b16 %v1383, %v1371
        %v2032 = vpack.c.b16 %v1384, %v1372
        %v2033 = vpack.c.b16 %v1385, %v1373
        %v2034 = vpack.c.b16 %v1386, %v1374
        %v2035 = vpack.c.b16 %v1387, %v1375
        %v2036 = vpack.c.b16 %v1388, %v1376
        %v2037 = vpack.c.b16 %v1389, %v1377
        %v2038 = vpack.c.b16 %v1390, %v1378
        %v2039 = vpack.c.b16 %v1391, %v1379
        %v2040 = vpack.c.b16 %v1392, %v1380
        %v2041 = vpack.c.b16 %v1405, %v1393
        %v2042 = vpack.c.b16 %v1406, %v1394
        %v2043 = vpack.c.b16 %v1407, %v1395
        %v2044 = vpack.c.b16 %v1408, %v1396
        %v2045 = vpack.c.b16 %v1409, %v1397
        %v2046 = vpack.c.b16 %v1410, %v1398
        %v2047 = vpack.c.b16 %v1411, %v1399
        %v2048 = vpack.c.b16 %v1412, %v1400
        %v2049 = vpack.c.b16 %v1413, %v1401
        %v2050 = vpack.c.b16 %v1414, %v1402
        %v2051 = vpack.c.b16 %v1415, %v1403
        %v2052 = vpack.c.b16 %v1416, %v1404
        %v2053 = vpack.c.b16 %v1429, %v1417
        %v2054 = vpack.c.b16 %v1430, %v1418
        %v2055 = vpack.c.b16 %v1431, %v1419
        %v2056 = vpack.c.b16 %v1432, %v1420
        %v2057 = vpack.c.b16 %v1433, %v1421
        %v2058 = vpack.c.b16 %v1434, %v1422
        %v2059 = vpack.c.b16 %v1435, %v1423
        %v2060 = vpack.c.b16 %v1436, %v1424
        %v2061 = vpack.c.b16 %v1437, %v1425
        %v2062 = vpack.c.b16 %v1438, %v1426
        %v2063 = vpack.c.b16 %v1439, %v1427
        %v2064 = vpack.c.b16 %v1440, %v1428
        %v2065 = vpack.c.b16 %v1453, %v1441
        %v2066 = vpack.c.b16 %v1454, %v1442
        %v2067 = vpack.c.b16 %v1455, %v1443
        %v2068 = vpack.c.b16 %v1456, %v1444
        %v2069 = vpack.c.b16 %v1457, %v1445
        %v2070 = vpack.c.b16 %v1458, %v1446
        %v2071 = vpack.c.b16 %v1459, %v1447
        %v2072 = vpack.c.b16 %v1460, %v1448
        %v2073 = vpack.c.b16 %v1461, %v1449
        %v2074 = vpack.c.b16 %v1462, %v1450
        %v2075 = vpack.c.b16 %v1463, %v1451
        %v2076 = vpack.c.b16 %v1464, %v1452
        %v2077 = vpack.c.b16 %v1477, %v1465
        %v2078 = vpack.c.b16 %v1478, %v1466
        %v2079 = vpack.c.b16 %v1479, %v1467
        %v2080 = vpack.c.b16 %v1480, %v1468
        %v2081 = vpack.c.b16 %v1481, %v1469
        %v2082 = vpack.c.b16 %v1482, %v1470
        %v2083 = vpack.c.b16 %v1483, %v1471
        %v2084 = vpack.c.b16 %v1484, %v1472
        %v2085 = vpack.c.b16 %v1485, %v1473
        %v2086 = vpack.c.b16 %v1486, %v1474
        %v2087 = vpack.c.b16 %v1487, %v1475
        %v2088 = vpack.c.b16 %v1488, %v1476
        %v2089 = vpack.c.b16 %v1501, %v1489
        %v2090 = vpack.c.b16 %v1502, %v1490
        %v2091 = vpack.c.b16 %v1503, %v1491
        %v2092 = vpack.c.b16 %v1504, %v1492
        %v2093 = vpack.c.b16 %v1505, %v1493
        %v2094 = vpack.c.b16 %v1506, %v1494
        %v2095 = vpack.c.b16 %v1507, %v1495
        %v2096 = vpack.c.b16 %v1508, %v1496
        %v2097 = vpack.c.b16 %v1509, %v1497
        %v2098 = vpack.c.b16 %v1510, %v1498
        %v2099 = vpack.c.b16 %v1511, %v1499
        %v2100 = vpack.c.b16 %v1512, %v1500
        %v2101 = vpack.c.b16 %v1525, %v1513
        %v2102 = vpack.c.b16 %v1526, %v1514
        %v2103 = vpack.c.b16 %v1527, %v1515
        %v2104 = vpack.c.b16 %v1528, %v1516
        %v2105 = vpack.c.b16 %v1529, %v1517
        %v2106 = vpack.c.b16 %v1530, %v1518
        %v2107 = vpack.c.b16 %v1531, %v1519
        %v2108 = vpack.c.b16 %v1532, %v1520
        %v2109 = vpack.c.b16 %v1533, %v1521
        %v2110 = vpack.c.b16 %v1534, %v1522
        %v2111 = vpack.c.b16 %v1535, %v1523
        %v2112 = vpack.c.b16 %v1536, %v1524
        %v2113 = vpack.c.b16 %v1549, %v1537
        %v2114 = vpack.c.b16 %v1550, %v1538
        %v2115 = vpack.c.b16 %v1551, %v1539
        %v2116 = vpack.c.b16 %v1552, %v1540
        %v2117 = vpack.c.b16 %v1553, %v1541
        %v2118 = vpack.c.b16 %v1554, %v1542
        %v2119 = vpack.c.b16 %v1555, %v1543
        %v2120 = vpack.c.b16 %v1556, %v1544
        %v2121 = vpack.c.b16 %v1557, %v1545
        %v2122 = vpack.c.b16 %v1558, %v1546
        %v2123 = vpack.c.b16 %v1559, %v1547
        %v2124 = vpack.c.b16 %v1560, %v1548
        %v2125 = vpack.c.b16 %v1573, %v1561
        %v2126 = vpack.c.b16 %v1574, %v1562
        %v2127 = vpack.c.b16 %v1575, %v1563
        %v2128 = vpack.c.b16 %v1576, %v1564
        %v2129 = vpack.c.b16 %v1577, %v1565
        %v2130 = vpack.c.b16 %v1578, %v1566
        %v2131 = vpack.c.b16 %v1579, %v1567
        %v2132 = vpack.c.b16 %v1580, %v1568
        %v2133 = vpack.c.b16 %v1581, %v1569
        %v2134 = vpack.c.b16 %v1582, %v1570
        %v2135 = vpack.c.b16 %v1583, %v1571
        %v2136 = vpack.c.b16 %v1584, %v1572
        %v2137 = vpack.c.b16 %v1597, %v1585
        %v2138 = vpack.c.b16 %v1598, %v1586
        %v2139 = vpack.c.b16 %v1599, %v1587
        %v2140 = vpack.c.b16 %v1600, %v1588
        %v2141 = vpack.c.b16 %v1601, %v1589
        %v2142 = vpack.c.b16 %v1602, %v1590
        %v2143 = vpack.c.b16 %v1603, %v1591
        %v2144 = vpack.c.b16 %v1604, %v1592
        %v2145 = vpack.c.b16 %v1605, %v1593
        %v2146 = vpack.c.b16 %v1606, %v1594
        %v2147 = vpack.c.b16 %v1607, %v1595
        %v2148 = vpack.c.b16 %v1608, %v1596
        %v2149 = vpack.c.b16 %v1621, %v1609
        %v2150 = vpack.c.b16 %v1622, %v1610
        %v2151 = vpack.c.b16 %v1623, %v1611
        %v2152 = vpack.c.b16 %v1624, %v1612
        %v2153 = vpack.c.b16 %v1625, %v1613
        %v2154 = vpack.c.b16 %v1626, %v1614
        %v2155 = vpack.c.b16 %v1627, %v1615
        %v2156 = vpack.c.b16 %v1628, %v1616
        %v2157 = vpack.c.b16 %v1629, %v1617
        %v2158 = vpack.c.b16 %v1630, %v1618
        %v2159 = vpack.c.b16 %v1631, %v1619
        %v2160 = vpack.c.b16 %v1632, %v1620
        %v2161 = vpack.c.b16 %v1645, %v1633
        %v2162 = vpack.c.b16 %v1646, %v1634
        %v2163 = vpack.c.b16 %v1647, %v1635
        %v2164 = vpack.c.b16 %v1648, %v1636
        %v2165 = vpack.c.b16 %v1649, %v1637
        %v2166 = vpack.c.b16 %v1650, %v1638
        %v2167 = vpack.c.b16 %v1651, %v1639
        %v2168 = vpack.c.b16 %v1652, %v1640
        %v2169 = vpack.c.b16 %v1653, %v1641
        %v2170 = vpack.c.b16 %v1654, %v1642
        %v2171 = vpack.c.b16 %v1655, %v1643
        %v2172 = vpack.c.b16 %v1656, %v1644
        %v2173 = vpack.c.b16 %v1669, %v1657
        %v2174 = vpack.c.b16 %v1670, %v1658
        %v2175 = vpack.c.b16 %v1671, %v1659
        %v2176 = vpack.c.b16 %v1672, %v1660
        %v2177 = vpack.c.b16 %v1673, %v1661
        %v2178 = vpack.c.b16 %v1674, %v1662
        %v2179 = vpack.c.b16 %v1675, %v1663
        %v2180 = vpack.c.b16 %v1676, %v1664
        %v2181 = vpack.c.b16 %v1677, %v1665
        %v2182 = vpack.c.b16 %v1678, %v1666
        %v2183 = vpack.c.b16 %v1679, %v1667
        %v2184 = vpack.c.b16 %v1680, %v1668
        %v2185 = vpack.c.b16 %v1693, %v1681
        %v2186 = vpack.c.b16 %v1694, %v1682
        %v2187 = vpack.c.b16 %v1695, %v1683
        %v2188 = vpack.c.b16 %v1696, %v1684
        %v2189 = vpack.c.b16 %v1697, %v1685
        %v2190 = vpack.c.b16 %v1698, %v1686
        %v2191 = vpack.c.b16 %v1699, %v1687
        %v2192 = vpack.c.b16 %v1700, %v1688
        %v2193 = vpack.c.b16 %v1701, %v1689
        %v2194 = vpack.c.b16 %v1702, %v1690
        %v2195 = vpack.c.b16 %v1703, %v1691
        %v2196 = vpack.c.b16 %v1704, %v1692
        %v2197 = vpack.c.b16 %v1717, %v1705
        %v2198 = vpack.c.b16 %v1718, %v1706
        %v2199 = vpack.c.b16 %v1719, %v1707
        %v2200 = vpack.c.b16 %v1720, %v1708
        %v2201 = vpack.c.b16 %v1721, %v1709
        %v2202 = vpack.c.b16 %v1722, %v1710
        %v2203 = vpack.c.b16 %v1723, %v1711
        %v2204 = vpack.c.b16 %v1724, %v1712
        %v2205 = vpack.c.b16 %v1725, %v1713
        %v2206 = vpack.c.b16 %v1726, %v1714
        %v2207 = vpack.c.b16 %v1727, %v1715
        %v2208 = vpack.c.b16 %v1728, %v1716
        %v2209 = vpack.c.b16 %v1741, %v1729
        %v2210 = vpack.c.b16 %v1742, %v1730
        %v2211 = vpack.c.b16 %v1743, %v1731
        %v2212 = vpack.c.b16 %v1744, %v1732
        %v2213 = vpack.c.b16 %v1745, %v1733
        %v2214 = vpack.c.b16 %v1746, %v1734
        %v2215 = vpack.c.b16 %v1747, %v1735
        %v2216 = vpack.c.b16 %v1748, %v1736
        %v2217 = vpack.c.b16 %v1749, %v1737
        %v2218 = vpack.c.b16 %v1750, %v1738
        %v2219 = vpack.c.b16 %v1751, %v1739
        %v2220 = vpack.c.b16 %v1752, %v1740
        %v2221 = vpack.c.b16 %v1765, %v1753
        %v2222 = vpack.c.b16 %v1766, %v1754
        %v2223 = vpack.c.b16 %v1767, %v1755
        %v2224 = vpack.c.b16 %v1768, %v1756
        %v2225 = vpack.c.b16 %v1769, %v1757
        %v2226 = vpack.c.b16 %v1770, %v1758
        %v2227 = vpack.c.b16 %v1771, %v1759
        %v2228 = vpack.c.b16 %v1772, %v1760
        %v2229 = vpack.c.b16 %v1773, %v1761
        %v2230 = vpack.c.b16 %v1774, %v1762
        %v2231 = vpack.c.b16 %v1775, %v1763
        %v2232 = vpack.c.b16 %v1776, %v1764
        %v2233 = vpack.c.b16 %v1789, %v1777
        %v2234 = vpack.c.b16 %v1790, %v1778
        %v2235 = vpack.c.b16 %v1791, %v1779
        %v2236 = vpack.c.b16 %v1792, %v1780
        %v2237 = vpack.c.b16 %v1793, %v1781
        %v2238 = vpack.c.b16 %v1794, %v1782
        %v2239 = vpack.c.b16 %v1795, %v1783
        %v2240 = vpack.c.b16 %v1796, %v1784
        %v2241 = vpack.c.b16 %v1797, %v1785
        %v2242 = vpack.c.b16 %v1798, %v1786
        %v2243 = vpack.c.b16 %v1799, %v1787
        %v2244 = vpack.c.b16 %v1800, %v1788
        %v2245 = vpack.c.b16 %v1813, %v1801
        %v2246 = vpack.c.b16 %v1814, %v1802
        %v2247 = vpack.c.b16 %v1815, %v1803
        %v2248 = vpack.c.b16 %v1816, %v1804
        %v2249 = vpack.c.b16 %v1817, %v1805
        %v2250 = vpack.c.b16 %v1818, %v1806
        %v2251 = vpack.c.b16 %v1819, %v1807
        %v2252 = vpack.c.b16 %v1820, %v1808
        %v2253 = vpack.c.b16 %v1821, %v1809
        %v2254 = vpack.c.b16 %v1822, %v1810
        %v2255 = vpack.c.b16 %v1823, %v1811
        %v2256 = vpack.c.b16 %v1824, %v1812
        %v2257 = vpack.c.b16 %v1837, %v1825
        %v2258 = vpack.c.b16 %v1838, %v1826
        %v2259 = vpack.c.b16 %v1839, %v1827
        %v2260 = vpack.c.b16 %v1840, %v1828
        %v2261 = vpack.c.b16 %v1841, %v1829
        %v2262 = vpack.c.b16 %v1842, %v1830
        %v2263 = vpack.c.b16 %v1843, %v1831
        %v2264 = vpack.c.b16 %v1844, %v1832
        %v2265 = vpack.c.b16 %v1845, %v1833
        %v2266 = vpack.c.b16 %v1846, %v1834
        %v2267 = vpack.c.b16 %v1847, %v1835
        %v2268 = vpack.c.b16 %v1848, %v1836
        %v2269 = vpack.c.b16 %v1861, %v1849
        %v2270 = vpack.c.b16 %v1862, %v1850
        %v2271 = vpack.c.b16 %v1863, %v1851
        %v2272 = vpack.c.b16 %v1864, %v1852
        %v2273 = vpack.c.b16 %v1865, %v1853
        %v2274 = vpack.c.b16 %v1866, %v1854
        %v2275 = vpack.c.b16 %v1867, %v1855
        %v2276 = vpack.c.b16 %v1868, %v1856
        %v2277 = vpack.c.b16 %v1869, %v1857
        %v2278 = vpack.c.b16 %v1870, %v1858
        %v2279 = vpack.c.b16 %v1871, %v1859
        %v2280 = vpack.c.b16 %v1872, %v1860
        %v2281 = vpack.c.b16 %v1885, %v1873
        %v2282 = vpack.c.b16 %v1886, %v1874
        %v2283 = vpack.c.b16 %v1887, %v1875
        %v2284 = vpack.c.b16 %v1888, %v1876
        %v2285 = vpack.c.b16 %v1889, %v1877
        %v2286 = vpack.c.b16 %v1890, %v1878
        %v2287 = vpack.c.b16 %v1891, %v1879
        %v2288 = vpack.c.b16 %v1892, %v1880
        %v2289 = vpack.c.b16 %v1893, %v1881
        %v2290 = vpack.c.b16 %v1894, %v1882
        %v2291 = vpack.c.b16 %v1895, %v1883
        %v2292 = vpack.c.b16 %v1896, %v1884
        %v2293 = vpack.c.b16 %v1909, %v1897
        %v2294 = vpack.c.b16 %v1910, %v1898
        %v2295 = vpack.c.b16 %v1911, %v1899
        %v2296 = vpack.c.b16 %v1912, %v1900
        %v2297 = vpack.c.b16 %v1913, %v1901
        %v2298 = vpack.c.b16 %v1914, %v1902
        %v2299 = vpack.c.b16 %v1915, %v1903
        %v2300 = vpack.c.b16 %v1916, %v1904
        %v2301 = vpack.c.b16 %v1917, %v1905
        %v2302 = vpack.c.b16 %v1918, %v1906
        %v2303 = vpack.c.b16 %v1919, %v1907
        %v2304 = vpack.c.b16 %v1920, %v1908
        %2689 = vmatprep.subr.bf16.mxu0 %v2006
        %2690 = vmatpush1.bf16.msra.mxu0 %v2005
        %2691 = vmatprep.subr.bf16.mxu0 %v1994
        %2692 = vmatpush1.bf16.msra.mxu0 %v1993
        %2693 = vmatprep.subr.bf16.mxu0 %v1982
        %2694 = vmatpush1.bf16.msra.mxu0 %v1981
        %2695 = vmatprep.subr.bf16.mxu0 %v1970
        %2696 = vmatpush1.bf16.msra.mxu0 %v1969
        %2697 = vmatprep.subr.bf16.mxu0 %v1958
        %2698 = vmatpush1.bf16.msra.mxu0 %v1957
        %2699 = vmatprep.subr.bf16.mxu0 %v1946
        %2700 = vmatpush1.bf16.msra.mxu0 %v1945
        %2701 = vmatprep.subr.bf16.mxu0 %v1934
        %2702 = vmatpush1.bf16.msra.mxu0 %v1933
        %2703 = vmatprep.subr.bf16.mxu0 %v1922
        %2704 = vmatpush1.bf16.msra.mxu0 %v1921
        %2705 = vmatprep.subr.bf16.mxu0 %v2102
        %2706 = vmatpush2.bf16.msra.mxu0 %v2101
        %2707 = vmatprep.subr.bf16.mxu0 %v2090
        %2708 = vmatpush2.bf16.msra.mxu0 %v2089
        %2709 = vmatprep.subr.bf16.mxu0 %v2078
        %2710 = vmatpush2.bf16.msra.mxu0 %v2077
        %2711 = vmatprep.subr.bf16.mxu0 %v2066
        %2712 = vmatpush2.bf16.msra.mxu0 %v2065
        %2713 = vmatprep.subr.bf16.mxu0 %v2054
        %2714 = vmatpush2.bf16.msra.mxu0 %v2053
        %2715 = vmatprep.subr.bf16.mxu0 %v2042
        %2716 = vmatpush2.bf16.msra.mxu0 %v2041
        %2717 = vmatprep.subr.bf16.mxu0 %v2030
        %2718 = vmatpush2.bf16.msra.mxu0 %v2029
        %2719 = vmatprep.subr.bf16.mxu0 %v2018
        %2720 = vmatpush2.bf16.msra.mxu0 %v2017
        %2721 = vmatprep.mubr.bf16.mxu0 %v738
        %2722 = vmatmul.mubr.bf16.gmra.mxu0 %v737
        %v2723 = vpop.f32.mrf.mxu0
        %v2724 = vadd.f32 0.0, %v2723
        %v2725 = vpop.f32.mrf.mxu0
        %v2726 = vadd.f32 0.0, %v2725
        %v2727 = vpop.f32.mrf.mxu0
        %v2728 = vadd.f32 0.0, %v2727
        %v2729 = vpop.f32.mrf.mxu0
        %v2730 = vadd.f32 0.0, %v2729
        %2731 = vmatprep.mubr.bf16.mxu0 %v742
        %2732 = vmatmul.mubr.bf16.gmra.mxu0 %v741
        %v2733 = vpop.f32.mrf.mxu0
        %v2734 = vadd.f32 0.0, %v2733
        %v2735 = vpop.f32.mrf.mxu0
        %v2736 = vadd.f32 0.0, %v2735
        %v2737 = vpop.f32.mrf.mxu0
        %v2738 = vadd.f32 0.0, %v2737
        %v2739 = vpop.f32.mrf.mxu0
        %v2740 = vadd.f32 0.0, %v2739
        %2741 = vmatprep.mubr.bf16.mxu0 %v746
        %2742 = vmatmul.mubr.bf16.gmra.mxu0 %v745
        %v2743 = vpop.f32.mrf.mxu0
        %v2744 = vadd.f32 0.0, %v2743
        %v2745 = vpop.f32.mrf.mxu0
        %v2746 = vadd.f32 0.0, %v2745
        %v2747 = vpop.f32.mrf.mxu0
        %v2748 = vadd.f32 0.0, %v2747
        %v2749 = vpop.f32.mrf.mxu0
        %v2750 = vadd.f32 0.0, %v2749
        %2751 = vmatprep.mubr.bf16.mxu0 %v750
        %2752 = vmatmul.mubr.bf16.gmra.mxu0 %v749
        %v2753 = vpop.f32.mrf.mxu0
        %v2754 = vadd.f32 0.0, %v2753
        %v2755 = vpop.f32.mrf.mxu0
        %v2756 = vadd.f32 0.0, %v2755
        %v2757 = vpop.f32.mrf.mxu0
        %v2758 = vadd.f32 0.0, %v2757
        %v2759 = vpop.f32.mrf.mxu0
        %v2760 = vadd.f32 0.0, %v2759
        %2761 = vdwg.mxu0
        %2762 = vmatprep.subr.bf16.mxu0 %v2198
        %2763 = vmatpush1.bf16.msra.mxu0 %v2197
        %2764 = vmatprep.subr.bf16.mxu0 %v2186
        %2765 = vmatpush1.bf16.msra.mxu0 %v2185
        %2766 = vmatprep.subr.bf16.mxu0 %v2174
        %2767 = vmatpush1.bf16.msra.mxu0 %v2173
        %2768 = vmatprep.subr.bf16.mxu0 %v2162
        %2769 = vmatpush1.bf16.msra.mxu0 %v2161
        %2770 = vmatprep.subr.bf16.mxu0 %v2150
        %2771 = vmatpush1.bf16.msra.mxu0 %v2149
        %2772 = vmatprep.subr.bf16.mxu0 %v2138
        %2773 = vmatpush1.bf16.msra.mxu0 %v2137
        %2774 = vmatprep.subr.bf16.mxu0 %v2126
        %2775 = vmatpush1.bf16.msra.mxu0 %v2125
        %2776 = vmatprep.subr.bf16.mxu0 %v2114
        %2777 = vmatpush1.bf16.msra.mxu0 %v2113
        %2778 = vmatprep.subr.bf16.mxu0 %v2294
        %2779 = vmatpush2.bf16.msra.mxu0 %v2293
        %2780 = vmatprep.subr.bf16.mxu0 %v2282
        %2781 = vmatpush2.bf16.msra.mxu0 %v2281
        %2782 = vmatprep.subr.bf16.mxu0 %v2270
        %2783 = vmatpush2.bf16.msra.mxu0 %v2269
        %2784 = vmatprep.subr.bf16.mxu0 %v2258
        %2785 = vmatpush2.bf16.msra.mxu0 %v2257
        %2786 = vmatprep.subr.bf16.mxu0 %v2246
        %2787 = vmatpush2.bf16.msra.mxu0 %v2245
        %2788 = vmatprep.subr.bf16.mxu0 %v2234
        %2789 = vmatpush2.bf16.msra.mxu0 %v2233
        %2790 = vmatprep.subr.bf16.mxu0 %v2222
        %2791 = vmatpush2.bf16.msra.mxu0 %v2221
        %2792 = vmatprep.subr.bf16.mxu0 %v2210
        %2793 = vmatpush2.bf16.msra.mxu0 %v2209
        %2794 = vmatprep.mubr.bf16.mxu0 %v740
        %2795 = vmatmul.mubr.bf16.gmra.mxu0 %v739
        %v2796 = vpop.f32.mrf.mxu0
        %v2797 = vadd.f32 %v2724, %v2796
        %v2798 = vpop.f32.mrf.mxu0
        %v2799 = vadd.f32 %v2726, %v2798
        %v2800 = vpop.f32.mrf.mxu0
        %v2801 = vadd.f32 %v2728, %v2800
        %v2802 = vpop.f32.mrf.mxu0
        %v2803 = vadd.f32 %v2730, %v2802
        %2804 = vmatprep.mubr.bf16.mxu0 %v744
        %2805 = vmatmul.mubr.bf16.gmra.mxu0 %v743
        %v2806 = vpop.f32.mrf.mxu0
        %v2807 = vadd.f32 %v2734, %v2806
        %v2808 = vpop.f32.mrf.mxu0
        %v2809 = vadd.f32 %v2736, %v2808
        %v2810 = vpop.f32.mrf.mxu0
        %v2811 = vadd.f32 %v2738, %v2810
        %v2812 = vpop.f32.mrf.mxu0
        %v2813 = vadd.f32 %v2740, %v2812
        %2814 = vmatprep.mubr.bf16.mxu0 %v748
        %2815 = vmatmul.mubr.bf16.gmra.mxu0 %v747
        %v2816 = vpop.f32.mrf.mxu0
        %v2817 = vadd.f32 %v2744, %v2816
        %v2818 = vpop.f32.mrf.mxu0
        %v2819 = vadd.f32 %v2746, %v2818
        %v2820 = vpop.f32.mrf.mxu0
        %v2821 = vadd.f32 %v2748, %v2820
        %v2822 = vpop.f32.mrf.mxu0
        %v2823 = vadd.f32 %v2750, %v2822
        %2824 = vmatprep.mubr.bf16.mxu0 %v752
        %2825 = vmatmul.mubr.bf16.gmra.mxu0 %v751
        %v2826 = vpop.f32.mrf.mxu0
        %v2827 = vadd.f32 %v2754, %v2826
        %v2828 = vpop.f32.mrf.mxu0
        %v2829 = vadd.f32 %v2756, %v2828
        %v2830 = vpop.f32.mrf.mxu0
        %v2831 = vadd.f32 %v2758, %v2830
        %v2832 = vpop.f32.mrf.mxu0
        %v2833 = vadd.f32 %v2760, %v2832
        %2834 = vdwg.mxu0
        %2835 = vmatprep.subr.bf16.mxu0 %v2008
        %2836 = vmatpush1.bf16.msra.mxu0 %v2007
        %2837 = vmatprep.subr.bf16.mxu0 %v1996
        %2838 = vmatpush1.bf16.msra.mxu0 %v1995
        %2839 = vmatprep.subr.bf16.mxu0 %v1984
        %2840 = vmatpush1.bf16.msra.mxu0 %v1983
        %2841 = vmatprep.subr.bf16.mxu0 %v1972
        %2842 = vmatpush1.bf16.msra.mxu0 %v1971
        %2843 = vmatprep.subr.bf16.mxu0 %v1960
        %2844 = vmatpush1.bf16.msra.mxu0 %v1959
        %2845 = vmatprep.subr.bf16.mxu0 %v1948
        %2846 = vmatpush1.bf16.msra.mxu0 %v1947
        %2847 = vmatprep.subr.bf16.mxu0 %v1936
        %2848 = vmatpush1.bf16.msra.mxu0 %v1935
        %2849 = vmatprep.subr.bf16.mxu0 %v1924
        %2850 = vmatpush1.bf16.msra.mxu0 %v1923
        %2851 = vmatprep.subr.bf16.mxu0 %v2104
        %2852 = vmatpush2.bf16.msra.mxu0 %v2103
        %2853 = vmatprep.subr.bf16.mxu0 %v2092
        %2854 = vmatpush2.bf16.msra.mxu0 %v2091
        %2855 = vmatprep.subr.bf16.mxu0 %v2080
        %2856 = vmatpush2.bf16.msra.mxu0 %v2079
        %2857 = vmatprep.subr.bf16.mxu0 %v2068
        %2858 = vmatpush2.bf16.msra.mxu0 %v2067
        %2859 = vmatprep.subr.bf16.mxu0 %v2056
        %2860 = vmatpush2.bf16.msra.mxu0 %v2055
        %2861 = vmatprep.subr.bf16.mxu0 %v2044
        %2862 = vmatpush2.bf16.msra.mxu0 %v2043
        %2863 = vmatprep.subr.bf16.mxu0 %v2032
        %2864 = vmatpush2.bf16.msra.mxu0 %v2031
        %2865 = vmatprep.subr.bf16.mxu0 %v2020
        %2866 = vmatpush2.bf16.msra.mxu0 %v2019
        %2867 = vmatprep.mubr.bf16.mxu0 %v738
        %2868 = vmatmul.mubr.bf16.gmra.mxu0 %v737
        %v2869 = vpop.f32.mrf.mxu0
        %v2870 = vadd.f32 0.0, %v2869
        %v2871 = vpop.f32.mrf.mxu0
        %v2872 = vadd.f32 0.0, %v2871
        %v2873 = vpop.f32.mrf.mxu0
        %v2874 = vadd.f32 0.0, %v2873
        %v2875 = vpop.f32.mrf.mxu0
        %v2876 = vadd.f32 0.0, %v2875
        %2877 = vmatprep.mubr.bf16.mxu0 %v742
        %2878 = vmatmul.mubr.bf16.gmra.mxu0 %v741
        %v2879 = vpop.f32.mrf.mxu0
        %v2880 = vadd.f32 0.0, %v2879
        %v2881 = vpop.f32.mrf.mxu0
        %v2882 = vadd.f32 0.0, %v2881
        %v2883 = vpop.f32.mrf.mxu0
        %v2884 = vadd.f32 0.0, %v2883
        %v2885 = vpop.f32.mrf.mxu0
        %v2886 = vadd.f32 0.0, %v2885
        %2887 = vmatprep.mubr.bf16.mxu0 %v746
        %2888 = vmatmul.mubr.bf16.gmra.mxu0 %v745
        %v2889 = vpop.f32.mrf.mxu0
        %v2890 = vadd.f32 0.0, %v2889
        %v2891 = vpop.f32.mrf.mxu0
        %v2892 = vadd.f32 0.0, %v2891
        %v2893 = vpop.f32.mrf.mxu0
        %v2894 = vadd.f32 0.0, %v2893
        %v2895 = vpop.f32.mrf.mxu0
        %v2896 = vadd.f32 0.0, %v2895
        %2897 = vmatprep.mubr.bf16.mxu0 %v750
        %2898 = vmatmul.mubr.bf16.gmra.mxu0 %v749
        %v2899 = vpop.f32.mrf.mxu0
        %v2900 = vadd.f32 0.0, %v2899
        %v2901 = vpop.f32.mrf.mxu0
        %v2902 = vadd.f32 0.0, %v2901
        %v2903 = vpop.f32.mrf.mxu0
        %v2904 = vadd.f32 0.0, %v2903
        %v2905 = vpop.f32.mrf.mxu0
        %v2906 = vadd.f32 0.0, %v2905
        %2907 = vdwg.mxu0
        %2908 = vmatprep.subr.bf16.mxu0 %v2200
        %2909 = vmatpush1.bf16.msra.mxu0 %v2199
        %2910 = vmatprep.subr.bf16.mxu0 %v2188
        %2911 = vmatpush1.bf16.msra.mxu0 %v2187
        %2912 = vmatprep.subr.bf16.mxu0 %v2176
        %2913 = vmatpush1.bf16.msra.mxu0 %v2175
        %2914 = vmatprep.subr.bf16.mxu0 %v2164
        %2915 = vmatpush1.bf16.msra.mxu0 %v2163
        %2916 = vmatprep.subr.bf16.mxu0 %v2152
        %2917 = vmatpush1.bf16.msra.mxu0 %v2151
        %2918 = vmatprep.subr.bf16.mxu0 %v2140
        %2919 = vmatpush1.bf16.msra.mxu0 %v2139
        %2920 = vmatprep.subr.bf16.mxu0 %v2128
        %2921 = vmatpush1.bf16.msra.mxu0 %v2127
        %2922 = vmatprep.subr.bf16.mxu0 %v2116
        %2923 = vmatpush1.bf16.msra.mxu0 %v2115
        %2924 = vmatprep.subr.bf16.mxu0 %v2296
        %2925 = vmatpush2.bf16.msra.mxu0 %v2295
        %2926 = vmatprep.subr.bf16.mxu0 %v2284
        %2927 = vmatpush2.bf16.msra.mxu0 %v2283
        %2928 = vmatprep.subr.bf16.mxu0 %v2272
        %2929 = vmatpush2.bf16.msra.mxu0 %v2271
        %2930 = vmatprep.subr.bf16.mxu0 %v2260
        %2931 = vmatpush2.bf16.msra.mxu0 %v2259
        %2932 = vmatprep.subr.bf16.mxu0 %v2248
        %2933 = vmatpush2.bf16.msra.mxu0 %v2247
        %2934 = vmatprep.subr.bf16.mxu0 %v2236
        %2935 = vmatpush2.bf16.msra.mxu0 %v2235
        %2936 = vmatprep.subr.bf16.mxu0 %v2224
        %2937 = vmatpush2.bf16.msra.mxu0 %v2223
        %2938 = vmatprep.subr.bf16.mxu0 %v2212
        %2939 = vmatpush2.bf16.msra.mxu0 %v2211
        %2940 = vmatprep.mubr.bf16.mxu0 %v740
        %2941 = vmatmul.mubr.bf16.gmra.mxu0 %v739
        %v2942 = vpop.f32.mrf.mxu0
        %v2943 = vadd.f32 %v2870, %v2942
        %v2944 = vpop.f32.mrf.mxu0
        %v2945 = vadd.f32 %v2872, %v2944
        %v2946 = vpop.f32.mrf.mxu0
        %v2947 = vadd.f32 %v2874, %v2946
        %v2948 = vpop.f32.mrf.mxu0
        %v2949 = vadd.f32 %v2876, %v2948
        %2950 = vmatprep.mubr.bf16.mxu0 %v744
        %2951 = vmatmul.mubr.bf16.gmra.mxu0 %v743
        %v2952 = vpop.f32.mrf.mxu0
        %v2953 = vadd.f32 %v2880, %v2952
        %v2954 = vpop.f32.mrf.mxu0
        %v2955 = vadd.f32 %v2882, %v2954
        %v2956 = vpop.f32.mrf.mxu0
        %v2957 = vadd.f32 %v2884, %v2956
        %v2958 = vpop.f32.mrf.mxu0
        %v2959 = vadd.f32 %v2886, %v2958
        %2960 = vmatprep.mubr.bf16.mxu0 %v748
        %2961 = vmatmul.mubr.bf16.gmra.mxu0 %v747
        %v2962 = vpop.f32.mrf.mxu0
        %v2963 = vadd.f32 %v2890, %v2962
        %v2964 = vpop.f32.mrf.mxu0
        %v2965 = vadd.f32 %v2892, %v2964
        %v2966 = vpop.f32.mrf.mxu0
        %v2967 = vadd.f32 %v2894, %v2966
        %v2968 = vpop.f32.mrf.mxu0
        %v2969 = vadd.f32 %v2896, %v2968
        %2970 = vmatprep.mubr.bf16.mxu0 %v752
        %2971 = vmatmul.mubr.bf16.gmra.mxu0 %v751
        %v2972 = vpop.f32.mrf.mxu0
        %v2973 = vadd.f32 %v2900, %v2972
        %v2974 = vpop.f32.mrf.mxu0
        %v2975 = vadd.f32 %v2902, %v2974
        %v2976 = vpop.f32.mrf.mxu0
        %v2977 = vadd.f32 %v2904, %v2976
        %v2978 = vpop.f32.mrf.mxu0
        %v2979 = vadd.f32 %v2906, %v2978
        %2980 = vdwg.mxu0
        %2981 = vmatprep.subr.bf16.mxu0 %v2010
        %2982 = vmatpush1.bf16.msra.mxu0 %v2009
        %2983 = vmatprep.subr.bf16.mxu0 %v1998
        %2984 = vmatpush1.bf16.msra.mxu0 %v1997
        %2985 = vmatprep.subr.bf16.mxu0 %v1986
        %2986 = vmatpush1.bf16.msra.mxu0 %v1985
        %2987 = vmatprep.subr.bf16.mxu0 %v1974
        %2988 = vmatpush1.bf16.msra.mxu0 %v1973
        %2989 = vmatprep.subr.bf16.mxu0 %v1962
        %2990 = vmatpush1.bf16.msra.mxu0 %v1961
        %2991 = vmatprep.subr.bf16.mxu0 %v1950
        %2992 = vmatpush1.bf16.msra.mxu0 %v1949
        %2993 = vmatprep.subr.bf16.mxu0 %v1938
        %2994 = vmatpush1.bf16.msra.mxu0 %v1937
        %2995 = vmatprep.subr.bf16.mxu0 %v1926
        %2996 = vmatpush1.bf16.msra.mxu0 %v1925
        %2997 = vmatprep.subr.bf16.mxu0 %v2106
        %2998 = vmatpush2.bf16.msra.mxu0 %v2105
        %2999 = vmatprep.subr.bf16.mxu0 %v2094
        %3000 = vmatpush2.bf16.msra.mxu0 %v2093
        %3001 = vmatprep.subr.bf16.mxu0 %v2082
        %3002 = vmatpush2.bf16.msra.mxu0 %v2081
        %3003 = vmatprep.subr.bf16.mxu0 %v2070
        %3004 = vmatpush2.bf16.msra.mxu0 %v2069
        %3005 = vmatprep.subr.bf16.mxu0 %v2058
        %3006 = vmatpush2.bf16.msra.mxu0 %v2057
        %3007 = vmatprep.subr.bf16.mxu0 %v2046
        %3008 = vmatpush2.bf16.msra.mxu0 %v2045
        %3009 = vmatprep.subr.bf16.mxu0 %v2034
        %3010 = vmatpush2.bf16.msra.mxu0 %v2033
        %3011 = vmatprep.subr.bf16.mxu0 %v2022
        %3012 = vmatpush2.bf16.msra.mxu0 %v2021
        %3013 = vmatprep.mubr.bf16.mxu0 %v738
        %3014 = vmatmul.mubr.bf16.gmra.mxu0 %v737
        %v3015 = vpop.f32.mrf.mxu0
        %v3016 = vadd.f32 0.0, %v3015
        %v3017 = vpop.f32.mrf.mxu0
        %v3018 = vadd.f32 0.0, %v3017
        %v3019 = vpop.f32.mrf.mxu0
        %v3020 = vadd.f32 0.0, %v3019
        %v3021 = vpop.f32.mrf.mxu0
        %v3022 = vadd.f32 0.0, %v3021
        %3023 = vmatprep.mubr.bf16.mxu0 %v742
        %3024 = vmatmul.mubr.bf16.gmra.mxu0 %v741
        %v3025 = vpop.f32.mrf.mxu0
        %v3026 = vadd.f32 0.0, %v3025
        %v3027 = vpop.f32.mrf.mxu0
        %v3028 = vadd.f32 0.0, %v3027
        %v3029 = vpop.f32.mrf.mxu0
        %v3030 = vadd.f32 0.0, %v3029
        %v3031 = vpop.f32.mrf.mxu0
        %v3032 = vadd.f32 0.0, %v3031
        %3033 = vmatprep.mubr.bf16.mxu0 %v746
        %3034 = vmatmul.mubr.bf16.gmra.mxu0 %v745
        %v3035 = vpop.f32.mrf.mxu0
        %v3036 = vadd.f32 0.0, %v3035
        %v3037 = vpop.f32.mrf.mxu0
        %v3038 = vadd.f32 0.0, %v3037
        %v3039 = vpop.f32.mrf.mxu0
        %v3040 = vadd.f32 0.0, %v3039
        %v3041 = vpop.f32.mrf.mxu0
        %v3042 = vadd.f32 0.0, %v3041
        %3043 = vmatprep.mubr.bf16.mxu0 %v750
        %3044 = vmatmul.mubr.bf16.gmra.mxu0 %v749
        %v3045 = vpop.f32.mrf.mxu0
        %v3046 = vadd.f32 0.0, %v3045
        %v3047 = vpop.f32.mrf.mxu0
        %v3048 = vadd.f32 0.0, %v3047
        %v3049 = vpop.f32.mrf.mxu0
        %v3050 = vadd.f32 0.0, %v3049
        %v3051 = vpop.f32.mrf.mxu0
        %v3052 = vadd.f32 0.0, %v3051
        %3053 = vdwg.mxu0
        %3054 = vmatprep.subr.bf16.mxu0 %v2202
        %3055 = vmatpush1.bf16.msra.mxu0 %v2201
        %3056 = vmatprep.subr.bf16.mxu0 %v2190
        %3057 = vmatpush1.bf16.msra.mxu0 %v2189
        %3058 = vmatprep.subr.bf16.mxu0 %v2178
        %3059 = vmatpush1.bf16.msra.mxu0 %v2177
        %3060 = vmatprep.subr.bf16.mxu0 %v2166
        %3061 = vmatpush1.bf16.msra.mxu0 %v2165
        %3062 = vmatprep.subr.bf16.mxu0 %v2154
        %3063 = vmatpush1.bf16.msra.mxu0 %v2153
        %3064 = vmatprep.subr.bf16.mxu0 %v2142
        %3065 = vmatpush1.bf16.msra.mxu0 %v2141
        %3066 = vmatprep.subr.bf16.mxu0 %v2130
        %3067 = vmatpush1.bf16.msra.mxu0 %v2129
        %3068 = vmatprep.subr.bf16.mxu0 %v2118
        %3069 = vmatpush1.bf16.msra.mxu0 %v2117
        %3070 = vmatprep.subr.bf16.mxu0 %v2298
        %3071 = vmatpush2.bf16.msra.mxu0 %v2297
        %3072 = vmatprep.subr.bf16.mxu0 %v2286
        %3073 = vmatpush2.bf16.msra.mxu0 %v2285
        %3074 = vmatprep.subr.bf16.mxu0 %v2274
        %3075 = vmatpush2.bf16.msra.mxu0 %v2273
        %3076 = vmatprep.subr.bf16.mxu0 %v2262
        %3077 = vmatpush2.bf16.msra.mxu0 %v2261
        %3078 = vmatprep.subr.bf16.mxu0 %v2250
        %3079 = vmatpush2.bf16.msra.mxu0 %v2249
        %3080 = vmatprep.subr.bf16.mxu0 %v2238
        %3081 = vmatpush2.bf16.msra.mxu0 %v2237
        %3082 = vmatprep.subr.bf16.mxu0 %v2226
        %3083 = vmatpush2.bf16.msra.mxu0 %v2225
        %3084 = vmatprep.subr.bf16.mxu0 %v2214
        %3085 = vmatpush2.bf16.msra.mxu0 %v2213
        %3086 = vmatprep.mubr.bf16.mxu0 %v740
        %3087 = vmatmul.mubr.bf16.gmra.mxu0 %v739
        %v3088 = vpop.f32.mrf.mxu0
        %v3089 = vadd.f32 %v3016, %v3088
        %v3090 = vpop.f32.mrf.mxu0
        %v3091 = vadd.f32 %v3018, %v3090
        %v3092 = vpop.f32.mrf.mxu0
        %v3093 = vadd.f32 %v3020, %v3092
        %v3094 = vpop.f32.mrf.mxu0
        %v3095 = vadd.f32 %v3022, %v3094
        %3096 = vmatprep.mubr.bf16.mxu0 %v744
        %3097 = vmatmul.mubr.bf16.gmra.mxu0 %v743
        %v3098 = vpop.f32.mrf.mxu0
        %v3099 = vadd.f32 %v3026, %v3098
        %v3100 = vpop.f32.mrf.mxu0
        %v3101 = vadd.f32 %v3028, %v3100
        %v3102 = vpop.f32.mrf.mxu0
        %v3103 = vadd.f32 %v3030, %v3102
        %v3104 = vpop.f32.mrf.mxu0
        %v3105 = vadd.f32 %v3032, %v3104
        %3106 = vmatprep.mubr.bf16.mxu0 %v748
        %3107 = vmatmul.mubr.bf16.gmra.mxu0 %v747
        %v3108 = vpop.f32.mrf.mxu0
        %v3109 = vadd.f32 %v3036, %v3108
        %v3110 = vpop.f32.mrf.mxu0
        %v3111 = vadd.f32 %v3038, %v3110
        %v3112 = vpop.f32.mrf.mxu0
        %v3113 = vadd.f32 %v3040, %v3112
        %v3114 = vpop.f32.mrf.mxu0
        %v3115 = vadd.f32 %v3042, %v3114
        %3116 = vmatprep.mubr.bf16.mxu0 %v752
        %3117 = vmatmul.mubr.bf16.gmra.mxu0 %v751
        %v3118 = vpop.f32.mrf.mxu0
        %v3119 = vadd.f32 %v3046, %v3118
        %v3120 = vpop.f32.mrf.mxu0
        %v3121 = vadd.f32 %v3048, %v3120
        %v3122 = vpop.f32.mrf.mxu0
        %v3123 = vadd.f32 %v3050, %v3122
        %v3124 = vpop.f32.mrf.mxu0
        %v3125 = vadd.f32 %v3052, %v3124
        %3126 = vdwg.mxu0
        %3127 = vmatprep.subr.bf16.mxu0 %v2012
        %3128 = vmatpush1.bf16.msra.mxu0 %v2011
        %3129 = vmatprep.subr.bf16.mxu0 %v2000
        %3130 = vmatpush1.bf16.msra.mxu0 %v1999
        %3131 = vmatprep.subr.bf16.mxu0 %v1988
        %3132 = vmatpush1.bf16.msra.mxu0 %v1987
        %3133 = vmatprep.subr.bf16.mxu0 %v1976
        %3134 = vmatpush1.bf16.msra.mxu0 %v1975
        %3135 = vmatprep.subr.bf16.mxu0 %v1964
        %3136 = vmatpush1.bf16.msra.mxu0 %v1963
        %3137 = vmatprep.subr.bf16.mxu0 %v1952
        %3138 = vmatpush1.bf16.msra.mxu0 %v1951
        %3139 = vmatprep.subr.bf16.mxu0 %v1940
        %3140 = vmatpush1.bf16.msra.mxu0 %v1939
        %3141 = vmatprep.subr.bf16.mxu0 %v1928
        %3142 = vmatpush1.bf16.msra.mxu0 %v1927
        %3143 = vmatprep.subr.bf16.mxu0 %v2108
        %3144 = vmatpush2.bf16.msra.mxu0 %v2107
        %3145 = vmatprep.subr.bf16.mxu0 %v2096
        %3146 = vmatpush2.bf16.msra.mxu0 %v2095
        %3147 = vmatprep.subr.bf16.mxu0 %v2084
        %3148 = vmatpush2.bf16.msra.mxu0 %v2083
        %3149 = vmatprep.subr.bf16.mxu0 %v2072
        %3150 = vmatpush2.bf16.msra.mxu0 %v2071
        %3151 = vmatprep.subr.bf16.mxu0 %v2060
        %3152 = vmatpush2.bf16.msra.mxu0 %v2059
        %3153 = vmatprep.subr.bf16.mxu0 %v2048
        %3154 = vmatpush2.bf16.msra.mxu0 %v2047
        %3155 = vmatprep.subr.bf16.mxu0 %v2036
        %3156 = vmatpush2.bf16.msra.mxu0 %v2035
        %3157 = vmatprep.subr.bf16.mxu0 %v2024
        %3158 = vmatpush2.bf16.msra.mxu0 %v2023
        %3159 = vmatprep.mubr.bf16.mxu0 %v738
        %3160 = vmatmul.mubr.bf16.gmra.mxu0 %v737
        %v3161 = vpop.f32.mrf.mxu0
        %v3162 = vadd.f32 0.0, %v3161
        %v3163 = vpop.f32.mrf.mxu0
        %v3164 = vadd.f32 0.0, %v3163
        %v3165 = vpop.f32.mrf.mxu0
        %v3166 = vadd.f32 0.0, %v3165
        %v3167 = vpop.f32.mrf.mxu0
        %v3168 = vadd.f32 0.0, %v3167
        %3169 = vmatprep.mubr.bf16.mxu0 %v742
        %3170 = vmatmul.mubr.bf16.gmra.mxu0 %v741
        %v3171 = vpop.f32.mrf.mxu0
        %v3172 = vadd.f32 0.0, %v3171
        %v3173 = vpop.f32.mrf.mxu0
        %v3174 = vadd.f32 0.0, %v3173
        %v3175 = vpop.f32.mrf.mxu0
        %v3176 = vadd.f32 0.0, %v3175
        %v3177 = vpop.f32.mrf.mxu0
        %v3178 = vadd.f32 0.0, %v3177
        %3179 = vmatprep.mubr.bf16.mxu0 %v746
        %3180 = vmatmul.mubr.bf16.gmra.mxu0 %v745
        %v3181 = vpop.f32.mrf.mxu0
        %v3182 = vadd.f32 0.0, %v3181
        %v3183 = vpop.f32.mrf.mxu0
        %v3184 = vadd.f32 0.0, %v3183
        %v3185 = vpop.f32.mrf.mxu0
        %v3186 = vadd.f32 0.0, %v3185
        %v3187 = vpop.f32.mrf.mxu0
        %v3188 = vadd.f32 0.0, %v3187
        %3189 = vmatprep.mubr.bf16.mxu0 %v750
        %3190 = vmatmul.mubr.bf16.gmra.mxu0 %v749
        %v3191 = vpop.f32.mrf.mxu0
        %v3192 = vadd.f32 0.0, %v3191
        %v3193 = vpop.f32.mrf.mxu0
        %v3194 = vadd.f32 0.0, %v3193
        %v3195 = vpop.f32.mrf.mxu0
        %v3196 = vadd.f32 0.0, %v3195
        %v3197 = vpop.f32.mrf.mxu0
        %v3198 = vadd.f32 0.0, %v3197
        %3199 = vdwg.mxu0
        %3200 = vmatprep.subr.bf16.mxu0 %v2204
        %3201 = vmatpush1.bf16.msra.mxu0 %v2203
        %3202 = vmatprep.subr.bf16.mxu0 %v2192
        %3203 = vmatpush1.bf16.msra.mxu0 %v2191
        %3204 = vmatprep.subr.bf16.mxu0 %v2180
        %3205 = vmatpush1.bf16.msra.mxu0 %v2179
        %3206 = vmatprep.subr.bf16.mxu0 %v2168
        %3207 = vmatpush1.bf16.msra.mxu0 %v2167
        %3208 = vmatprep.subr.bf16.mxu0 %v2156
        %3209 = vmatpush1.bf16.msra.mxu0 %v2155
        %3210 = vmatprep.subr.bf16.mxu0 %v2144
        %3211 = vmatpush1.bf16.msra.mxu0 %v2143
        %3212 = vmatprep.subr.bf16.mxu0 %v2132
        %3213 = vmatpush1.bf16.msra.mxu0 %v2131
        %3214 = vmatprep.subr.bf16.mxu0 %v2120
        %3215 = vmatpush1.bf16.msra.mxu0 %v2119
        %3216 = vmatprep.subr.bf16.mxu0 %v2300
        %3217 = vmatpush2.bf16.msra.mxu0 %v2299
        %3218 = vmatprep.subr.bf16.mxu0 %v2288
        %3219 = vmatpush2.bf16.msra.mxu0 %v2287
        %3220 = vmatprep.subr.bf16.mxu0 %v2276
        %3221 = vmatpush2.bf16.msra.mxu0 %v2275
        %3222 = vmatprep.subr.bf16.mxu0 %v2264
        %3223 = vmatpush2.bf16.msra.mxu0 %v2263
        %3224 = vmatprep.subr.bf16.mxu0 %v2252
        %3225 = vmatpush2.bf16.msra.mxu0 %v2251
        %3226 = vmatprep.subr.bf16.mxu0 %v2240
        %3227 = vmatpush2.bf16.msra.mxu0 %v2239
        %3228 = vmatprep.subr.bf16.mxu0 %v2228
        %3229 = vmatpush2.bf16.msra.mxu0 %v2227
        %3230 = vmatprep.subr.bf16.mxu0 %v2216
        %3231 = vmatpush2.bf16.msra.mxu0 %v2215
        %3232 = vmatprep.mubr.bf16.mxu0 %v740
        %3233 = vmatmul.mubr.bf16.gmra.mxu0 %v739
        %v3234 = vpop.f32.mrf.mxu0
        %v3235 = vadd.f32 %v3162, %v3234
        %v3236 = vpop.f32.mrf.mxu0
        %v3237 = vadd.f32 %v3164, %v3236
        %v3238 = vpop.f32.mrf.mxu0
        %v3239 = vadd.f32 %v3166, %v3238
        %v3240 = vpop.f32.mrf.mxu0
        %v3241 = vadd.f32 %v3168, %v3240
        %3242 = vmatprep.mubr.bf16.mxu0 %v744
        %3243 = vmatmul.mubr.bf16.gmra.mxu0 %v743
        %v3244 = vpop.f32.mrf.mxu0
        %v3245 = vadd.f32 %v3172, %v3244
        %v3246 = vpop.f32.mrf.mxu0
        %v3247 = vadd.f32 %v3174, %v3246
        %v3248 = vpop.f32.mrf.mxu0
        %v3249 = vadd.f32 %v3176, %v3248
        %v3250 = vpop.f32.mrf.mxu0
        %v3251 = vadd.f32 %v3178, %v3250
        %3252 = vmatprep.mubr.bf16.mxu0 %v748
        %3253 = vmatmul.mubr.bf16.gmra.mxu0 %v747
        %v3254 = vpop.f32.mrf.mxu0
        %v3255 = vadd.f32 %v3182, %v3254
        %v3256 = vpop.f32.mrf.mxu0
        %v3257 = vadd.f32 %v3184, %v3256
        %v3258 = vpop.f32.mrf.mxu0
        %v3259 = vadd.f32 %v3186, %v3258
        %v3260 = vpop.f32.mrf.mxu0
        %v3261 = vadd.f32 %v3188, %v3260
        %3262 = vmatprep.mubr.bf16.mxu0 %v752
        %3263 = vmatmul.mubr.bf16.gmra.mxu0 %v751
        %v3264 = vpop.f32.mrf.mxu0
        %v3265 = vadd.f32 %v3192, %v3264
        %v3266 = vpop.f32.mrf.mxu0
        %v3267 = vadd.f32 %v3194, %v3266
        %v3268 = vpop.f32.mrf.mxu0
        %v3269 = vadd.f32 %v3196, %v3268
        %v3270 = vpop.f32.mrf.mxu0
        %v3271 = vadd.f32 %v3198, %v3270
        %3272 = vdwg.mxu0
        %3273 = vmatprep.subr.bf16.mxu0 %v2014
        %3274 = vmatpush1.bf16.msra.mxu0 %v2013
        %3275 = vmatprep.subr.bf16.mxu0 %v2002
        %3276 = vmatpush1.bf16.msra.mxu0 %v2001
        %3277 = vmatprep.subr.bf16.mxu0 %v1990
        %3278 = vmatpush1.bf16.msra.mxu0 %v1989
        %3279 = vmatprep.subr.bf16.mxu0 %v1978
        %3280 = vmatpush1.bf16.msra.mxu0 %v1977
        %3281 = vmatprep.subr.bf16.mxu0 %v1966
        %3282 = vmatpush1.bf16.msra.mxu0 %v1965
        %3283 = vmatprep.subr.bf16.mxu0 %v1954
        %3284 = vmatpush1.bf16.msra.mxu0 %v1953
        %3285 = vmatprep.subr.bf16.mxu0 %v1942
        %3286 = vmatpush1.bf16.msra.mxu0 %v1941
        %3287 = vmatprep.subr.bf16.mxu0 %v1930
        %3288 = vmatpush1.bf16.msra.mxu0 %v1929
        %3289 = vmatprep.subr.bf16.mxu0 %v2110
        %3290 = vmatpush2.bf16.msra.mxu0 %v2109
        %3291 = vmatprep.subr.bf16.mxu0 %v2098
        %3292 = vmatpush2.bf16.msra.mxu0 %v2097
        %3293 = vmatprep.subr.bf16.mxu0 %v2086
        %3294 = vmatpush2.bf16.msra.mxu0 %v2085
        %3295 = vmatprep.subr.bf16.mxu0 %v2074
        %3296 = vmatpush2.bf16.msra.mxu0 %v2073
        %3297 = vmatprep.subr.bf16.mxu0 %v2062
        %3298 = vmatpush2.bf16.msra.mxu0 %v2061
        %3299 = vmatprep.subr.bf16.mxu0 %v2050
        %3300 = vmatpush2.bf16.msra.mxu0 %v2049
        %3301 = vmatprep.subr.bf16.mxu0 %v2038
        %3302 = vmatpush2.bf16.msra.mxu0 %v2037
        %3303 = vmatprep.subr.bf16.mxu0 %v2026
        %3304 = vmatpush2.bf16.msra.mxu0 %v2025
        %3305 = vmatprep.mubr.bf16.mxu0 %v738
        %3306 = vmatmul.mubr.bf16.gmra.mxu0 %v737
        %v3307 = vpop.f32.mrf.mxu0
        %v3308 = vadd.f32 0.0, %v3307
        %v3309 = vpop.f32.mrf.mxu0
        %v3310 = vadd.f32 0.0, %v3309
        %v3311 = vpop.f32.mrf.mxu0
        %v3312 = vadd.f32 0.0, %v3311
        %v3313 = vpop.f32.mrf.mxu0
        %v3314 = vadd.f32 0.0, %v3313
        %3315 = vmatprep.mubr.bf16.mxu0 %v742
        %3316 = vmatmul.mubr.bf16.gmra.mxu0 %v741
        %v3317 = vpop.f32.mrf.mxu0
        %v3318 = vadd.f32 0.0, %v3317
        %v3319 = vpop.f32.mrf.mxu0
        %v3320 = vadd.f32 0.0, %v3319
        %v3321 = vpop.f32.mrf.mxu0
        %v3322 = vadd.f32 0.0, %v3321
        %v3323 = vpop.f32.mrf.mxu0
        %v3324 = vadd.f32 0.0, %v3323
        %3325 = vmatprep.mubr.bf16.mxu0 %v746
        %3326 = vmatmul.mubr.bf16.gmra.mxu0 %v745
        %v3327 = vpop.f32.mrf.mxu0
        %v3328 = vadd.f32 0.0, %v3327
        %v3329 = vpop.f32.mrf.mxu0
        %v3330 = vadd.f32 0.0, %v3329
        %v3331 = vpop.f32.mrf.mxu0
        %v3332 = vadd.f32 0.0, %v3331
        %v3333 = vpop.f32.mrf.mxu0
        %v3334 = vadd.f32 0.0, %v3333
        %3335 = vmatprep.mubr.bf16.mxu0 %v750
        %3336 = vmatmul.mubr.bf16.gmra.mxu0 %v749
        %v3337 = vpop.f32.mrf.mxu0
        %v3338 = vadd.f32 0.0, %v3337
        %v3339 = vpop.f32.mrf.mxu0
        %v3340 = vadd.f32 0.0, %v3339
        %v3341 = vpop.f32.mrf.mxu0
        %v3342 = vadd.f32 0.0, %v3341
        %v3343 = vpop.f32.mrf.mxu0
        %v3344 = vadd.f32 0.0, %v3343
        %3345 = vdwg.mxu0
        %3346 = vmatprep.subr.bf16.mxu0 %v2206
        %3347 = vmatpush1.bf16.msra.mxu0 %v2205
        %3348 = vmatprep.subr.bf16.mxu0 %v2194
        %3349 = vmatpush1.bf16.msra.mxu0 %v2193
        %3350 = vmatprep.subr.bf16.mxu0 %v2182
        %3351 = vmatpush1.bf16.msra.mxu0 %v2181
        %3352 = vmatprep.subr.bf16.mxu0 %v2170
        %3353 = vmatpush1.bf16.msra.mxu0 %v2169
        %3354 = vmatprep.subr.bf16.mxu0 %v2158
        %3355 = vmatpush1.bf16.msra.mxu0 %v2157
        %3356 = vmatprep.subr.bf16.mxu0 %v2146
        %3357 = vmatpush1.bf16.msra.mxu0 %v2145
        %3358 = vmatprep.subr.bf16.mxu0 %v2134
        %3359 = vmatpush1.bf16.msra.mxu0 %v2133
        %3360 = vmatprep.subr.bf16.mxu0 %v2122
        %3361 = vmatpush1.bf16.msra.mxu0 %v2121
        %3362 = vmatprep.subr.bf16.mxu0 %v2302
        %3363 = vmatpush2.bf16.msra.mxu0 %v2301
        %3364 = vmatprep.subr.bf16.mxu0 %v2290
        %3365 = vmatpush2.bf16.msra.mxu0 %v2289
        %3366 = vmatprep.subr.bf16.mxu0 %v2278
        %3367 = vmatpush2.bf16.msra.mxu0 %v2277
        %3368 = vmatprep.subr.bf16.mxu0 %v2266
        %3369 = vmatpush2.bf16.msra.mxu0 %v2265
        %3370 = vmatprep.subr.bf16.mxu0 %v2254
        %3371 = vmatpush2.bf16.msra.mxu0 %v2253
        %3372 = vmatprep.subr.bf16.mxu0 %v2242
        %3373 = vmatpush2.bf16.msra.mxu0 %v2241
        %3374 = vmatprep.subr.bf16.mxu0 %v2230
        %3375 = vmatpush2.bf16.msra.mxu0 %v2229
        %3376 = vmatprep.subr.bf16.mxu0 %v2218
        %3377 = vmatpush2.bf16.msra.mxu0 %v2217
        %3378 = vmatprep.mubr.bf16.mxu0 %v740
        %3379 = vmatmul.mubr.bf16.gmra.mxu0 %v739
        %v3380 = vpop.f32.mrf.mxu0
        %v3381 = vadd.f32 %v3308, %v3380
        %v3382 = vpop.f32.mrf.mxu0
        %v3383 = vadd.f32 %v3310, %v3382
        %v3384 = vpop.f32.mrf.mxu0
        %v3385 = vadd.f32 %v3312, %v3384
        %v3386 = vpop.f32.mrf.mxu0
        %v3387 = vadd.f32 %v3314, %v3386
        %3388 = vmatprep.mubr.bf16.mxu0 %v744
        %3389 = vmatmul.mubr.bf16.gmra.mxu0 %v743
        %v3390 = vpop.f32.mrf.mxu0
        %v3391 = vadd.f32 %v3318, %v3390
        %v3392 = vpop.f32.mrf.mxu0
        %v3393 = vadd.f32 %v3320, %v3392
        %v3394 = vpop.f32.mrf.mxu0
        %v3395 = vadd.f32 %v3322, %v3394
        %v3396 = vpop.f32.mrf.mxu0
        %v3397 = vadd.f32 %v3324, %v3396
        %3398 = vmatprep.mubr.bf16.mxu0 %v748
        %3399 = vmatmul.mubr.bf16.gmra.mxu0 %v747
        %v3400 = vpop.f32.mrf.mxu0
        %v3401 = vadd.f32 %v3328, %v3400
        %v3402 = vpop.f32.mrf.mxu0
        %v3403 = vadd.f32 %v3330, %v3402
        %v3404 = vpop.f32.mrf.mxu0
        %v3405 = vadd.f32 %v3332, %v3404
        %v3406 = vpop.f32.mrf.mxu0
        %v3407 = vadd.f32 %v3334, %v3406
        %3408 = vmatprep.mubr.bf16.mxu0 %v752
        %3409 = vmatmul.mubr.bf16.gmra.mxu0 %v751
        %v3410 = vpop.f32.mrf.mxu0
        %v3411 = vadd.f32 %v3338, %v3410
        %v3412 = vpop.f32.mrf.mxu0
        %v3413 = vadd.f32 %v3340, %v3412
        %v3414 = vpop.f32.mrf.mxu0
        %v3415 = vadd.f32 %v3342, %v3414
        %v3416 = vpop.f32.mrf.mxu0
        %v3417 = vadd.f32 %v3344, %v3416
        %3418 = vdwg.mxu0
        %3419 = vmatprep.subr.bf16.mxu0 %v2016
        %3420 = vmatpush1.bf16.msra.mxu0 %v2015
        %3421 = vmatprep.subr.bf16.mxu0 %v2004
        %3422 = vmatpush1.bf16.msra.mxu0 %v2003
        %3423 = vmatprep.subr.bf16.mxu0 %v1992
        %3424 = vmatpush1.bf16.msra.mxu0 %v1991
        %3425 = vmatprep.subr.bf16.mxu0 %v1980
        %3426 = vmatpush1.bf16.msra.mxu0 %v1979
        %3427 = vmatprep.subr.bf16.mxu0 %v1968
        %3428 = vmatpush1.bf16.msra.mxu0 %v1967
        %3429 = vmatprep.subr.bf16.mxu0 %v1956
        %3430 = vmatpush1.bf16.msra.mxu0 %v1955
        %3431 = vmatprep.subr.bf16.mxu0 %v1944
        %3432 = vmatpush1.bf16.msra.mxu0 %v1943
        %3433 = vmatprep.subr.bf16.mxu0 %v1932
        %3434 = vmatpush1.bf16.msra.mxu0 %v1931
        %3435 = vmatprep.subr.bf16.mxu0 %v2112
        %3436 = vmatpush2.bf16.msra.mxu0 %v2111
        %3437 = vmatprep.subr.bf16.mxu0 %v2100
        %3438 = vmatpush2.bf16.msra.mxu0 %v2099
        %3439 = vmatprep.subr.bf16.mxu0 %v2088
        %3440 = vmatpush2.bf16.msra.mxu0 %v2087
        %3441 = vmatprep.subr.bf16.mxu0 %v2076
        %3442 = vmatpush2.bf16.msra.mxu0 %v2075
        %3443 = vmatprep.subr.bf16.mxu0 %v2064
        %3444 = vmatpush2.bf16.msra.mxu0 %v2063
        %3445 = vmatprep.subr.bf16.mxu0 %v2052
        %3446 = vmatpush2.bf16.msra.mxu0 %v2051
        %3447 = vmatprep.subr.bf16.mxu0 %v2040
        %3448 = vmatpush2.bf16.msra.mxu0 %v2039
        %3449 = vmatprep.subr.bf16.mxu0 %v2028
        %3450 = vmatpush2.bf16.msra.mxu0 %v2027
        %3451 = vmatprep.mubr.bf16.mxu0 %v738
        %3452 = vmatmul.mubr.bf16.gmra.mxu0 %v737
        %v3453 = vpop.f32.mrf.mxu0
        %v3454 = vadd.f32 0.0, %v3453
        %v3455 = vpop.f32.mrf.mxu0
        %v3456 = vadd.f32 0.0, %v3455
        %v3457 = vpop.f32.mrf.mxu0
        %v3458 = vadd.f32 0.0, %v3457
        %v3459 = vpop.f32.mrf.mxu0
        %v3460 = vadd.f32 0.0, %v3459
        %3461 = vmatprep.mubr.bf16.mxu0 %v742
        %3462 = vmatmul.mubr.bf16.gmra.mxu0 %v741
        %v3463 = vpop.f32.mrf.mxu0
        %v3464 = vadd.f32 0.0, %v3463
        %v3465 = vpop.f32.mrf.mxu0
        %v3466 = vadd.f32 0.0, %v3465
        %v3467 = vpop.f32.mrf.mxu0
        %v3468 = vadd.f32 0.0, %v3467
        %v3469 = vpop.f32.mrf.mxu0
        %v3470 = vadd.f32 0.0, %v3469
        %3471 = vmatprep.mubr.bf16.mxu0 %v746
        %3472 = vmatmul.mubr.bf16.gmra.mxu0 %v745
        %v3473 = vpop.f32.mrf.mxu0
        %v3474 = vadd.f32 0.0, %v3473
        %v3475 = vpop.f32.mrf.mxu0
        %v3476 = vadd.f32 0.0, %v3475
        %v3477 = vpop.f32.mrf.mxu0
        %v3478 = vadd.f32 0.0, %v3477
        %v3479 = vpop.f32.mrf.mxu0
        %v3480 = vadd.f32 0.0, %v3479
        %3481 = vmatprep.mubr.bf16.mxu0 %v750
        %3482 = vmatmul.mubr.bf16.gmra.mxu0 %v749
        %v3483 = vpop.f32.mrf.mxu0
        %v3484 = vadd.f32 0.0, %v3483
        %v3485 = vpop.f32.mrf.mxu0
        %v3486 = vadd.f32 0.0, %v3485
        %v3487 = vpop.f32.mrf.mxu0
        %v3488 = vadd.f32 0.0, %v3487
        %v3489 = vpop.f32.mrf.mxu0
        %v3490 = vadd.f32 0.0, %v3489
        %3491 = vdwg.mxu0
        %3492 = vmatprep.subr.bf16.mxu0 %v2208
        %3493 = vmatpush1.bf16.msra.mxu0 %v2207
        %3494 = vmatprep.subr.bf16.mxu0 %v2196
        %3495 = vmatpush1.bf16.msra.mxu0 %v2195
        %3496 = vmatprep.subr.bf16.mxu0 %v2184
        %3497 = vmatpush1.bf16.msra.mxu0 %v2183
        %3498 = vmatprep.subr.bf16.mxu0 %v2172
        %3499 = vmatpush1.bf16.msra.mxu0 %v2171
        %3500 = vmatprep.subr.bf16.mxu0 %v2160
        %3501 = vmatpush1.bf16.msra.mxu0 %v2159
        %3502 = vmatprep.subr.bf16.mxu0 %v2148
        %3503 = vmatpush1.bf16.msra.mxu0 %v2147
        %3504 = vmatprep.subr.bf16.mxu0 %v2136
        %3505 = vmatpush1.bf16.msra.mxu0 %v2135
        %3506 = vmatprep.subr.bf16.mxu0 %v2124
        %3507 = vmatpush1.bf16.msra.mxu0 %v2123
        %3508 = vmatprep.subr.bf16.mxu0 %v2304
        %3509 = vmatpush2.bf16.msra.mxu0 %v2303
        %3510 = vmatprep.subr.bf16.mxu0 %v2292
        %3511 = vmatpush2.bf16.msra.mxu0 %v2291
        %3512 = vmatprep.subr.bf16.mxu0 %v2280
        %3513 = vmatpush2.bf16.msra.mxu0 %v2279
        %3514 = vmatprep.subr.bf16.mxu0 %v2268
        %3515 = vmatpush2.bf16.msra.mxu0 %v2267
        %3516 = vmatprep.subr.bf16.mxu0 %v2256
        %3517 = vmatpush2.bf16.msra.mxu0 %v2255
        %3518 = vmatprep.subr.bf16.mxu0 %v2244
        %3519 = vmatpush2.bf16.msra.mxu0 %v2243
        %3520 = vmatprep.subr.bf16.mxu0 %v2232
        %3521 = vmatpush2.bf16.msra.mxu0 %v2231
        %3522 = vmatprep.subr.bf16.mxu0 %v2220
        %3523 = vmatpush2.bf16.msra.mxu0 %v2219
        %3524 = vmatprep.mubr.bf16.mxu0 %v740
        %3525 = vmatmul.mubr.bf16.gmra.mxu0 %v739
        %v3526 = vpop.f32.mrf.mxu0
        %v3527 = vadd.f32 %v3454, %v3526
        %v3528 = vpop.f32.mrf.mxu0
        %v3529 = vadd.f32 %v3456, %v3528
        %v3530 = vpop.f32.mrf.mxu0
        %v3531 = vadd.f32 %v3458, %v3530
        %v3532 = vpop.f32.mrf.mxu0
        %v3533 = vadd.f32 %v3460, %v3532
        %3534 = vmatprep.mubr.bf16.mxu0 %v744
        %3535 = vmatmul.mubr.bf16.gmra.mxu0 %v743
        %v3536 = vpop.f32.mrf.mxu0
        %v3537 = vadd.f32 %v3464, %v3536
        %v3538 = vpop.f32.mrf.mxu0
        %v3539 = vadd.f32 %v3466, %v3538
        %v3540 = vpop.f32.mrf.mxu0
        %v3541 = vadd.f32 %v3468, %v3540
        %v3542 = vpop.f32.mrf.mxu0
        %v3543 = vadd.f32 %v3470, %v3542
        %3544 = vmatprep.mubr.bf16.mxu0 %v748
        %3545 = vmatmul.mubr.bf16.gmra.mxu0 %v747
        %v3546 = vpop.f32.mrf.mxu0
        %v3547 = vadd.f32 %v3474, %v3546
        %v3548 = vpop.f32.mrf.mxu0
        %v3549 = vadd.f32 %v3476, %v3548
        %v3550 = vpop.f32.mrf.mxu0
        %v3551 = vadd.f32 %v3478, %v3550
        %v3552 = vpop.f32.mrf.mxu0
        %v3553 = vadd.f32 %v3480, %v3552
        %3554 = vmatprep.mubr.bf16.mxu0 %v752
        %3555 = vmatmul.mubr.bf16.gmra.mxu0 %v751
        %v3556 = vpop.f32.mrf.mxu0
        %v3557 = vadd.f32 %v3484, %v3556
        %v3558 = vpop.f32.mrf.mxu0
        %v3559 = vadd.f32 %v3486, %v3558
        %v3560 = vpop.f32.mrf.mxu0
        %v3561 = vadd.f32 %v3488, %v3560
        %v3562 = vpop.f32.mrf.mxu0
        %v3563 = vadd.f32 %v3490, %v3562
        %3564 = vdwg.mxu0
        %v3565 = vadd.f32 %v2797, %v2801
        %v3566 = vadd.f32 %v3565, %v2807
        %v3567 = vadd.f32 %v3566, %v2811
        %v3568 = vadd.f32 %v3567, %v2817
        %v3569 = vadd.f32 %v3568, %v2821
        %v3570 = vadd.f32 %v3569, %v2827
        %v3571 = vadd.f32 %v3570, %v2831
        %v3572 = vrot.slane %v3571, 4
        %v3573 = vadd.f32 %v3571, %v3572
        %v3574 = vrot.slane %v3573, 2
        %v3575 = vadd.f32 %v3573, %v3574
        %v3576 = vrot.slane %v3575, 1
        %v3577 = vadd.f32 %v3575, %v3576
        %v3578 = vadd.f32 %v2799, %v2803
        %v3579 = vadd.f32 %v3578, %v2809
        %v3580 = vadd.f32 %v3579, %v2813
        %v3581 = vadd.f32 %v3580, %v2819
        %v3582 = vadd.f32 %v3581, %v2823
        %v3583 = vadd.f32 %v3582, %v2829
        %v3584 = vadd.f32 %v3583, %v2833
        %v3585 = vrot.slane %v3584, 4
        %v3586 = vadd.f32 %v3584, %v3585
        %v3587 = vrot.slane %v3586, 2
        %v3588 = vadd.f32 %v3586, %v3587
        %v3589 = vrot.slane %v3588, 1
        %v3590 = vadd.f32 %v3588, %v3589
        %v3591 = vadd.f32 %v2943, %v2947
        %v3592 = vadd.f32 %v3591, %v2953
        %v3593 = vadd.f32 %v3592, %v2957
        %v3594 = vadd.f32 %v3593, %v2963
        %v3595 = vadd.f32 %v3594, %v2967
        %v3596 = vadd.f32 %v3595, %v2973
        %v3597 = vadd.f32 %v3596, %v2977
        %v3598 = vrot.slane %v3597, 4
        %v3599 = vadd.f32 %v3597, %v3598
        %v3600 = vrot.slane %v3599, 2
        %v3601 = vadd.f32 %v3599, %v3600
        %v3602 = vrot.slane %v3601, 1
        %v3603 = vadd.f32 %v3601, %v3602
        %v3604 = vadd.f32 %v2945, %v2949
        %v3605 = vadd.f32 %v3604, %v2955
        %v3606 = vadd.f32 %v3605, %v2959
        %v3607 = vadd.f32 %v3606, %v2965
        %v3608 = vadd.f32 %v3607, %v2969
        %v3609 = vadd.f32 %v3608, %v2975
        %v3610 = vadd.f32 %v3609, %v2979
        %v3611 = vrot.slane %v3610, 4
        %v3612 = vadd.f32 %v3610, %v3611
        %v3613 = vrot.slane %v3612, 2
        %v3614 = vadd.f32 %v3612, %v3613
        %v3615 = vrot.slane %v3614, 1
        %v3616 = vadd.f32 %v3614, %v3615
        %v3617 = vadd.f32 %v3089, %v3093
        %v3618 = vadd.f32 %v3617, %v3099
        %v3619 = vadd.f32 %v3618, %v3103
        %v3620 = vadd.f32 %v3619, %v3109
        %v3621 = vadd.f32 %v3620, %v3113
        %v3622 = vadd.f32 %v3621, %v3119
        %v3623 = vadd.f32 %v3622, %v3123
        %v3624 = vrot.slane %v3623, 4
        %v3625 = vadd.f32 %v3623, %v3624
        %v3626 = vrot.slane %v3625, 2
        %v3627 = vadd.f32 %v3625, %v3626
        %v3628 = vrot.slane %v3627, 1
        %v3629 = vadd.f32 %v3627, %v3628
        %v3630 = vadd.f32 %v3091, %v3095
        %v3631 = vadd.f32 %v3630, %v3101
        %v3632 = vadd.f32 %v3631, %v3105
        %v3633 = vadd.f32 %v3632, %v3111
        %v3634 = vadd.f32 %v3633, %v3115
        %v3635 = vadd.f32 %v3634, %v3121
        %v3636 = vadd.f32 %v3635, %v3125
        %v3637 = vrot.slane %v3636, 4
        %v3638 = vadd.f32 %v3636, %v3637
        %v3639 = vrot.slane %v3638, 2
        %v3640 = vadd.f32 %v3638, %v3639
        %v3641 = vrot.slane %v3640, 1
        %v3642 = vadd.f32 %v3640, %v3641
        %v3643 = vadd.f32 %v3235, %v3239
        %v3644 = vadd.f32 %v3643, %v3245
        %v3645 = vadd.f32 %v3644, %v3249
        %v3646 = vadd.f32 %v3645, %v3255
        %v3647 = vadd.f32 %v3646, %v3259
        %v3648 = vadd.f32 %v3647, %v3265
        %v3649 = vadd.f32 %v3648, %v3269
        %v3650 = vrot.slane %v3649, 4
        %v3651 = vadd.f32 %v3649, %v3650
        %v3652 = vrot.slane %v3651, 2
        %v3653 = vadd.f32 %v3651, %v3652
        %v3654 = vrot.slane %v3653, 1
        %v3655 = vadd.f32 %v3653, %v3654
        %v3656 = vadd.f32 %v3237, %v3241
        %v3657 = vadd.f32 %v3656, %v3247
        %v3658 = vadd.f32 %v3657, %v3251
        %v3659 = vadd.f32 %v3658, %v3257
        %v3660 = vadd.f32 %v3659, %v3261
        %v3661 = vadd.f32 %v3660, %v3267
        %v3662 = vadd.f32 %v3661, %v3271
        %v3663 = vrot.slane %v3662, 4
        %v3664 = vadd.f32 %v3662, %v3663
        %v3665 = vrot.slane %v3664, 2
        %v3666 = vadd.f32 %v3664, %v3665
        %v3667 = vrot.slane %v3666, 1
        %v3668 = vadd.f32 %v3666, %v3667
        %v3669 = vadd.f32 %v3381, %v3385
        %v3670 = vadd.f32 %v3669, %v3391
        %v3671 = vadd.f32 %v3670, %v3395
        %v3672 = vadd.f32 %v3671, %v3401
        %v3673 = vadd.f32 %v3672, %v3405
        %v3674 = vadd.f32 %v3673, %v3411
        %v3675 = vadd.f32 %v3674, %v3415
        %v3676 = vrot.slane %v3675, 4
        %v3677 = vadd.f32 %v3675, %v3676
        %v3678 = vrot.slane %v3677, 2
        %v3679 = vadd.f32 %v3677, %v3678
        %v3680 = vrot.slane %v3679, 1
        %v3681 = vadd.f32 %v3679, %v3680
        %v3682 = vadd.f32 %v3383, %v3387
        %v3683 = vadd.f32 %v3682, %v3393
        %v3684 = vadd.f32 %v3683, %v3397
        %v3685 = vadd.f32 %v3684, %v3403
        %v3686 = vadd.f32 %v3685, %v3407
        %v3687 = vadd.f32 %v3686, %v3413
        %v3688 = vadd.f32 %v3687, %v3417
        %v3689 = vrot.slane %v3688, 4
        %v3690 = vadd.f32 %v3688, %v3689
        %v3691 = vrot.slane %v3690, 2
        %v3692 = vadd.f32 %v3690, %v3691
        %v3693 = vrot.slane %v3692, 1
        %v3694 = vadd.f32 %v3692, %v3693
        %v3695 = vadd.f32 %v3527, %v3531
        %v3696 = vadd.f32 %v3695, %v3537
        %v3697 = vadd.f32 %v3696, %v3541
        %v3698 = vadd.f32 %v3697, %v3547
        %v3699 = vadd.f32 %v3698, %v3551
        %v3700 = vadd.f32 %v3699, %v3557
        %v3701 = vadd.f32 %v3700, %v3561
        %v3702 = vrot.slane %v3701, 4
        %v3703 = vadd.f32 %v3701, %v3702
        %v3704 = vrot.slane %v3703, 2
        %v3705 = vadd.f32 %v3703, %v3704
        %v3706 = vrot.slane %v3705, 1
        %v3707 = vadd.f32 %v3705, %v3706
        %v3708 = vadd.f32 %v3529, %v3533
        %v3709 = vadd.f32 %v3708, %v3539
        %v3710 = vadd.f32 %v3709, %v3543
        %v3711 = vadd.f32 %v3710, %v3549
        %v3712 = vadd.f32 %v3711, %v3553
        %v3713 = vadd.f32 %v3712, %v3559
        %v3714 = vadd.f32 %v3713, %v3563
        %v3715 = vrot.slane %v3714, 4
        %v3716 = vadd.f32 %v3714, %v3715
        %v3717 = vrot.slane %v3716, 2
        %v3718 = vadd.f32 %v3716, %v3717
        %v3719 = vrot.slane %v3718, 1
        %v3720 = vadd.f32 %v3718, %v3719
        %v3721 = vmul.f32 %v2797, %v2797
        %v3722 = vmul.f32 %v2799, %v2799
        %v3723 = vmul.f32 %v2943, %v2943
        %v3724 = vmul.f32 %v2945, %v2945
        %v3725 = vmul.f32 %v3089, %v3089
        %v3726 = vmul.f32 %v3091, %v3091
        %v3727 = vmul.f32 %v3235, %v3235
        %v3728 = vmul.f32 %v3237, %v3237
        %v3729 = vmul.f32 %v3381, %v3381
        %v3730 = vmul.f32 %v3383, %v3383
        %v3731 = vmul.f32 %v3527, %v3527
        %v3732 = vmul.f32 %v3529, %v3529
        %v3733 = vmul.f32 %v2801, %v2801
        %v3734 = vmul.f32 %v2803, %v2803
        %v3735 = vmul.f32 %v2947, %v2947
        %v3736 = vmul.f32 %v2949, %v2949
        %v3737 = vmul.f32 %v3093, %v3093
        %v3738 = vmul.f32 %v3095, %v3095
        %v3739 = vmul.f32 %v3239, %v3239
        %v3740 = vmul.f32 %v3241, %v3241
        %v3741 = vmul.f32 %v3385, %v3385
        %v3742 = vmul.f32 %v3387, %v3387
        %v3743 = vmul.f32 %v3531, %v3531
        %v3744 = vmul.f32 %v3533, %v3533
        %v3745 = vmul.f32 %v2807, %v2807
        %v3746 = vmul.f32 %v2809, %v2809
        %v3747 = vmul.f32 %v2953, %v2953
        %v3748 = vmul.f32 %v2955, %v2955
        %v3749 = vmul.f32 %v3099, %v3099
        %v3750 = vmul.f32 %v3101, %v3101
        %v3751 = vmul.f32 %v3245, %v3245
        %v3752 = vmul.f32 %v3247, %v3247
        %v3753 = vmul.f32 %v3391, %v3391
        %v3754 = vmul.f32 %v3393, %v3393
        %v3755 = vmul.f32 %v3537, %v3537
        %v3756 = vmul.f32 %v3539, %v3539
        %v3757 = vmul.f32 %v2811, %v2811
        %v3758 = vmul.f32 %v2813, %v2813
        %v3759 = vmul.f32 %v2957, %v2957
        %v3760 = vmul.f32 %v2959, %v2959
        %v3761 = vmul.f32 %v3103, %v3103
        %v3762 = vmul.f32 %v3105, %v3105
        %v3763 = vmul.f32 %v3249, %v3249
        %v3764 = vmul.f32 %v3251, %v3251
        %v3765 = vmul.f32 %v3395, %v3395
        %v3766 = vmul.f32 %v3397, %v3397
        %v3767 = vmul.f32 %v3541, %v3541
        %v3768 = vmul.f32 %v3543, %v3543
        %v3769 = vmul.f32 %v2817, %v2817
        %v3770 = vmul.f32 %v2819, %v2819
        %v3771 = vmul.f32 %v2963, %v2963
        %v3772 = vmul.f32 %v2965, %v2965
        %v3773 = vmul.f32 %v3109, %v3109
        %v3774 = vmul.f32 %v3111, %v3111
        %v3775 = vmul.f32 %v3255, %v3255
        %v3776 = vmul.f32 %v3257, %v3257
        %v3777 = vmul.f32 %v3401, %v3401
        %v3778 = vmul.f32 %v3403, %v3403
        %v3779 = vmul.f32 %v3547, %v3547
        %v3780 = vmul.f32 %v3549, %v3549
        %v3781 = vmul.f32 %v2821, %v2821
        %v3782 = vmul.f32 %v2823, %v2823
        %v3783 = vmul.f32 %v2967, %v2967
        %v3784 = vmul.f32 %v2969, %v2969
        %v3785 = vmul.f32 %v3113, %v3113
        %v3786 = vmul.f32 %v3115, %v3115
        %v3787 = vmul.f32 %v3259, %v3259
        %v3788 = vmul.f32 %v3261, %v3261
        %v3789 = vmul.f32 %v3405, %v3405
        %v3790 = vmul.f32 %v3407, %v3407
        %v3791 = vmul.f32 %v3551, %v3551
        %v3792 = vmul.f32 %v3553, %v3553
        %v3793 = vmul.f32 %v2827, %v2827
        %v3794 = vmul.f32 %v2829, %v2829
        %v3795 = vmul.f32 %v2973, %v2973
        %v3796 = vmul.f32 %v2975, %v2975
        %v3797 = vmul.f32 %v3119, %v3119
        %v3798 = vmul.f32 %v3121, %v3121
        %v3799 = vmul.f32 %v3265, %v3265
        %v3800 = vmul.f32 %v3267, %v3267
        %v3801 = vmul.f32 %v3411, %v3411
        %v3802 = vmul.f32 %v3413, %v3413
        %v3803 = vmul.f32 %v3557, %v3557
        %v3804 = vmul.f32 %v3559, %v3559
        %v3805 = vmul.f32 %v2831, %v2831
        %v3806 = vmul.f32 %v2833, %v2833
        %v3807 = vmul.f32 %v2977, %v2977
        %v3808 = vmul.f32 %v2979, %v2979
        %v3809 = vmul.f32 %v3123, %v3123
        %v3810 = vmul.f32 %v3125, %v3125
        %v3811 = vmul.f32 %v3269, %v3269
        %v3812 = vmul.f32 %v3271, %v3271
        %v3813 = vmul.f32 %v3415, %v3415
        %v3814 = vmul.f32 %v3417, %v3417
        %v3815 = vmul.f32 %v3561, %v3561
        %v3816 = vmul.f32 %v3563, %v3563
        %v3817 = vadd.f32 %v3721, %v3733
        %v3818 = vadd.f32 %v3817, %v3745
        %v3819 = vadd.f32 %v3818, %v3757
        %v3820 = vadd.f32 %v3819, %v3769
        %v3821 = vadd.f32 %v3820, %v3781
        %v3822 = vadd.f32 %v3821, %v3793
        %v3823 = vadd.f32 %v3822, %v3805
        %v3824 = vrot.slane %v3823, 4
        %v3825 = vadd.f32 %v3823, %v3824
        %v3826 = vrot.slane %v3825, 2
        %v3827 = vadd.f32 %v3825, %v3826
        %v3828 = vrot.slane %v3827, 1
        %v3829 = vadd.f32 %v3827, %v3828
        %v3830 = vadd.f32 %v3722, %v3734
        %v3831 = vadd.f32 %v3830, %v3746
        %v3832 = vadd.f32 %v3831, %v3758
        %v3833 = vadd.f32 %v3832, %v3770
        %v3834 = vadd.f32 %v3833, %v3782
        %v3835 = vadd.f32 %v3834, %v3794
        %v3836 = vadd.f32 %v3835, %v3806
        %v3837 = vrot.slane %v3836, 4
        %v3838 = vadd.f32 %v3836, %v3837
        %v3839 = vrot.slane %v3838, 2
        %v3840 = vadd.f32 %v3838, %v3839
        %v3841 = vrot.slane %v3840, 1
        %v3842 = vadd.f32 %v3840, %v3841
        %v3843 = vadd.f32 %v3723, %v3735
        %v3844 = vadd.f32 %v3843, %v3747
        %v3845 = vadd.f32 %v3844, %v3759
        %v3846 = vadd.f32 %v3845, %v3771
        %v3847 = vadd.f32 %v3846, %v3783
        %v3848 = vadd.f32 %v3847, %v3795
        %v3849 = vadd.f32 %v3848, %v3807
        %v3850 = vrot.slane %v3849, 4
        %v3851 = vadd.f32 %v3849, %v3850
        %v3852 = vrot.slane %v3851, 2
        %v3853 = vadd.f32 %v3851, %v3852
        %v3854 = vrot.slane %v3853, 1
        %v3855 = vadd.f32 %v3853, %v3854
        %v3856 = vadd.f32 %v3724, %v3736
        %v3857 = vadd.f32 %v3856, %v3748
        %v3858 = vadd.f32 %v3857, %v3760
        %v3859 = vadd.f32 %v3858, %v3772
        %v3860 = vadd.f32 %v3859, %v3784
        %v3861 = vadd.f32 %v3860, %v3796
        %v3862 = vadd.f32 %v3861, %v3808
        %v3863 = vrot.slane %v3862, 4
        %v3864 = vadd.f32 %v3862, %v3863
        %v3865 = vrot.slane %v3864, 2
        %v3866 = vadd.f32 %v3864, %v3865
        %v3867 = vrot.slane %v3866, 1
        %v3868 = vadd.f32 %v3866, %v3867
        %v3869 = vadd.f32 %v3725, %v3737
        %v3870 = vadd.f32 %v3869, %v3749
        %v3871 = vadd.f32 %v3870, %v3761
        %v3872 = vadd.f32 %v3871, %v3773
        %v3873 = vadd.f32 %v3872, %v3785
        %v3874 = vadd.f32 %v3873, %v3797
        %v3875 = vadd.f32 %v3874, %v3809
        %v3876 = vrot.slane %v3875, 4
        %v3877 = vadd.f32 %v3875, %v3876
        %v3878 = vrot.slane %v3877, 2
        %v3879 = vadd.f32 %v3877, %v3878
        %v3880 = vrot.slane %v3879, 1
        %v3881 = vadd.f32 %v3879, %v3880
        %v3882 = vadd.f32 %v3726, %v3738
        %v3883 = vadd.f32 %v3882, %v3750
        %v3884 = vadd.f32 %v3883, %v3762
        %v3885 = vadd.f32 %v3884, %v3774
        %v3886 = vadd.f32 %v3885, %v3786
        %v3887 = vadd.f32 %v3886, %v3798
        %v3888 = vadd.f32 %v3887, %v3810
        %v3889 = vrot.slane %v3888, 4
        %v3890 = vadd.f32 %v3888, %v3889
        %v3891 = vrot.slane %v3890, 2
        %v3892 = vadd.f32 %v3890, %v3891
        %v3893 = vrot.slane %v3892, 1
        %v3894 = vadd.f32 %v3892, %v3893
        %v3895 = vadd.f32 %v3727, %v3739
        %v3896 = vadd.f32 %v3895, %v3751
        %v3897 = vadd.f32 %v3896, %v3763
        %v3898 = vadd.f32 %v3897, %v3775
        %v3899 = vadd.f32 %v3898, %v3787
        %v3900 = vadd.f32 %v3899, %v3799
        %v3901 = vadd.f32 %v3900, %v3811
        %v3902 = vrot.slane %v3901, 4
        %v3903 = vadd.f32 %v3901, %v3902
        %v3904 = vrot.slane %v3903, 2
        %v3905 = vadd.f32 %v3903, %v3904
        %v3906 = vrot.slane %v3905, 1
        %v3907 = vadd.f32 %v3905, %v3906
        %v3908 = vadd.f32 %v3728, %v3740
        %v3909 = vadd.f32 %v3908, %v3752
        %v3910 = vadd.f32 %v3909, %v3764
        %v3911 = vadd.f32 %v3910, %v3776
        %v3912 = vadd.f32 %v3911, %v3788
        %v3913 = vadd.f32 %v3912, %v3800
        %v3914 = vadd.f32 %v3913, %v3812
        %v3915 = vrot.slane %v3914, 4
        %v3916 = vadd.f32 %v3914, %v3915
        %v3917 = vrot.slane %v3916, 2
        %v3918 = vadd.f32 %v3916, %v3917
        %v3919 = vrot.slane %v3918, 1
        %v3920 = vadd.f32 %v3918, %v3919
        %v3921 = vadd.f32 %v3729, %v3741
        %v3922 = vadd.f32 %v3921, %v3753
        %v3923 = vadd.f32 %v3922, %v3765
        %v3924 = vadd.f32 %v3923, %v3777
        %v3925 = vadd.f32 %v3924, %v3789
        %v3926 = vadd.f32 %v3925, %v3801
        %v3927 = vadd.f32 %v3926, %v3813
        %v3928 = vrot.slane %v3927, 4
        %v3929 = vadd.f32 %v3927, %v3928
        %v3930 = vrot.slane %v3929, 2
        %v3931 = vadd.f32 %v3929, %v3930
        %v3932 = vrot.slane %v3931, 1
        %v3933 = vadd.f32 %v3931, %v3932
        %v3934 = vadd.f32 %v3730, %v3742
        %v3935 = vadd.f32 %v3934, %v3754
        %v3936 = vadd.f32 %v3935, %v3766
        %v3937 = vadd.f32 %v3936, %v3778
        %v3938 = vadd.f32 %v3937, %v3790
        %v3939 = vadd.f32 %v3938, %v3802
        %v3940 = vadd.f32 %v3939, %v3814
        %v3941 = vrot.slane %v3940, 4
        %v3942 = vadd.f32 %v3940, %v3941
        %v3943 = vrot.slane %v3942, 2
        %v3944 = vadd.f32 %v3942, %v3943
        %v3945 = vrot.slane %v3944, 1
        %v3946 = vadd.f32 %v3944, %v3945
        %v3947 = vadd.f32 %v3731, %v3743
        %v3948 = vadd.f32 %v3947, %v3755
        %v3949 = vadd.f32 %v3948, %v3767
        %v3950 = vadd.f32 %v3949, %v3779
        %v3951 = vadd.f32 %v3950, %v3791
        %v3952 = vadd.f32 %v3951, %v3803
        %v3953 = vadd.f32 %v3952, %v3815
        %v3954 = vrot.slane %v3953, 4
        %v3955 = vadd.f32 %v3953, %v3954
        %v3956 = vrot.slane %v3955, 2
        %v3957 = vadd.f32 %v3955, %v3956
        %v3958 = vrot.slane %v3957, 1
        %v3959 = vadd.f32 %v3957, %v3958
        %v3960 = vadd.f32 %v3732, %v3744
        %v3961 = vadd.f32 %v3960, %v3756
        %v3962 = vadd.f32 %v3961, %v3768
        %v3963 = vadd.f32 %v3962, %v3780
        %v3964 = vadd.f32 %v3963, %v3792
        %v3965 = vadd.f32 %v3964, %v3804
        %v3966 = vadd.f32 %v3965, %v3816
        %v3967 = vrot.slane %v3966, 4
        %v3968 = vadd.f32 %v3966, %v3967
        %v3969 = vrot.slane %v3968, 2
        %v3970 = vadd.f32 %v3968, %v3969
        %v3971 = vrot.slane %v3970, 1
        %v3972 = vadd.f32 %v3970, %v3971
        %v3973 = vmul.f32 %v3577, 0.020408163
        %v3974 = vmul.f32 %v3590, 0.020408163
        %v3975 = vmul.f32 %v3603, 0.020408163
        %v3976 = vmul.f32 %v3616, 0.020408163
        %v3977 = vmul.f32 %v3629, 0.020408163
        %v3978 = vmul.f32 %v3642, 0.020408163
        %v3979 = vmul.f32 %v3655, 0.020408163
        %v3980 = vmul.f32 %v3668, 0.020408163
        %v3981 = vmul.f32 %v3681, 0.020408163
        %v3982 = vmul.f32 %v3694, 0.020408163
        %v3983 = vmul.f32 %v3707, 0.020408163
        %v3984 = vmul.f32 %v3720, 0.020408163
        %v3985 = vmul.f32 %v3829, 0.020408163
        %v3986 = vmul.f32 %v3842, 0.020408163
        %v3987 = vmul.f32 %v3855, 0.020408163
        %v3988 = vmul.f32 %v3868, 0.020408163
        %v3989 = vmul.f32 %v3881, 0.020408163
        %v3990 = vmul.f32 %v3894, 0.020408163
        %v3991 = vmul.f32 %v3907, 0.020408163
        %v3992 = vmul.f32 %v3920, 0.020408163
        %v3993 = vmul.f32 %v3933, 0.020408163
        %v3994 = vmul.f32 %v3946, 0.020408163
        %v3995 = vmul.f32 %v3959, 0.020408163
        %v3996 = vmul.f32 %v3972, 0.020408163
        %v3997 = vmul.f32 %v3973, %v3973
        %v3998 = vmul.f32 %v3974, %v3974
        %v3999 = vmul.f32 %v3975, %v3975
        %v4000 = vmul.f32 %v3976, %v3976
        %v4001 = vmul.f32 %v3977, %v3977
        %v4002 = vmul.f32 %v3978, %v3978
        %v4003 = vmul.f32 %v3979, %v3979
        %v4004 = vmul.f32 %v3980, %v3980
        %v4005 = vmul.f32 %v3981, %v3981
        %v4006 = vmul.f32 %v3982, %v3982
        %v4007 = vmul.f32 %v3983, %v3983
        %v4008 = vmul.f32 %v3984, %v3984
        %v4009 = vsub.f32 %v3985, %v3997
        %v4010 = vsub.f32 %v3986, %v3998
        %v4011 = vsub.f32 %v3987, %v3999
        %v4012 = vsub.f32 %v3988, %v4000
        %v4013 = vsub.f32 %v3989, %v4001
        %v4014 = vsub.f32 %v3990, %v4002
        %v4015 = vsub.f32 %v3991, %v4003
        %v4016 = vsub.f32 %v3992, %v4004
        %v4017 = vsub.f32 %v3993, %v4005
        %v4018 = vsub.f32 %v3994, %v4006
        %v4019 = vsub.f32 %v3995, %v4007
        %v4020 = vsub.f32 %v3996, %v4008
        %v4021 = vmax.f32 %v4009, 0.0
        %v4022 = vmax.f32 %v4010, 0.0
        %v4023 = vmax.f32 %v4011, 0.0
        %v4024 = vmax.f32 %v4012, 0.0
        %v4025 = vmax.f32 %v4013, 0.0
        %v4026 = vmax.f32 %v4014, 0.0
        %v4027 = vmax.f32 %v4015, 0.0
        %v4028 = vmax.f32 %v4016, 0.0
        %v4029 = vmax.f32 %v4017, 0.0
        %v4030 = vmax.f32 %v4018, 0.0
        %v4031 = vmax.f32 %v4019, 0.0
        %v4032 = vmax.f32 %v4020, 0.0
        %v4033 = vld [vmem:[%s242] sm:$0xff]
        %v4034 = vld [vmem:[%s242 + $0x8] sm:$0xf]
        %v4035 = vadd.f32 %v4021, 0.001
        %v4036 = vadd.f32 %v4022, 0.001
        %v4037 = vadd.f32 %v4023, 0.001
        %v4038 = vadd.f32 %v4024, 0.001
        %v4039 = vadd.f32 %v4025, 0.001
        %v4040 = vadd.f32 %v4026, 0.001
        %v4041 = vadd.f32 %v4027, 0.001
        %v4042 = vadd.f32 %v4028, 0.001
        %v4043 = vadd.f32 %v4029, 0.001
        %v4044 = vadd.f32 %v4030, 0.001
        %v4045 = vadd.f32 %v4031, 0.001
        %v4046 = vadd.f32 %v4032, 0.001
        %v4047 = vrsqrt.pop %v4035
        %v4048 = vrsqrt.pop %v4036
        %v4049 = vrsqrt.pop %v4037
        %v4050 = vrsqrt.pop %v4038
        %v4051 = vrsqrt.pop %v4039
        %v4052 = vrsqrt.pop %v4040
        %v4053 = vrsqrt.pop %v4041
        %v4054 = vrsqrt.pop %v4042
        %v4055 = vrsqrt.pop %v4043
        %v4056 = vrsqrt.pop %v4044
        %v4057 = vrsqrt.pop %v4045
        %v4058 = vrsqrt.pop %v4046
        %v4071 = vcombine.low %v4047, %v4048
        %v4072 = vcombine.low %v4049, %v4050
        %v4073 = vcombine.low %v4051, %v4052
        %v4074 = vcombine.low %v4053, %v4054
        %v4076 = vunpack.c.l.s4 1966171168
        %v4077 = vunpack.c.0.s8 %v4076
        %v4078 = vlaneseq
        %v4079 = vshrl.u32 %v4078, 7
        %v4080 = vsub.s32 %v4077, %v4079
        %v4081 = vrot.slane %v4071, %v4080
        %v4083 = vunpack.c.l.s4 1966171168
        %v4084 = vunpack.c.0.s8 %v4083
        %v4085 = vlaneseq
        %v4086 = vshrl.u32 %v4085, 7
        %v4087 = vsub.s32 %v4084, %v4086
        %v4088 = vrot.slane %v4072, %v4087
        %v4090 = vunpack.c.l.s4 1966171168
        %v4091 = vunpack.c.0.s8 %v4090
        %v4092 = vlaneseq
        %v4093 = vshrl.u32 %v4092, 7
        %v4094 = vsub.s32 %v4091, %v4093
        %v4095 = vrot.slane %v4073, %v4094
        %v4097 = vunpack.c.l.s4 1966171168
        %v4098 = vunpack.c.0.s8 %v4097
        %v4099 = vlaneseq
        %v4100 = vshrl.u32 %v4099, 7
        %v4101 = vsub.s32 %v4098, %v4100
        %v4102 = vrot.slane %v4074, %v4101
        %v4103 = vcombine.low %v4081, %v4088
        %v4104 = vcombine.low %v4095, %v4102
        %v4106 = vunpack.c.l.s4 1966171168
        %v4107 = vunpack.c.0.s8 %v4106
        %v4108 = vlaneseq
        %v4109 = vshrl.u32 %v4108, 7
        %v4110 = vsub.s32 %v4107, %v4109
        %v4111 = vrot.slane %v4103, %v4110
        %v4113 = vunpack.c.l.s4 1966171168
        %v4114 = vunpack.c.0.s8 %v4113
        %v4115 = vlaneseq
        %v4116 = vshrl.u32 %v4115, 7
        %v4117 = vsub.s32 %v4114, %v4116
        %v4118 = vrot.slane %v4104, %v4117
        %v4119 = vcombine.low %v4111, %v4118
        %v4120 = vcombine.low %v4055, %v4056
        %v4121 = vcombine.low %v4057, %v4058
        %v4123 = vunpack.c.l.s4 1966171168
        %v4124 = vunpack.c.0.s8 %v4123
        %v4125 = vlaneseq
        %v4126 = vshrl.u32 %v4125, 7
        %v4127 = vsub.s32 %v4124, %v4126
        %v4128 = vrot.slane %v4120, %v4127
        %v4130 = vunpack.c.l.s4 1966171168
        %v4131 = vunpack.c.0.s8 %v4130
        %v4132 = vlaneseq
        %v4133 = vshrl.u32 %v4132, 7
        %v4134 = vsub.s32 %v4131, %v4133
        %v4135 = vrot.slane %v4121, %v4134
        %v4136 = vcombine.low %v4128, %v4135
        %v4138 = vunpack.c.l.s4 1966171168
        %v4139 = vunpack.c.0.s8 %v4138
        %v4140 = vlaneseq
        %v4141 = vshrl.u32 %v4140, 7
        %v4142 = vsub.s32 %v4139, %v4141
        %v4143 = vrot.slane %v4136, %v4142
        %v4146 = vmul.f32 %v4033, %v4119
        %v4147 = vmul.f32 %v4034, %v4143
        %v4148 = vld [vmem:[%s251] sm:$0xff]
        %v4149 = vld [vmem:[%s251 + $0x8] sm:$0xf]
        %v4152 = vlaneseq
        %v4153 = vshrl.u32 %v4152, 7
        %v4154 = vsub.s32 0, %v4153
        %v4155 = vrot.slane %v4146, %v4154
        %v4156 = vlaneseq
        %v4157 = vshrl.u32 %v4156, 7
        %v4158 = vsub.s32 1, %v4157
        %v4159 = vrot.slane %v4146, %v4158
        %v4160 = vlaneseq
        %v4161 = vshrl.u32 %v4160, 7
        %v4162 = vsub.s32 2, %v4161
        %v4163 = vrot.slane %v4146, %v4162
        %v4164 = vlaneseq
        %v4165 = vshrl.u32 %v4164, 7
        %v4166 = vsub.s32 3, %v4165
        %v4167 = vrot.slane %v4146, %v4166
        %v4168 = vlaneseq
        %v4169 = vshrl.u32 %v4168, 7
        %v4170 = vsub.s32 4, %v4169
        %v4171 = vrot.slane %v4146, %v4170
        %v4172 = vlaneseq
        %v4173 = vshrl.u32 %v4172, 7
        %v4174 = vsub.s32 5, %v4173
        %v4175 = vrot.slane %v4146, %v4174
        %v4176 = vlaneseq
        %v4177 = vshrl.u32 %v4176, 7
        %v4178 = vsub.s32 6, %v4177
        %v4179 = vrot.slane %v4146, %v4178
        %v4180 = vlaneseq
        %v4181 = vshrl.u32 %v4180, 7
        %v4182 = vsub.s32 7, %v4181
        %v4183 = vrot.slane %v4146, %v4182
        %v4184 = vlaneseq
        %v4185 = vshrl.u32 %v4184, 7
        %v4186 = vsub.s32 0, %v4185
        %v4187 = vrot.slane %v4147, %v4186
        %v4188 = vlaneseq
        %v4189 = vshrl.u32 %v4188, 7
        %v4190 = vsub.s32 1, %v4189
        %v4191 = vrot.slane %v4147, %v4190
        %v4192 = vlaneseq
        %v4193 = vshrl.u32 %v4192, 7
        %v4194 = vsub.s32 2, %v4193
        %v4195 = vrot.slane %v4147, %v4194
        %v4196 = vlaneseq
        %v4197 = vshrl.u32 %v4196, 7
        %v4198 = vsub.s32 3, %v4197
        %v4199 = vrot.slane %v4147, %v4198
        %v4212 = vmul.f32 %v3973, %v4155
        %v4213 = vmul.f32 %v3974, %v4159
        %v4214 = vmul.f32 %v3975, %v4163
        %v4215 = vmul.f32 %v3976, %v4167
        %v4216 = vmul.f32 %v3977, %v4171
        %v4217 = vmul.f32 %v3978, %v4175
        %v4218 = vmul.f32 %v3979, %v4179
        %v4219 = vmul.f32 %v3980, %v4183
        %v4220 = vmul.f32 %v3981, %v4187
        %v4221 = vmul.f32 %v3982, %v4191
        %v4222 = vmul.f32 %v3983, %v4195
        %v4223 = vmul.f32 %v3984, %v4199
        %v4236 = vcombine.low %v4212, %v4213
        %v4237 = vcombine.low %v4214, %v4215
        %v4238 = vcombine.low %v4216, %v4217
        %v4239 = vcombine.low %v4218, %v4219
        %v4241 = vunpack.c.l.s4 1966171168
        %v4242 = vunpack.c.0.s8 %v4241
        %v4243 = vlaneseq
        %v4244 = vshrl.u32 %v4243, 7
        %v4245 = vsub.s32 %v4242, %v4244
        %v4246 = vrot.slane %v4236, %v4245
        %v4248 = vunpack.c.l.s4 1966171168
        %v4249 = vunpack.c.0.s8 %v4248
        %v4250 = vlaneseq
        %v4251 = vshrl.u32 %v4250, 7
        %v4252 = vsub.s32 %v4249, %v4251
        %v4253 = vrot.slane %v4237, %v4252
        %v4255 = vunpack.c.l.s4 1966171168
        %v4256 = vunpack.c.0.s8 %v4255
        %v4257 = vlaneseq
        %v4258 = vshrl.u32 %v4257, 7
        %v4259 = vsub.s32 %v4256, %v4258
        %v4260 = vrot.slane %v4238, %v4259
        %v4262 = vunpack.c.l.s4 1966171168
        %v4263 = vunpack.c.0.s8 %v4262
        %v4264 = vlaneseq
        %v4265 = vshrl.u32 %v4264, 7
        %v4266 = vsub.s32 %v4263, %v4265
        %v4267 = vrot.slane %v4239, %v4266
        %v4268 = vcombine.low %v4246, %v4253
        %v4269 = vcombine.low %v4260, %v4267
        %v4271 = vunpack.c.l.s4 1966171168
        %v4272 = vunpack.c.0.s8 %v4271
        %v4273 = vlaneseq
        %v4274 = vshrl.u32 %v4273, 7
        %v4275 = vsub.s32 %v4272, %v4274
        %v4276 = vrot.slane %v4268, %v4275
        %v4278 = vunpack.c.l.s4 1966171168
        %v4279 = vunpack.c.0.s8 %v4278
        %v4280 = vlaneseq
        %v4281 = vshrl.u32 %v4280, 7
        %v4282 = vsub.s32 %v4279, %v4281
        %v4283 = vrot.slane %v4269, %v4282
        %v4284 = vcombine.low %v4276, %v4283
        %v4285 = vcombine.low %v4220, %v4221
        %v4286 = vcombine.low %v4222, %v4223
        %v4288 = vunpack.c.l.s4 1966171168
        %v4289 = vunpack.c.0.s8 %v4288
        %v4290 = vlaneseq
        %v4291 = vshrl.u32 %v4290, 7
        %v4292 = vsub.s32 %v4289, %v4291
        %v4293 = vrot.slane %v4285, %v4292
        %v4295 = vunpack.c.l.s4 1966171168
        %v4296 = vunpack.c.0.s8 %v4295
        %v4297 = vlaneseq
        %v4298 = vshrl.u32 %v4297, 7
        %v4299 = vsub.s32 %v4296, %v4298
        %v4300 = vrot.slane %v4286, %v4299
        %v4301 = vcombine.low %v4293, %v4300
        %v4303 = vunpack.c.l.s4 1966171168
        %v4304 = vunpack.c.0.s8 %v4303
        %v4305 = vlaneseq
        %v4306 = vshrl.u32 %v4305, 7
        %v4307 = vsub.s32 %v4304, %v4306
        %v4308 = vrot.slane %v4301, %v4307
        %v4311 = vsub.f32 %v4148, %v4284
        %v4312 = vsub.f32 %v4149, %v4308
        %v4313 = vmul.f32 %v2797, %v4155
        %v4314 = vmul.f32 %v2799, %v4159
        %v4315 = vmul.f32 %v2943, %v4163
        %v4316 = vmul.f32 %v2945, %v4167
        %v4317 = vmul.f32 %v3089, %v4171
        %v4318 = vmul.f32 %v3091, %v4175
        %v4319 = vmul.f32 %v3235, %v4179
        %v4320 = vmul.f32 %v3237, %v4183
        %v4321 = vmul.f32 %v3381, %v4187
        %v4322 = vmul.f32 %v3383, %v4191
        %v4323 = vmul.f32 %v3527, %v4195
        %v4324 = vmul.f32 %v3529, %v4199
        %v4325 = vmul.f32 %v2801, %v4155
        %v4326 = vmul.f32 %v2803, %v4159
        %v4327 = vmul.f32 %v2947, %v4163
        %v4328 = vmul.f32 %v2949, %v4167
        %v4329 = vmul.f32 %v3093, %v4171
        %v4330 = vmul.f32 %v3095, %v4175
        %v4331 = vmul.f32 %v3239, %v4179
        %v4332 = vmul.f32 %v3241, %v4183
        %v4333 = vmul.f32 %v3385, %v4187
        %v4334 = vmul.f32 %v3387, %v4191
        %v4335 = vmul.f32 %v3531, %v4195
        %v4336 = vmul.f32 %v3533, %v4199
        %v4337 = vmul.f32 %v2807, %v4155
        %v4338 = vmul.f32 %v2809, %v4159
        %v4339 = vmul.f32 %v2953, %v4163
        %v4340 = vmul.f32 %v2955, %v4167
        %v4341 = vmul.f32 %v3099, %v4171
        %v4342 = vmul.f32 %v3101, %v4175
        %v4343 = vmul.f32 %v3245, %v4179
        %v4344 = vmul.f32 %v3247, %v4183
        %v4345 = vmul.f32 %v3391, %v4187
        %v4346 = vmul.f32 %v3393, %v4191
        %v4347 = vmul.f32 %v3537, %v4195
        %v4348 = vmul.f32 %v3539, %v4199
        %v4349 = vmul.f32 %v2811, %v4155
        %v4350 = vmul.f32 %v2813, %v4159
        %v4351 = vmul.f32 %v2957, %v4163
        %v4352 = vmul.f32 %v2959, %v4167
        %v4353 = vmul.f32 %v3103, %v4171
        %v4354 = vmul.f32 %v3105, %v4175
        %v4355 = vmul.f32 %v3249, %v4179
        %v4356 = vmul.f32 %v3251, %v4183
        %v4357 = vmul.f32 %v3395, %v4187
        %v4358 = vmul.f32 %v3397, %v4191
        %v4359 = vmul.f32 %v3541, %v4195
        %v4360 = vmul.f32 %v3543, %v4199
        %v4361 = vmul.f32 %v2817, %v4155
        %v4362 = vmul.f32 %v2819, %v4159
        %v4363 = vmul.f32 %v2963, %v4163
        %v4364 = vmul.f32 %v2965, %v4167
        %v4365 = vmul.f32 %v3109, %v4171
        %v4366 = vmul.f32 %v3111, %v4175
        %v4367 = vmul.f32 %v3255, %v4179
        %v4368 = vmul.f32 %v3257, %v4183
        %v4369 = vmul.f32 %v3401, %v4187
        %v4370 = vmul.f32 %v3403, %v4191
        %v4371 = vmul.f32 %v3547, %v4195
        %v4372 = vmul.f32 %v3549, %v4199
        %v4373 = vmul.f32 %v2821, %v4155
        %v4374 = vmul.f32 %v2823, %v4159
        %v4375 = vmul.f32 %v2967, %v4163
        %v4376 = vmul.f32 %v2969, %v4167
        %v4377 = vmul.f32 %v3113, %v4171
        %v4378 = vmul.f32 %v3115, %v4175
        %v4379 = vmul.f32 %v3259, %v4179
        %v4380 = vmul.f32 %v3261, %v4183
        %v4381 = vmul.f32 %v3405, %v4187
        %v4382 = vmul.f32 %v3407, %v4191
        %v4383 = vmul.f32 %v3551, %v4195
        %v4384 = vmul.f32 %v3553, %v4199
        %v4385 = vmul.f32 %v2827, %v4155
        %v4386 = vmul.f32 %v2829, %v4159
        %v4387 = vmul.f32 %v2973, %v4163
        %v4388 = vmul.f32 %v2975, %v4167
        %v4389 = vmul.f32 %v3119, %v4171
        %v4390 = vmul.f32 %v3121, %v4175
        %v4391 = vmul.f32 %v3265, %v4179
        %v4392 = vmul.f32 %v3267, %v4183
        %v4393 = vmul.f32 %v3411, %v4187
        %v4394 = vmul.f32 %v3413, %v4191
        %v4395 = vmul.f32 %v3557, %v4195
        %v4396 = vmul.f32 %v3559, %v4199
        %v4399 = vlaneseq
        %v4400 = vshrl.u32 %v4399, 7
        %v4401 = vsub.s32 0, %v4400
        %v4402 = vrot.slane %v4311, %v4401
        %v4403 = vlaneseq
        %v4404 = vshrl.u32 %v4403, 7
        %v4405 = vsub.s32 1, %v4404
        %v4406 = vrot.slane %v4311, %v4405
        %v4407 = vlaneseq
        %v4408 = vshrl.u32 %v4407, 7
        %v4409 = vsub.s32 2, %v4408
        %v4410 = vrot.slane %v4311, %v4409
        %v4411 = vlaneseq
        %v4412 = vshrl.u32 %v4411, 7
        %v4413 = vsub.s32 3, %v4412
        %v4414 = vrot.slane %v4311, %v4413
        %v4415 = vlaneseq
        %v4416 = vshrl.u32 %v4415, 7
        %v4417 = vsub.s32 4, %v4416
        %v4418 = vrot.slane %v4311, %v4417
        %v4419 = vlaneseq
        %v4420 = vshrl.u32 %v4419, 7
        %v4421 = vsub.s32 5, %v4420
        %v4422 = vrot.slane %v4311, %v4421
        %v4423 = vlaneseq
        %v4424 = vshrl.u32 %v4423, 7
        %v4425 = vsub.s32 6, %v4424
        %v4426 = vrot.slane %v4311, %v4425
        %v4427 = vlaneseq
        %v4428 = vshrl.u32 %v4427, 7
        %v4429 = vsub.s32 7, %v4428
        %v4430 = vrot.slane %v4311, %v4429
        %v4431 = vlaneseq
        %v4432 = vshrl.u32 %v4431, 7
        %v4433 = vsub.s32 0, %v4432
        %v4434 = vrot.slane %v4312, %v4433
        %v4435 = vlaneseq
        %v4436 = vshrl.u32 %v4435, 7
        %v4437 = vsub.s32 1, %v4436
        %v4438 = vrot.slane %v4312, %v4437
        %v4439 = vlaneseq
        %v4440 = vshrl.u32 %v4439, 7
        %v4441 = vsub.s32 2, %v4440
        %v4442 = vrot.slane %v4312, %v4441
        %v4443 = vlaneseq
        %v4444 = vshrl.u32 %v4443, 7
        %v4445 = vsub.s32 3, %v4444
        %v4446 = vrot.slane %v4312, %v4445
        %v4459 = vadd.f32 %v4313, %v4402
        %v4460 = vadd.f32 %v4314, %v4406
        %v4461 = vadd.f32 %v4315, %v4410
        %v4462 = vadd.f32 %v4316, %v4414
        %v4463 = vadd.f32 %v4317, %v4418
        %v4464 = vadd.f32 %v4318, %v4422
        %v4465 = vadd.f32 %v4319, %v4426
        %v4466 = vadd.f32 %v4320, %v4430
        %v4467 = vadd.f32 %v4321, %v4434
        %v4468 = vadd.f32 %v4322, %v4438
        %v4469 = vadd.f32 %v4323, %v4442
        %v4470 = vadd.f32 %v4324, %v4446
        %v4471 = vadd.f32 %v4325, %v4402
        %v4472 = vadd.f32 %v4326, %v4406
        %v4473 = vadd.f32 %v4327, %v4410
        %v4474 = vadd.f32 %v4328, %v4414
        %v4475 = vadd.f32 %v4329, %v4418
        %v4476 = vadd.f32 %v4330, %v4422
        %v4477 = vadd.f32 %v4331, %v4426
        %v4478 = vadd.f32 %v4332, %v4430
        %v4479 = vadd.f32 %v4333, %v4434
        %v4480 = vadd.f32 %v4334, %v4438
        %v4481 = vadd.f32 %v4335, %v4442
        %v4482 = vadd.f32 %v4336, %v4446
        %v4483 = vadd.f32 %v4337, %v4402
        %v4484 = vadd.f32 %v4338, %v4406
        %v4485 = vadd.f32 %v4339, %v4410
        %v4486 = vadd.f32 %v4340, %v4414
        %v4487 = vadd.f32 %v4341, %v4418
        %v4488 = vadd.f32 %v4342, %v4422
        %v4489 = vadd.f32 %v4343, %v4426
        %v4490 = vadd.f32 %v4344, %v4430
        %v4491 = vadd.f32 %v4345, %v4434
        %v4492 = vadd.f32 %v4346, %v4438
        %v4493 = vadd.f32 %v4347, %v4442
        %v4494 = vadd.f32 %v4348, %v4446
        %v4495 = vadd.f32 %v4349, %v4402
        %v4496 = vadd.f32 %v4350, %v4406
        %v4497 = vadd.f32 %v4351, %v4410
        %v4498 = vadd.f32 %v4352, %v4414
        %v4499 = vadd.f32 %v4353, %v4418
        %v4500 = vadd.f32 %v4354, %v4422
        %v4501 = vadd.f32 %v4355, %v4426
        %v4502 = vadd.f32 %v4356, %v4430
        %v4503 = vadd.f32 %v4357, %v4434
        %v4504 = vadd.f32 %v4358, %v4438
        %v4505 = vadd.f32 %v4359, %v4442
        %v4506 = vadd.f32 %v4360, %v4446
        %v4507 = vadd.f32 %v4361, %v4402
        %v4508 = vadd.f32 %v4362, %v4406
        %v4509 = vadd.f32 %v4363, %v4410
        %v4510 = vadd.f32 %v4364, %v4414
        %v4511 = vadd.f32 %v4365, %v4418
        %v4512 = vadd.f32 %v4366, %v4422
        %v4513 = vadd.f32 %v4367, %v4426
        %v4514 = vadd.f32 %v4368, %v4430
        %v4515 = vadd.f32 %v4369, %v4434
        %v4516 = vadd.f32 %v4370, %v4438
        %v4517 = vadd.f32 %v4371, %v4442
        %v4518 = vadd.f32 %v4372, %v4446
        %v4519 = vadd.f32 %v4373, %v4402
        %v4520 = vadd.f32 %v4374, %v4406
        %v4521 = vadd.f32 %v4375, %v4410
        %v4522 = vadd.f32 %v4376, %v4414
        %v4523 = vadd.f32 %v4377, %v4418
        %v4524 = vadd.f32 %v4378, %v4422
        %v4525 = vadd.f32 %v4379, %v4426
        %v4526 = vadd.f32 %v4380, %v4430
        %v4527 = vadd.f32 %v4381, %v4434
        %v4528 = vadd.f32 %v4382, %v4438
        %v4529 = vadd.f32 %v4383, %v4442
        %v4530 = vadd.f32 %v4384, %v4446
        %v4531 = vadd.f32 %v4385, %v4402
        %v4532 = vadd.f32 %v4386, %v4406
        %v4533 = vadd.f32 %v4387, %v4410
        %v4534 = vadd.f32 %v4388, %v4414
        %v4535 = vadd.f32 %v4389, %v4418
        %v4536 = vadd.f32 %v4390, %v4422
        %v4537 = vadd.f32 %v4391, %v4426
        %v4538 = vadd.f32 %v4392, %v4430
        %v4539 = vadd.f32 %v4393, %v4434
        %v4540 = vadd.f32 %v4394, %v4438
        %v4541 = vadd.f32 %v4395, %v4442
        %v4542 = vadd.f32 %v4396, %v4446
        %4543 = vst [vmem:[%s284] sm:$0xff] %v4459
        %4544 = vst [vmem:[%s284 + $0x8] sm:$0xff] %v4460
        %4545 = vst [vmem:[%s284 + $0x10] sm:$0xff] %v4461
        %4546 = vst [vmem:[%s284 + $0x18] sm:$0xff] %v4462
        %4547 = vst [vmem:[%s284 + $0x20] sm:$0xff] %v4463
        %4548 = vst [vmem:[%s284 + $0x28] sm:$0xff] %v4464
        %4549 = vst [vmem:[%s284 + $0x30] sm:$0xff] %v4465
        %4550 = vst [vmem:[%s284 + $0x38] sm:$0xff] %v4466
        %4551 = vst [vmem:[%s284 + $0x40] sm:$0xff] %v4467
        %4552 = vst [vmem:[%s284 + $0x48] sm:$0xff] %v4468
        %4553 = vst [vmem:[%s284 + $0x50] sm:$0xff] %v4469
        %4554 = vst [vmem:[%s284 + $0x58] sm:$0xff] %v4470
        %4555 = vst [vmem:[%s284 + $0x60] sm:$0xff] %v4471
        %4556 = vst [vmem:[%s284 + $0x68] sm:$0xff] %v4472
        %4557 = vst [vmem:[%s284 + $0x70] sm:$0xff] %v4473
        %4558 = vst [vmem:[%s284 + $0x78] sm:$0xff] %v4474
        %4559 = vst [vmem:[%s284 + $0x80] sm:$0xff] %v4475
        %4560 = vst [vmem:[%s284 + $0x88] sm:$0xff] %v4476
        %4561 = vst [vmem:[%s284 + $0x90] sm:$0xff] %v4477
        %4562 = vst [vmem:[%s284 + $0x98] sm:$0xff] %v4478
        %4563 = vst [vmem:[%s284 + $0xa0] sm:$0xff] %v4479
        %4564 = vst [vmem:[%s284 + $0xa8] sm:$0xff] %v4480
        %4565 = vst [vmem:[%s284 + $0xb0] sm:$0xff] %v4481
        %4566 = vst [vmem:[%s284 + $0xb8] sm:$0xff] %v4482
        %4567 = vst [vmem:[%s284 + $0xc0] sm:$0xff] %v4483
        %4568 = vst [vmem:[%s284 + $0xc8] sm:$0xff] %v4484
        %4569 = vst [vmem:[%s284 + $0xd0] sm:$0xff] %v4485
        %4570 = vst [vmem:[%s284 + $0xd8] sm:$0xff] %v4486
        %4571 = vst [vmem:[%s284 + $0xe0] sm:$0xff] %v4487
        %4572 = vst [vmem:[%s284 + $0xe8] sm:$0xff] %v4488
        %4573 = vst [vmem:[%s284 + $0xf0] sm:$0xff] %v4489
        %4574 = vst [vmem:[%s284 + $0xf8] sm:$0xff] %v4490
        %4575 = vst [vmem:[%s284 + $0x100] sm:$0xff] %v4491
        %4576 = vst [vmem:[%s284 + $0x108] sm:$0xff] %v4492
        %4577 = vst [vmem:[%s284 + $0x110] sm:$0xff] %v4493
        %4578 = vst [vmem:[%s284 + $0x118] sm:$0xff] %v4494
        %4579 = vst [vmem:[%s284 + $0x120] sm:$0xff] %v4495
        %4580 = vst [vmem:[%s284 + $0x128] sm:$0xff] %v4496
        %4581 = vst [vmem:[%s284 + $0x130] sm:$0xff] %v4497
        %4582 = vst [vmem:[%s284 + $0x138] sm:$0xff] %v4498
        %4583 = vst [vmem:[%s284 + $0x140] sm:$0xff] %v4499
        %4584 = vst [vmem:[%s284 + $0x148] sm:$0xff] %v4500
        %4585 = vst [vmem:[%s284 + $0x150] sm:$0xff] %v4501
        %4586 = vst [vmem:[%s284 + $0x158] sm:$0xff] %v4502
        %4587 = vst [vmem:[%s284 + $0x160] sm:$0xff] %v4503
        %4588 = vst [vmem:[%s284 + $0x168] sm:$0xff] %v4504
        %4589 = vst [vmem:[%s284 + $0x170] sm:$0xff] %v4505
        %4590 = vst [vmem:[%s284 + $0x178] sm:$0xff] %v4506
        %4591 = vst [vmem:[%s284 + $0x180] sm:$0xff] %v4507
        %4592 = vst [vmem:[%s284 + $0x188] sm:$0xff] %v4508
        %4593 = vst [vmem:[%s284 + $0x190] sm:$0xff] %v4509
        %4594 = vst [vmem:[%s284 + $0x198] sm:$0xff] %v4510
        %4595 = vst [vmem:[%s284 + $0x1a0] sm:$0xff] %v4511
        %4596 = vst [vmem:[%s284 + $0x1a8] sm:$0xff] %v4512
        %4597 = vst [vmem:[%s284 + $0x1b0] sm:$0xff] %v4513
        %4598 = vst [vmem:[%s284 + $0x1b8] sm:$0xff] %v4514
        %4599 = vst [vmem:[%s284 + $0x1c0] sm:$0xff] %v4515
        %4600 = vst [vmem:[%s284 + $0x1c8] sm:$0xff] %v4516
        %4601 = vst [vmem:[%s284 + $0x1d0] sm:$0xff] %v4517
        %4602 = vst [vmem:[%s284 + $0x1d8] sm:$0xff] %v4518
        %4603 = vst [vmem:[%s284 + $0x1e0] sm:$0xff] %v4519
        %4604 = vst [vmem:[%s284 + $0x1e8] sm:$0xff] %v4520
        %4605 = vst [vmem:[%s284 + $0x1f0] sm:$0xff] %v4521
        %4606 = vst [vmem:[%s284 + $0x1f8] sm:$0xff] %v4522
        %4607 = vst [vmem:[%s284 + $0x200] sm:$0xff] %v4523
        %4608 = vst [vmem:[%s284 + $0x208] sm:$0xff] %v4524
        %4609 = vst [vmem:[%s284 + $0x210] sm:$0xff] %v4525
        %4610 = vst [vmem:[%s284 + $0x218] sm:$0xff] %v4526
        %4611 = vst [vmem:[%s284 + $0x220] sm:$0xff] %v4527
        %4612 = vst [vmem:[%s284 + $0x228] sm:$0xff] %v4528
        %4613 = vst [vmem:[%s284 + $0x230] sm:$0xff] %v4529
        %4614 = vst [vmem:[%s284 + $0x238] sm:$0xff] %v4530
        %4615 = vst [vmem:[%s284 + $0x240] sm:$0x1] %v4531
        %4616 = vst [vmem:[%s284 + $0x248] sm:$0x1] %v4532
        %4617 = vst [vmem:[%s284 + $0x250] sm:$0x1] %v4533
        %4618 = vst [vmem:[%s284 + $0x258] sm:$0x1] %v4534
        %4619 = vst [vmem:[%s284 + $0x260] sm:$0x1] %v4535
        %4620 = vst [vmem:[%s284 + $0x268] sm:$0x1] %v4536
        %4621 = vst [vmem:[%s284 + $0x270] sm:$0x1] %v4537
        %4622 = vst [vmem:[%s284 + $0x278] sm:$0x1] %v4538
        %4623 = vst [vmem:[%s284 + $0x280] sm:$0x1] %v4539
        %4624 = vst [vmem:[%s284 + $0x288] sm:$0x1] %v4540
        %4625 = vst [vmem:[%s284 + $0x290] sm:$0x1] %v4541
        %4626 = vst [vmem:[%s284 + $0x298] sm:$0x1] %v4542
        %s4627 = sand.u32 %s128, 1
        %s4628 = sand.u32 %s128, 1
        %s4629 = smul.addr %s4628, 672
        %s4630 = scalar_lea.vmem [#allocation7], %s4629
        // Predicated region
        $region49: #{conv2d_1x1_batchnorm.1} parent=35 // pred_check
          %p4631 = pneg %p138
        $region50: #{conv2d_1x1_batchnorm.1} parent=35 // pred_check_branch
          %4633 = sbr.rel (%p4631) target = $region52
        $region51: #{conv2d_1x1_batchnorm.1} parent=35 // pred_region
          %s4634 = smul.u32 12, %s21
          %s4635 = smul.addr %s4634, 8
          %s4636 = scalar_lea.vmem %s4, %s4635
          // Predicated region
          $region53: #{conv2d_1x1_batchnorm.1} parent=51 // pred_check
            _
          $region54: #{conv2d_1x1_batchnorm.1} parent=51 // pred_check_branch
            %4638 = sbr.rel (0) target = $region56
          $region55: #{conv2d_1x1_batchnorm.1} parent=51 // pred_region
            // Predicated region
            $region57: #{conv2d_1x1_batchnorm.1} parent=55 // pred_check
              _
            $region58: #{conv2d_1x1_batchnorm.1} parent=55 // pred_check_branch
              %4640 = sbr.rel (0) target = $region60
            $region59: #{conv2d_1x1_batchnorm.1} parent=55 // pred_region
              loop: start=0, step=1, limit=1
              $region61: #{conv2d_1x1_batchnorm.1} parent=59 // loop_pre_header
                _
              $region62: #{conv2d_1x1_batchnorm.1} parent=59 // loop_header
                %s4642 = sphi 0, %s4646
                %p4643 = scmp.ge.s32.totalorder %s4642, 1
                %s4647 = sphi %s4630, %s4630
                %s4648 = sphi %s4636, %s4636
              $region63: #{conv2d_1x1_batchnorm.1} parent=59 // loop_header_branch
                %4645 = sbr.rel (%p4643) target = $region67
              $region64: #{conv2d_1x1_batchnorm.1} parent=59 // loop_body
                %v4649 = vld [vmem:[%s4647] sm:$0xff]
                %4650 = vst [vmem:[%s4648] sm:$0xff] %v4649
                %v4651 = vld [vmem:[%s4647 + $0x8] sm:$0xff]
                %4652 = vst [vmem:[%s4648 + $0x8] sm:$0xff] %v4651
                %v4653 = vld [vmem:[%s4647 + $0x10] sm:$0xff]
                %4654 = vst [vmem:[%s4648 + $0x10] sm:$0xff] %v4653
                %v4655 = vld [vmem:[%s4647 + $0x18] sm:$0xff]
                %4656 = vst [vmem:[%s4648 + $0x18] sm:$0xff] %v4655
                %v4657 = vld [vmem:[%s4647 + $0x20] sm:$0xff]
                %4658 = vst [vmem:[%s4648 + $0x20] sm:$0xff] %v4657
                %v4659 = vld [vmem:[%s4647 + $0x28] sm:$0xff]
                %4660 = vst [vmem:[%s4648 + $0x28] sm:$0xff] %v4659
                %v4661 = vld [vmem:[%s4647 + $0x30] sm:$0xff]
                %4662 = vst [vmem:[%s4648 + $0x30] sm:$0xff] %v4661
                %v4663 = vld [vmem:[%s4647 + $0x38] sm:$0xff]
                %4664 = vst [vmem:[%s4648 + $0x38] sm:$0xff] %v4663
                %v4665 = vld [vmem:[%s4647 + $0x40] sm:$0xff]
                %4666 = vst [vmem:[%s4648 + $0x40] sm:$0xff] %v4665
                %v4667 = vld [vmem:[%s4647 + $0x48] sm:$0xff]
                %4668 = vst [vmem:[%s4648 + $0x48] sm:$0xff] %v4667
                %v4669 = vld [vmem:[%s4647 + $0x50] sm:$0xff]
                %4670 = vst [vmem:[%s4648 + $0x50] sm:$0xff] %v4669
                %v4671 = vld [vmem:[%s4647 + $0x58] sm:$0xff]
                %4672 = vst [vmem:[%s4648 + $0x58] sm:$0xff] %v4671
                %v4673 = vld [vmem:[%s4647 + $0x60] sm:$0xff]
                %4674 = vst [vmem:[%s4648 + $0xc0] sm:$0xff] %v4673
                %v4675 = vld [vmem:[%s4647 + $0x68] sm:$0xff]
                %4676 = vst [vmem:[%s4648 + $0xc8] sm:$0xff] %v4675
                %v4677 = vld [vmem:[%s4647 + $0x70] sm:$0xff]
                %4678 = vst [vmem:[%s4648 + $0xd0] sm:$0xff] %v4677
                %v4679 = vld [vmem:[%s4647 + $0x78] sm:$0xff]
                %4680 = vst [vmem:[%s4648 + $0xd8] sm:$0xff] %v4679
                %v4681 = vld [vmem:[%s4647 + $0x80] sm:$0xff]
                %4682 = vst [vmem:[%s4648 + $0xe0] sm:$0xff] %v4681
                %v4683 = vld [vmem:[%s4647 + $0x88] sm:$0xff]
                %4684 = vst [vmem:[%s4648 + $0xe8] sm:$0xff] %v4683
                %v4685 = vld [vmem:[%s4647 + $0x90] sm:$0xff]
                %4686 = vst [vmem:[%s4648 + $0xf0] sm:$0xff] %v4685
                %v4687 = vld [vmem:[%s4647 + $0x98] sm:$0xff]
                %4688 = vst [vmem:[%s4648 + $0xf8] sm:$0xff] %v4687
                %v4689 = vld [vmem:[%s4647 + $0xa0] sm:$0xff]
                %4690 = vst [vmem:[%s4648 + $0x100] sm:$0xff] %v4689
                %v4691 = vld [vmem:[%s4647 + $0xa8] sm:$0xff]
                %4692 = vst [vmem:[%s4648 + $0x108] sm:$0xff] %v4691
                %v4693 = vld [vmem:[%s4647 + $0xb0] sm:$0xff]
                %4694 = vst [vmem:[%s4648 + $0x110] sm:$0xff] %v4693
                %v4695 = vld [vmem:[%s4647 + $0xb8] sm:$0xff]
                %4696 = vst [vmem:[%s4648 + $0x118] sm:$0xff] %v4695
                %v4697 = vld [vmem:[%s4647 + $0xc0] sm:$0xff]
                %4698 = vst [vmem:[%s4648 + $0x180] sm:$0xff] %v4697
                %v4699 = vld [vmem:[%s4647 + $0xc8] sm:$0xff]
                %4700 = vst [vmem:[%s4648 + $0x188] sm:$0xff] %v4699
                %v4701 = vld [vmem:[%s4647 + $0xd0] sm:$0xff]
                %4702 = vst [vmem:[%s4648 + $0x190] sm:$0xff] %v4701
                %v4703 = vld [vmem:[%s4647 + $0xd8] sm:$0xff]
                %4704 = vst [vmem:[%s4648 + $0x198] sm:$0xff] %v4703
                %v4705 = vld [vmem:[%s4647 + $0xe0] sm:$0xff]
                %4706 = vst [vmem:[%s4648 + $0x1a0] sm:$0xff] %v4705
                %v4707 = vld [vmem:[%s4647 + $0xe8] sm:$0xff]
                %4708 = vst [vmem:[%s4648 + $0x1a8] sm:$0xff] %v4707
                %v4709 = vld [vmem:[%s4647 + $0xf0] sm:$0xff]
                %4710 = vst [vmem:[%s4648 + $0x1b0] sm:$0xff] %v4709
                %v4711 = vld [vmem:[%s4647 + $0xf8] sm:$0xff]
                %4712 = vst [vmem:[%s4648 + $0x1b8] sm:$0xff] %v4711
                %v4713 = vld [vmem:[%s4647 + $0x100] sm:$0xff]
                %4714 = vst [vmem:[%s4648 + $0x1c0] sm:$0xff] %v4713
                %v4715 = vld [vmem:[%s4647 + $0x108] sm:$0xff]
                %4716 = vst [vmem:[%s4648 + $0x1c8] sm:$0xff] %v4715
                %v4717 = vld [vmem:[%s4647 + $0x110] sm:$0xff]
                %4718 = vst [vmem:[%s4648 + $0x1d0] sm:$0xff] %v4717
                %v4719 = vld [vmem:[%s4647 + $0x118] sm:$0xff]
                %4720 = vst [vmem:[%s4648 + $0x1d8] sm:$0xff] %v4719
                %v4721 = vld [vmem:[%s4647 + $0x120] sm:$0xff]
                %4722 = vst [vmem:[%s4648 + $0x240] sm:$0xff] %v4721
                %v4723 = vld [vmem:[%s4647 + $0x128] sm:$0xff]
                %4724 = vst [vmem:[%s4648 + $0x248] sm:$0xff] %v4723
                %v4725 = vld [vmem:[%s4647 + $0x130] sm:$0xff]
                %4726 = vst [vmem:[%s4648 + $0x250] sm:$0xff] %v4725
                %v4727 = vld [vmem:[%s4647 + $0x138] sm:$0xff]
                %4728 = vst [vmem:[%s4648 + $0x258] sm:$0xff] %v4727
                %v4729 = vld [vmem:[%s4647 + $0x140] sm:$0xff]
                %4730 = vst [vmem:[%s4648 + $0x260] sm:$0xff] %v4729
                %v4731 = vld [vmem:[%s4647 + $0x148] sm:$0xff]
                %4732 = vst [vmem:[%s4648 + $0x268] sm:$0xff] %v4731
                %v4733 = vld [vmem:[%s4647 + $0x150] sm:$0xff]
                %4734 = vst [vmem:[%s4648 + $0x270] sm:$0xff] %v4733
                %v4735 = vld [vmem:[%s4647 + $0x158] sm:$0xff]
                %4736 = vst [vmem:[%s4648 + $0x278] sm:$0xff] %v4735
                %v4737 = vld [vmem:[%s4647 + $0x160] sm:$0xff]
                %4738 = vst [vmem:[%s4648 + $0x280] sm:$0xff] %v4737
                %v4739 = vld [vmem:[%s4647 + $0x168] sm:$0xff]
                %4740 = vst [vmem:[%s4648 + $0x288] sm:$0xff] %v4739
                %v4741 = vld [vmem:[%s4647 + $0x170] sm:$0xff]
                %4742 = vst [vmem:[%s4648 + $0x290] sm:$0xff] %v4741
                %v4743 = vld [vmem:[%s4647 + $0x178] sm:$0xff]
                %4744 = vst [vmem:[%s4648 + $0x298] sm:$0xff] %v4743
                %v4745 = vld [vmem:[%s4647 + $0x180] sm:$0xff]
                %4746 = vst [vmem:[%s4648 + $0x300] sm:$0xff] %v4745
                %v4747 = vld [vmem:[%s4647 + $0x188] sm:$0xff]
                %4748 = vst [vmem:[%s4648 + $0x308] sm:$0xff] %v4747
                %v4749 = vld [vmem:[%s4647 + $0x190] sm:$0xff]
                %4750 = vst [vmem:[%s4648 + $0x310] sm:$0xff] %v4749
                %v4751 = vld [vmem:[%s4647 + $0x198] sm:$0xff]
                %4752 = vst [vmem:[%s4648 + $0x318] sm:$0xff] %v4751
                %v4753 = vld [vmem:[%s4647 + $0x1a0] sm:$0xff]
                %4754 = vst [vmem:[%s4648 + $0x320] sm:$0xff] %v4753
                %v4755 = vld [vmem:[%s4647 + $0x1a8] sm:$0xff]
                %4756 = vst [vmem:[%s4648 + $0x328] sm:$0xff] %v4755
                %v4757 = vld [vmem:[%s4647 + $0x1b0] sm:$0xff]
                %4758 = vst [vmem:[%s4648 + $0x330] sm:$0xff] %v4757
                %v4759 = vld [vmem:[%s4647 + $0x1b8] sm:$0xff]
                %4760 = vst [vmem:[%s4648 + $0x338] sm:$0xff] %v4759
                %v4761 = vld [vmem:[%s4647 + $0x1c0] sm:$0xff]
                %4762 = vst [vmem:[%s4648 + $0x340] sm:$0xff] %v4761
                %v4763 = vld [vmem:[%s4647 + $0x1c8] sm:$0xff]
                %4764 = vst [vmem:[%s4648 + $0x348] sm:$0xff] %v4763
                %v4765 = vld [vmem:[%s4647 + $0x1d0] sm:$0xff]
                %4766 = vst [vmem:[%s4648 + $0x350] sm:$0xff] %v4765
                %v4767 = vld [vmem:[%s4647 + $0x1d8] sm:$0xff]
                %4768 = vst [vmem:[%s4648 + $0x358] sm:$0xff] %v4767
                %v4769 = vld [vmem:[%s4647 + $0x1e0] sm:$0xff]
                %4770 = vst [vmem:[%s4648 + $0x3c0] sm:$0xff] %v4769
                %v4771 = vld [vmem:[%s4647 + $0x1e8] sm:$0xff]
                %4772 = vst [vmem:[%s4648 + $0x3c8] sm:$0xff] %v4771
                %v4773 = vld [vmem:[%s4647 + $0x1f0] sm:$0xff]
                %4774 = vst [vmem:[%s4648 + $0x3d0] sm:$0xff] %v4773
                %v4775 = vld [vmem:[%s4647 + $0x1f8] sm:$0xff]
                %4776 = vst [vmem:[%s4648 + $0x3d8] sm:$0xff] %v4775
                %v4777 = vld [vmem:[%s4647 + $0x200] sm:$0xff]
                %4778 = vst [vmem:[%s4648 + $0x3e0] sm:$0xff] %v4777
                %v4779 = vld [vmem:[%s4647 + $0x208] sm:$0xff]
                %4780 = vst [vmem:[%s4648 + $0x3e8] sm:$0xff] %v4779
                %v4781 = vld [vmem:[%s4647 + $0x210] sm:$0xff]
                %4782 = vst [vmem:[%s4648 + $0x3f0] sm:$0xff] %v4781
                %v4783 = vld [vmem:[%s4647 + $0x218] sm:$0xff]
                %4784 = vst [vmem:[%s4648 + $0x3f8] sm:$0xff] %v4783
                %v4785 = vld [vmem:[%s4647 + $0x220] sm:$0xff]
                %4786 = vst [vmem:[%s4648 + $0x400] sm:$0xff] %v4785
                %v4787 = vld [vmem:[%s4647 + $0x228] sm:$0xff]
                %4788 = vst [vmem:[%s4648 + $0x408] sm:$0xff] %v4787
                %v4789 = vld [vmem:[%s4647 + $0x230] sm:$0xff]
                %4790 = vst [vmem:[%s4648 + $0x410] sm:$0xff] %v4789
                %v4791 = vld [vmem:[%s4647 + $0x238] sm:$0xff]
                %4792 = vst [vmem:[%s4648 + $0x418] sm:$0xff] %v4791
                %v4793 = vld [vmem:[%s4647 + $0x240] sm:$0xff]
                %4794 = vst [vmem:[%s4648 + $0x480] sm:$0xff] %v4793
                %v4795 = vld [vmem:[%s4647 + $0x248] sm:$0xff]
                %4796 = vst [vmem:[%s4648 + $0x488] sm:$0xff] %v4795
                %v4797 = vld [vmem:[%s4647 + $0x250] sm:$0xff]
                %4798 = vst [vmem:[%s4648 + $0x490] sm:$0xff] %v4797
                %v4799 = vld [vmem:[%s4647 + $0x258] sm:$0xff]
                %4800 = vst [vmem:[%s4648 + $0x498] sm:$0xff] %v4799
                %v4801 = vld [vmem:[%s4647 + $0x260] sm:$0xff]
                %4802 = vst [vmem:[%s4648 + $0x4a0] sm:$0xff] %v4801
                %v4803 = vld [vmem:[%s4647 + $0x268] sm:$0xff]
                %4804 = vst [vmem:[%s4648 + $0x4a8] sm:$0xff] %v4803
                %v4805 = vld [vmem:[%s4647 + $0x270] sm:$0xff]
                %4806 = vst [vmem:[%s4648 + $0x4b0] sm:$0xff] %v4805
                %v4807 = vld [vmem:[%s4647 + $0x278] sm:$0xff]
                %4808 = vst [vmem:[%s4648 + $0x4b8] sm:$0xff] %v4807
                %v4809 = vld [vmem:[%s4647 + $0x280] sm:$0xff]
                %4810 = vst [vmem:[%s4648 + $0x4c0] sm:$0xff] %v4809
                %v4811 = vld [vmem:[%s4647 + $0x288] sm:$0xff]
                %4812 = vst [vmem:[%s4648 + $0x4c8] sm:$0xff] %v4811
                %v4813 = vld [vmem:[%s4647 + $0x290] sm:$0xff]
                %4814 = vst [vmem:[%s4648 + $0x4d0] sm:$0xff] %v4813
                %v4815 = vld [vmem:[%s4647 + $0x298] sm:$0xff]
                %4816 = vst [vmem:[%s4648 + $0x4d8] sm:$0xff] %v4815
              $region65: #{conv2d_1x1_batchnorm.1} parent=59 // loop_footer
                %s4646 = sadd.s32 1, %s4642
              $region66: #{conv2d_1x1_batchnorm.1} parent=59 // loop_footer_branch
                %4641 = sbr.rel target = $region62
              $region67: #{conv2d_1x1_batchnorm.1} parent=59 // loop_exit
                _
            $region60: #{conv2d_1x1_batchnorm.1} parent=55 // pred_fallthru
              _
            // Predicated region
            $region68: #{conv2d_1x1_batchnorm.1} parent=55 // pred_check
              _
            $region69: #{conv2d_1x1_batchnorm.1} parent=55 // pred_check_branch
              %4818 = sbr.rel target = $region71
            $region70: #{conv2d_1x1_batchnorm.1} parent=55 // pred_region
              _
            $region71: #{conv2d_1x1_batchnorm.1} parent=55 // pred_fallthru
              _
          $region56: #{conv2d_1x1_batchnorm.1} parent=51 // pred_fallthru
            _
          %4819 = vnop
        $region52: #{conv2d_1x1_batchnorm.1} parent=35 // pred_fallthru
          _
      $region36: #{conv2d_1x1_batchnorm.1} parent=5 // pred_fallthru
        _
      %p4820 = scmp.le.s32.totalorder 2, %s16
      // Predicated region
      $region72: #{conv2d_1x1_batchnorm.1} parent=5 // pred_check
        %p4821 = pneg %p4820
      $region73: #{conv2d_1x1_batchnorm.1} parent=5 // pred_check_branch
        %4823 = sbr.rel (%p4821) target = $region75
      $region74: #{conv2d_1x1_batchnorm.1} parent=5 // pred_region
        %s4824 = ssub.s32 %s16, 2
        // Predicated region
        $region76: #{conv2d_1x1_batchnorm.1} parent=74 // pred_check
          %p4825 = pneg %p144
        $region77: #{conv2d_1x1_batchnorm.1} parent=74 // pred_check_branch
          %4827 = sbr.rel (%p4825) target = $region79
        $region78: #{conv2d_1x1_batchnorm.1} parent=74 // pred_region
          %s4828 = sand.u32 %s129, 1
          %s4829 = sand.u32 %s129, 1
          %s4830 = smul.addr %s4829, 672
          %s4831 = scalar_lea.vmem [#allocation7], %s4830
        $region79: #{conv2d_1x1_batchnorm.1} parent=74 // pred_fallthru
          _
      $region75: #{conv2d_1x1_batchnorm.1} parent=5 // pred_fallthru
        _
    $region6: #{conv2d_1x1_batchnorm.1} parent=1 // loop_footer
      %s20 = sadd.s32 1, %s16
    $region7: #{conv2d_1x1_batchnorm.1} parent=1 // loop_footer_branch
      %15 = sbr.rel target = $region3
    $region8: #{conv2d_1x1_batchnorm.1} parent=1 // loop_exit
      _
    %4832 = vsyncpa [#allocation3], 1
    %s4833 = scalar_lea.sflag [#allocation3], 1
    %4834 = vsyncpa %s4833, 1
    %4835 = vsyncpa [#allocation5], 1
    %s4836 = scalar_lea.sflag [#allocation5], 1
    %4837 = vsyncpa %s4836, 1

</llo_original>
